<compile_context>
chip_gen: v5e
topology: v5e:2x2
jax: 0.10.0
libtpu: 0.0.40
codegen_flags: <defaults>
</compile_context>

<pallas_src>
import jax
import jax.numpy as jnp
import numpy as np
from jax import lax
from jax.experimental import pallas as pl
from jax.experimental.pallas import tpu as pltpu


# ----------------------------------------------------------------------------
# Kernel: one batch tile per grid step; full forward pass on-chip.
# ----------------------------------------------------------------------------
def _wide_and_deep_kernel(
    used_ref, cand_ref,                     # [bt, A]   f32
    mashup_ref, cand_desc_ref,              # [bt, DESC] bf16
    k_all_ref, v_all_ref,                   # [B, d_k] / [B, d_v] f32 (resident)
    w_used_row_ref, w_cand_row_ref, w_cross_ref, b_wide_ref,   # wide head (split)
    wq_ref, bq_ref,                         # attention query projection
    w1m_ref, w1c_ref, w1a_ref, b1_ref,      # deep layer 1 row blocks (bf16) + f32 bias
    w2_ref, b2_ref, w3_ref, b3_ref,         # deep layers 2/3 (bf16 weights, f32 bias)
    w4_row_ref, b4_ref,                     # deep head [1,128] f32, bias (deep_bias folded in)
    out_ref,                                # [1, bt] f32 (lane-dense)
):
    f32 = jnp.float32
    bf16 = jnp.bfloat16

    def sigmoid(x):                          # numerically stable, single EUP tanh
        return 0.5 * (jnp.tanh(0.5 * x) + 1.0)

    def row_dot(w_row, x):                   # [1,K] . [bt,K]^T -> [1,bt] (trans-B MXU matmul)
        return lax.dot_general(w_row, x, (((1,), (1,)), ((), ())),
                               preferred_element_type=f32)

    used_t = used_ref[...]                   # [bt, A]
    cand_t = cand_ref[...]                   # [bt, A]

    # ---- wide path: Linear([used | cand | used (x) cand], 1) + Sigmoid.
    # The cross-product feature is never materialized: its contribution is the
    # bilinear form sum_a (used @ Wcross)[b,a] * cand[b,a].  All per-row scalars
    # are produced directly as lane-dense [1, bt] rows.
    lin_used = row_dot(w_used_row_ref[...], used_t)                          # [1, bt]
    lin_cand = row_dot(w_cand_row_ref[...], cand_t)                          # [1, bt]
    uc = jnp.dot(used_t, w_cross_ref[...], preferred_element_type=f32)       # [bt, A]
    lin_cross = row_dot(jnp.ones((1, used_t.shape[1]), f32), uc * cand_t)    # [1, bt]
    wide_out = sigmoid(lin_used + lin_cand + lin_cross + b_wide_ref[...])    # [1, bt]

    # ---- attention: K/V were precomputed from the full batch (resident inputs);
    # only the query projection for this tile's candidate rows runs per step.
    # torch softmax(dim=1) on the [B_q, B_k] scores == softmax over the key axis,
    # i.e. axis -1 of the [bt, B] tile.
    q = jnp.dot(cand_t, wq_ref[...], preferred_element_type=f32) + bq_ref[...]   # [bt, d_q]
    scale = 1.0 / (k_all_ref.shape[-1] ** 0.5)
    attn = lax.dot_general(q, k_all_ref[...], (((1,), (1,)), ((), ())),
                           preferred_element_type=f32) * scale               # [bt, B]
    m = jnp.max(attn, axis=-1, keepdims=True)
    e = jnp.exp(attn - m)
    denom = jnp.sum(e, axis=-1, keepdims=True)
    p = e * pl.reciprocal(denom, approx=True)                                # EUP recip
    context = jnp.dot(p, v_all_ref[...], preferred_element_type=f32)         # [bt, d_v]
    # TODO(synk): for very large B the [bt, B] score tile should be key-tiled with an
    # online-softmax accumulator (flash-style) to bound VMEM growth on v7x.

    # ---- deep MLP: cat([mashup, context, cand_desc]) @ W1 done as a split matmul
    # over W1's row blocks (no concat).  Weights stay bf16; activations are cast to
    # bf16 at the MXU boundary; accumulation is f32.
    h1 = (jnp.dot(mashup_ref[...], w1m_ref[...], preferred_element_type=f32)
          + jnp.dot(context.astype(bf16), w1c_ref[...], preferred_element_type=f32)
          + jnp.dot(cand_desc_ref[...], w1a_ref[...], preferred_element_type=f32)
          + b1_ref[...])
    h1 = jnp.maximum(h1, 0.0)
    h2 = jnp.maximum(
        jnp.dot(h1.astype(bf16), w2_ref[...], preferred_element_type=f32) + b2_ref[...], 0.0)
    h3 = jnp.maximum(
        jnp.dot(h2.astype(bf16), w3_ref[...], preferred_element_type=f32) + b3_ref[...], 0.0)
    # final Linear(128, 1) as a lane-dense row; b4 already includes deep_bias.
    deep_out = row_dot(w4_row_ref[...], h3) + b4_ref[...]                    # [1, bt]

    # ---- combine ----
    out_ref[...] = sigmoid(wide_out + deep_out)


# ----------------------------------------------------------------------------
# Wrapper: batch-tiled grid, weights + precomputed K/V resident across tiles.
# ----------------------------------------------------------------------------
def wide_and_deep_forward(params, used, cand, mashup, cand_desc, *, batch_tile=None):
    B, A = used.shape
    DESC = mashup.shape[1]

    if batch_tile is None:
        batch_tile = B if B <= 256 else 256       # match 256-wide MXU on v6e/v7x
    bt = batch_tile
    assert B % bt == 0, "batch must be a multiple of the batch tile"
    grid = (B // bt,)

    # Hoist K/V out of the grid: computed once from the full batch (plain XLA) and
    # passed as small resident inputs, so they are not recomputed per tile.
    k_all = (used @ params["wk"] + params["bk"]).astype(jnp.float32)
    v_all = (used @ params["wv"] + params["bv"]).astype(jnp.float32)

    # Stream the big description features as bf16 (halves per-tile activation DMA).
    mashup_b = mashup.astype(jnp.bfloat16)
    cand_desc_b = cand_desc.astype(jnp.bfloat16)

    # deep_bias is added inside the final sigmoid exactly like the deep head bias,
    # so fold it on the host and drop one kernel input.
    b4_eff = params["b4"] + params["deep_bias"]

    def tiled(feat):
        return pl.BlockSpec((bt, feat), lambda i: (i, 0))

    def resident(arr):
        # constant block index -> stays resident in VMEM across grid steps
        return pl.BlockSpec(arr.shape, lambda i: (0, 0))

    args = (
        used, cand, mashup_b, cand_desc_b,
        k_all, v_all,
        params["w_used_row"], params["w_cand_row"], params["w_cross"], params["b_wide"],
        params["wq"], params["bq"],
        params["w1m"], params["w1c"], params["w1a"], params["b1"],
        params["w2"], params["b2"], params["w3"], params["b3"],
        params["w4_row"], b4_eff,
    )
    in_specs = (
        [tiled(A), tiled(A), tiled(DESC), tiled(DESC)]
        + [resident(a) for a in args[4:]]
    )

    out_row = pl.pallas_call(
        _wide_and_deep_kernel,
        out_shape=jax.ShapeDtypeStruct((1, B), jnp.float32),    # lane-dense output
        grid=grid,
        in_specs=in_specs,
        out_specs=pl.BlockSpec((1, bt), lambda i: (0, i)),
        compiler_params=pltpu.CompilerParams(
            dimension_semantics=("parallel",),
        ),
    )(*args)
    return out_row.reshape(B, 1)


# ----------------------------------------------------------------------------
# Parameter init (PyTorch nn.Linear default: U(-1/sqrt(fan_in), +)), stored in the
# kernel-friendly layout: split wide weight (used | cand | cross[A,A]), split W1
# row blocks in bf16, bf16 W2/W3, transposed 1-column heads.
# ----------------------------------------------------------------------------
def _uniform(key, shape, bound):
    return jax.random.uniform(key, shape, jnp.float32, -bound, bound)


def _linear(key, fan_in, fan_out):
    kw, kb = jax.random.split(key)
    bound = 1.0 / np.sqrt(fan_in)
    return _uniform(kw, (fan_in, fan_out), bound), _uniform(kb, (1, fan_out), bound)


def init_params(key, api_range, d_k, d_v, d_q, desc_dim):
    A = api_range
    keys = jax.random.split(key, 8)

    # wide: Linear(A + A + A*A, 1) — stored split so no concat / cross feature.
    fan_in_wide = 2 * A + A * A
    bw = 1.0 / np.sqrt(fan_in_wide)
    kw, kb = jax.random.split(keys[0])
    w_wide = _uniform(kw, (fan_in_wide, 1), bw)
    b_wide = _uniform(kb, (1, 1), bw)
    w_used_row = w_wide[:A, :].T                   # [1, A]
    w_cand_row = w_wide[A:2 * A, :].T              # [1, A]
    w_cross = w_wide[2 * A:, :].reshape(A, A)      # [A, A]

    wk, bk = _linear(keys[1], A, d_k)
    wv, bv = _linear(keys[2], A, d_v)
    wq, bq = _linear(keys[3], A, d_q)

    # deep layer 1: Linear(d_v + 2*desc, 512) stored as three row blocks matching
    # the deep-input order [mashup | context | candidate_desc].
    deep_in = d_v + 2 * desc_dim
    w1, b1 = _linear(keys[4], deep_in, 512)
    w1m = w1[:desc_dim, :].astype(jnp.bfloat16)
    w1c = w1[desc_dim:desc_dim + d_v, :].astype(jnp.bfloat16)
    w1a = w1[desc_dim + d_v:, :].astype(jnp.bfloat16)

    w2, b2 = _linear(keys[5], 512, 256)
    w3, b3 = _linear(keys[6], 256, 128)
    w4, b4 = _linear(keys[7], 128, 1)

    return dict(
        w_used_row=w_used_row, w_cand_row=w_cand_row, w_cross=w_cross, b_wide=b_wide,
        wk=wk, bk=bk, wv=wv, bv=bv, wq=wq, bq=bq,
        w1m=w1m, w1c=w1c, w1a=w1a, b1=b1,
        w2=w2.astype(jnp.bfloat16), b2=b2,
        w3=w3.astype(jnp.bfloat16), b3=b3,
        w4_row=w4.T, b4=b4,
        deep_bias=jnp.zeros((1, 1), jnp.float32),
    )


# ----------------------------------------------------------------------------
# Pure-JAX reference (mirrors the PyTorch forward with the same mixed precision:
# bf16 weights + bf16 activations at the deep matmuls, f32 accumulation).
# ----------------------------------------------------------------------------
def reference_forward(params, used, cand, mashup, cand_desc):
    B, A = used.shape
    bf16 = jnp.bfloat16
    cross = (used[:, :, None] * cand[:, None, :]).reshape(B, A * A)
    w_wide = jnp.concatenate(
        [params["w_used_row"].T, params["w_cand_row"].T,
         params["w_cross"].reshape(A * A, 1)], axis=0)
    wide_input = jnp.concatenate([used, cand, cross], axis=1)
    wide_out = jax.nn.sigmoid(wide_input @ w_wide + params["b_wide"])

    K = used @ params["wk"] + params["bk"]
    V = used @ params["wv"] + params["bv"]
    Q = cand @ params["wq"] + params["bq"]
    attn = (Q @ K.T) / jnp.sqrt(jnp.float32(K.shape[-1]))
    score = jax.nn.softmax(attn, axis=1)
    context = score @ V

    w1 = jnp.concatenate([params["w1m"], params["w1c"], params["w1a"]], axis=0)
    deep_in = jnp.concatenate(
        [mashup.astype(bf16), context.astype(bf16), cand_desc.astype(bf16)], axis=1)
    h = jnp.maximum(jnp.dot(deep_in, w1, preferred_element_type=jnp.float32)
                    + params["b1"], 0.0)
    h = jnp.maximum(jnp.dot(h.astype(bf16), params["w2"],
                            preferred_element_type=jnp.float32) + params["b2"], 0.0)
    h = jnp.maximum(jnp.dot(h.astype(bf16), params["w3"],
                            preferred_element_type=jnp.float32) + params["b3"], 0.0)
    deep_out = h @ params["w4_row"].T + params["b4"]
    return jax.nn.sigmoid(wide_out + deep_out + params["deep_bias"])


if __name__ == "__main__":
    B = 8          # batch (one tile here; larger batches are tiled and run in parallel)
    A = 16         # config.api_range
    D_K = D_Q = 8  # config.args.d_k / d_q (must match for Q @ K^T)
    D_V = 8        # config.args.d_v
    DESC = 512     # mashup / candidate description feature dim (2*512 = 1024)

    key = jax.random.PRNGKey(0)
    k_used, k_cand, k_mashup, k_desc = jax.random.split(key, 4)
    used = (jax.random.uniform(k_used, (B, A)) > 0.5).astype(jnp.float32)
    cand = (jax.random.uniform(k_cand, (B, A)) > 0.5).astype(jnp.float32)
    mashup = jax.random.normal(k_mashup, (B, DESC), jnp.float32)
    cand_desc = jax.random.normal(k_desc, (B, DESC), jnp.float32)

    params = init_params(jax.random.PRNGKey(42), A, D_K, D_V, D_Q, DESC)

    out = jax.jit(wide_and_deep_forward)(params, used, cand, mashup, cand_desc)
    out = jax.block_until_ready(out)

    ref = reference_forward(params, used, cand, mashup, cand_desc)
    assert out.shape == (B, 1)
    np.testing.assert_allclose(np.asarray(out), np.asarray(ref), rtol=2e-3, atol=2e-3)

    print("KERNEL_OK")
</pallas_src>

<mosaic_0001>
module attributes {stable_mosaic.version = 11 : i64} {
  func.func @_wide_and_deep_kernel(%arg0: i32, %arg1: memref<8x16xf32, #tpu.memory_space<vmem>>, %arg2: memref<8x16xf32, #tpu.memory_space<vmem>>, %arg3: memref<8x512xbf16, #tpu.memory_space<vmem>>, %arg4: memref<8x512xbf16, #tpu.memory_space<vmem>>, %arg5: memref<8x8xf32, #tpu.memory_space<vmem>>, %arg6: memref<8x8xf32, #tpu.memory_space<vmem>>, %arg7: memref<1x16xf32, #tpu.memory_space<vmem>>, %arg8: memref<1x16xf32, #tpu.memory_space<vmem>>, %arg9: memref<16x16xf32, #tpu.memory_space<vmem>>, %arg10: memref<1x1xf32, #tpu.memory_space<vmem>>, %arg11: memref<16x8xf32, #tpu.memory_space<vmem>>, %arg12: memref<1x8xf32, #tpu.memory_space<vmem>>, %arg13: memref<512x512xbf16, #tpu.memory_space<vmem>>, %arg14: memref<8x512xbf16, #tpu.memory_space<vmem>>, %arg15: memref<512x512xbf16, #tpu.memory_space<vmem>>, %arg16: memref<1x512xf32, #tpu.memory_space<vmem>>, %arg17: memref<512x256xbf16, #tpu.memory_space<vmem>>, %arg18: memref<1x256xf32, #tpu.memory_space<vmem>>, %arg19: memref<256x128xbf16, #tpu.memory_space<vmem>>, %arg20: memref<1x128xf32, #tpu.memory_space<vmem>>, %arg21: memref<1x128xf32, #tpu.memory_space<vmem>>, %arg22: memref<1x1xf32, #tpu.memory_space<vmem>>, %arg23: memref<1x8xf32, #tpu.memory_space<vmem>>) attributes {dimension_semantics = [#tpu.dimension_semantics<parallel>], iteration_bounds = array<i64: 1>, scalar_prefetch = 0 : i64, scratch_operands = 0 : i64, tpu.core_type = #tpu.core_type<tc>, window_params = [{transform_indices = @transform_0, window_bounds = array<i64: 8, 16>}, {transform_indices = @transform_1, window_bounds = array<i64: 8, 16>}, {transform_indices = @transform_2, window_bounds = array<i64: 8, 512>}, {transform_indices = @transform_3, window_bounds = array<i64: 8, 512>}, {pipeline_mode = #tpu.pipeline_mode<synchronous>, transform_indices = @transform_4, window_bounds = array<i64: 8, 8>}, {pipeline_mode = #tpu.pipeline_mode<synchronous>, transform_indices = @transform_5, window_bounds = array<i64: 8, 8>}, {pipeline_mode = #tpu.pipeline_mode<synchronous>, transform_indices = @transform_6, window_bounds = array<i64: 1, 16>}, {pipeline_mode = #tpu.pipeline_mode<synchronous>, transform_indices = @transform_7, window_bounds = array<i64: 1, 16>}, {pipeline_mode = #tpu.pipeline_mode<synchronous>, transform_indices = @transform_8, window_bounds = array<i64: 16, 16>}, {pipeline_mode = #tpu.pipeline_mode<synchronous>, transform_indices = @transform_9, window_bounds = array<i64: 1, 1>}, {pipeline_mode = #tpu.pipeline_mode<synchronous>, transform_indices = @transform_10, window_bounds = array<i64: 16, 8>}, {pipeline_mode = #tpu.pipeline_mode<synchronous>, transform_indices = @transform_11, window_bounds = array<i64: 1, 8>}, {pipeline_mode = #tpu.pipeline_mode<synchronous>, transform_indices = @transform_12, window_bounds = array<i64: 512, 512>}, {pipeline_mode = #tpu.pipeline_mode<synchronous>, transform_indices = @transform_13, window_bounds = array<i64: 8, 512>}, {pipeline_mode = #tpu.pipeline_mode<synchronous>, transform_indices = @transform_14, window_bounds = array<i64: 512, 512>}, {pipeline_mode = #tpu.pipeline_mode<synchronous>, transform_indices = @transform_15, window_bounds = array<i64: 1, 512>}, {pipeline_mode = #tpu.pipeline_mode<synchronous>, transform_indices = @transform_16, window_bounds = array<i64: 512, 256>}, {pipeline_mode = #tpu.pipeline_mode<synchronous>, transform_indices = @transform_17, window_bounds = array<i64: 1, 256>}, {pipeline_mode = #tpu.pipeline_mode<synchronous>, transform_indices = @transform_18, window_bounds = array<i64: 256, 128>}, {pipeline_mode = #tpu.pipeline_mode<synchronous>, transform_indices = @transform_19, window_bounds = array<i64: 1, 128>}, {pipeline_mode = #tpu.pipeline_mode<synchronous>, transform_indices = @transform_20, window_bounds = array<i64: 1, 128>}, {pipeline_mode = #tpu.pipeline_mode<synchronous>, transform_indices = @transform_21, window_bounds = array<i64: 1, 1>}, {transform_indices = @transform_22, window_bounds = array<i64: 1, 8>}]} {
    %c0 = arith.constant 0 : index
    %c0_0 = arith.constant 0 : index
    %0 = vector.load %arg1[%c0, %c0_0] : memref<8x16xf32, #tpu.memory_space<vmem>>, vector<8x16xf32>
    %c0_1 = arith.constant 0 : index
    %c0_2 = arith.constant 0 : index
    %1 = vector.load %arg2[%c0_1, %c0_2] : memref<8x16xf32, #tpu.memory_space<vmem>>, vector<8x16xf32>
    %c0_3 = arith.constant 0 : index
    %c0_4 = arith.constant 0 : index
    %2 = vector.load %arg7[%c0_3, %c0_4] : memref<1x16xf32, #tpu.memory_space<vmem>>, vector<1x16xf32>
    %cst = arith.constant dense<0.000000e+00> : vector<1x8xf32>
    %3 = tpu.matmul %2, %0, %cst {dimension_numbers = #tpu.dot_dimension_numbers<[1], [1], [0], [0], [0, 0, 1, 0], [], []>} : vector<1x16xf32>, vector<8x16xf32>, vector<1x8xf32> -> vector<1x8xf32>
    %c0_5 = arith.constant 0 : index
    %c0_6 = arith.constant 0 : index
    %4 = vector.load %arg8[%c0_5, %c0_6] : memref<1x16xf32, #tpu.memory_space<vmem>>, vector<1x16xf32>
    %cst_7 = arith.constant dense<0.000000e+00> : vector<1x8xf32>
    %5 = tpu.matmul %4, %1, %cst_7 {dimension_numbers = #tpu.dot_dimension_numbers<[1], [1], [0], [0], [0, 0, 1, 0], [], []>} : vector<1x16xf32>, vector<8x16xf32>, vector<1x8xf32> -> vector<1x8xf32>
    %c0_8 = arith.constant 0 : index
    %c0_9 = arith.constant 0 : index
    %6 = vector.load %arg9[%c0_8, %c0_9] : memref<16x16xf32, #tpu.memory_space<vmem>>, vector<16x16xf32>
    %cst_10 = arith.constant dense<0.000000e+00> : vector<8x16xf32>
    %7 = tpu.matmul %0, %6, %cst_10 {dimension_numbers = #tpu.dot_dimension_numbers<[1], [0], [0], [1], [0, 0, 1, 1], [], []>} : vector<8x16xf32>, vector<16x16xf32>, vector<8x16xf32> -> vector<8x16xf32>
    %cst_11 = arith.constant 1.000000e+00 : f32
    %8 = vector.broadcast %cst_11 : f32 to vector<1x16xf32>
    %9 = arith.mulf %7, %1 : vector<8x16xf32>
    %cst_12 = arith.constant dense<0.000000e+00> : vector<1x8xf32>
    %10 = tpu.matmul %8, %9, %cst_12 {dimension_numbers = #tpu.dot_dimension_numbers<[1], [1], [0], [0], [0, 0, 1, 0], [], []>} : vector<1x16xf32>, vector<8x16xf32>, vector<1x8xf32> -> vector<1x8xf32>
    %11 = arith.addf %3, %5 : vector<1x8xf32>
    %12 = arith.addf %11, %10 : vector<1x8xf32>
    %c0_13 = arith.constant 0 : index
    %c0_14 = arith.constant 0 : index
    %13 = vector.load %arg10[%c0_13, %c0_14] : memref<1x1xf32, #tpu.memory_space<vmem>>, vector<1x1xf32>
    %14 = vector.broadcast %13 : vector<1x1xf32> to vector<1x8xf32>
    %15 = arith.addf %12, %14 : vector<1x8xf32>
    %cst_15 = arith.constant 5.000000e-01 : f32
    %16 = vector.broadcast %cst_15 : f32 to vector<1x8xf32>
    %17 = arith.mulf %16, %15 : vector<1x8xf32>
    %18 = math.tanh %17 : vector<1x8xf32>
    %cst_16 = arith.constant 1.000000e+00 : f32
    %19 = vector.broadcast %cst_16 : f32 to vector<1x8xf32>
    %20 = arith.addf %18, %19 : vector<1x8xf32>
    %cst_17 = arith.constant 5.000000e-01 : f32
    %21 = vector.broadcast %cst_17 : f32 to vector<1x8xf32>
    %22 = arith.mulf %21, %20 : vector<1x8xf32>
    %c0_18 = arith.constant 0 : index
    %c0_19 = arith.constant 0 : index
    %23 = vector.load %arg11[%c0_18, %c0_19] : memref<16x8xf32, #tpu.memory_space<vmem>>, vector<16x8xf32>
    %cst_20 = arith.constant dense<0.000000e+00> : vector<8x8xf32>
    %24 = tpu.matmul %1, %23, %cst_20 {dimension_numbers = #tpu.dot_dimension_numbers<[1], [0], [0], [1], [0, 0, 1, 1], [], []>} : vector<8x16xf32>, vector<16x8xf32>, vector<8x8xf32> -> vector<8x8xf32>
    %c0_21 = arith.constant 0 : index
    %c0_22 = arith.constant 0 : index
    %25 = vector.load %arg12[%c0_21, %c0_22] : memref<1x8xf32, #tpu.memory_space<vmem>>, vector<1x8xf32>
    %26 = vector.broadcast %25 : vector<1x8xf32> to vector<8x8xf32>
    %27 = arith.addf %24, %26 : vector<8x8xf32>
    %c0_23 = arith.constant 0 : index
    %c0_24 = arith.constant 0 : index
    %28 = vector.load %arg5[%c0_23, %c0_24] : memref<8x8xf32, #tpu.memory_space<vmem>>, vector<8x8xf32>
    %cst_25 = arith.constant dense<0.000000e+00> : vector<8x8xf32>
    %29 = tpu.matmul %27, %28, %cst_25 {dimension_numbers = #tpu.dot_dimension_numbers<[1], [1], [0], [0], [0, 0, 1, 0], [], []>} : vector<8x8xf32>, vector<8x8xf32>, vector<8x8xf32> -> vector<8x8xf32>
    %cst_26 = arith.constant 0.353553385 : f32
    %30 = vector.broadcast %cst_26 : f32 to vector<8x8xf32>
    %31 = arith.mulf %29, %30 : vector<8x8xf32>
    %cst_27 = arith.constant dense<0xFF800000> : vector<8xf32>
    %32 = vector.multi_reduction <maximumf>, %31, %cst_27 [1] : vector<8x8xf32> to vector<8xf32>
    %33 = vector.shape_cast %32 : vector<8xf32> to vector<8x1xf32>
    %34 = vector.broadcast %33 : vector<8x1xf32> to vector<8x8xf32>
    %35 = arith.subf %31, %34 : vector<8x8xf32>
    %36 = math.exp %35 : vector<8x8xf32>
    %cst_28 = arith.constant dense<0.000000e+00> : vector<8xf32>
    %37 = vector.multi_reduction <add>, %36, %cst_28 [1] : vector<8x8xf32> to vector<8xf32>
    %38 = vector.shape_cast %37 : vector<8xf32> to vector<8x1xf32>
    %39 = tpu.reciprocal %38 {approx = true} : vector<8x1xf32> -> vector<8x1xf32>
    %40 = vector.broadcast %39 : vector<8x1xf32> to vector<8x8xf32>
    %41 = arith.mulf %36, %40 : vector<8x8xf32>
    %c0_29 = arith.constant 0 : index
    %c0_30 = arith.constant 0 : index
    %42 = vector.load %arg6[%c0_29, %c0_30] : memref<8x8xf32, #tpu.memory_space<vmem>>, vector<8x8xf32>
    %cst_31 = arith.constant dense<0.000000e+00> : vector<8x8xf32>
    %43 = tpu.matmul %41, %42, %cst_31 {dimension_numbers = #tpu.dot_dimension_numbers<[1], [0], [0], [1], [0, 0, 1, 1], [], []>} : vector<8x8xf32>, vector<8x8xf32>, vector<8x8xf32> -> vector<8x8xf32>
    %c0_32 = arith.constant 0 : index
    %c0_33 = arith.constant 0 : index
    %44 = vector.load %arg3[%c0_32, %c0_33] : memref<8x512xbf16, #tpu.memory_space<vmem>>, vector<8x512xbf16>
    %c0_34 = arith.constant 0 : index
    %c0_35 = arith.constant 0 : index
    %45 = vector.load %arg13[%c0_34, %c0_35] : memref<512x512xbf16, #tpu.memory_space<vmem>>, vector<512x512xbf16>
    %cst_36 = arith.constant dense<0.000000e+00> : vector<8x512xf32>
    %46 = tpu.matmul %44, %45, %cst_36 {dimension_numbers = #tpu.dot_dimension_numbers<[1], [0], [0], [1], [0, 0, 1, 1], [], []>} : vector<8x512xbf16>, vector<512x512xbf16>, vector<8x512xf32> -> vector<8x512xf32>
    %47 = arith.truncf %43 : vector<8x8xf32> to vector<8x8xbf16>
    %c0_37 = arith.constant 0 : index
    %c0_38 = arith.constant 0 : index
    %48 = vector.load %arg14[%c0_37, %c0_38] : memref<8x512xbf16, #tpu.memory_space<vmem>>, vector<8x512xbf16>
    %cst_39 = arith.constant dense<0.000000e+00> : vector<8x512xf32>
    %49 = tpu.matmul %47, %48, %cst_39 {dimension_numbers = #tpu.dot_dimension_numbers<[1], [0], [0], [1], [0, 0, 1, 1], [], []>} : vector<8x8xbf16>, vector<8x512xbf16>, vector<8x512xf32> -> vector<8x512xf32>
    %50 = arith.addf %46, %49 : vector<8x512xf32>
    %c0_40 = arith.constant 0 : index
    %c0_41 = arith.constant 0 : index
    %51 = vector.load %arg4[%c0_40, %c0_41] : memref<8x512xbf16, #tpu.memory_space<vmem>>, vector<8x512xbf16>
    %c0_42 = arith.constant 0 : index
    %c0_43 = arith.constant 0 : index
    %52 = vector.load %arg15[%c0_42, %c0_43] : memref<512x512xbf16, #tpu.memory_space<vmem>>, vector<512x512xbf16>
    %cst_44 = arith.constant dense<0.000000e+00> : vector<8x512xf32>
    %53 = tpu.matmul %51, %52, %cst_44 {dimension_numbers = #tpu.dot_dimension_numbers<[1], [0], [0], [1], [0, 0, 1, 1], [], []>} : vector<8x512xbf16>, vector<512x512xbf16>, vector<8x512xf32> -> vector<8x512xf32>
    %54 = arith.addf %50, %53 : vector<8x512xf32>
    %c0_45 = arith.constant 0 : index
    %c0_46 = arith.constant 0 : index
    %55 = vector.load %arg16[%c0_45, %c0_46] : memref<1x512xf32, #tpu.memory_space<vmem>>, vector<1x512xf32>
    %56 = vector.broadcast %55 : vector<1x512xf32> to vector<8x512xf32>
    %57 = arith.addf %54, %56 : vector<8x512xf32>
    %cst_47 = arith.constant 0.000000e+00 : f32
    %58 = vector.broadcast %cst_47 : f32 to vector<8x512xf32>
    %59 = arith.maximumf %57, %58 : vector<8x512xf32>
    %60 = arith.truncf %59 : vector<8x512xf32> to vector<8x512xbf16>
    %c0_48 = arith.constant 0 : index
    %c0_49 = arith.constant 0 : index
    %61 = vector.load %arg17[%c0_48, %c0_49] : memref<512x256xbf16, #tpu.memory_space<vmem>>, vector<512x256xbf16>
    %cst_50 = arith.constant dense<0.000000e+00> : vector<8x256xf32>
    %62 = tpu.matmul %60, %61, %cst_50 {dimension_numbers = #tpu.dot_dimension_numbers<[1], [0], [0], [1], [0, 0, 1, 1], [], []>} : vector<8x512xbf16>, vector<512x256xbf16>, vector<8x256xf32> -> vector<8x256xf32>
    %c0_51 = arith.constant 0 : index
    %c0_52 = arith.constant 0 : index
    %63 = vector.load %arg18[%c0_51, %c0_52] : memref<1x256xf32, #tpu.memory_space<vmem>>, vector<1x256xf32>
    %64 = vector.broadcast %63 : vector<1x256xf32> to vector<8x256xf32>
    %65 = arith.addf %62, %64 : vector<8x256xf32>
    %cst_53 = arith.constant 0.000000e+00 : f32
    %66 = vector.broadcast %cst_53 : f32 to vector<8x256xf32>
    %67 = arith.maximumf %65, %66 : vector<8x256xf32>
    %68 = arith.truncf %67 : vector<8x256xf32> to vector<8x256xbf16>
    %c0_54 = arith.constant 0 : index
    %c0_55 = arith.constant 0 : index
    %69 = vector.load %arg19[%c0_54, %c0_55] : memref<256x128xbf16, #tpu.memory_space<vmem>>, vector<256x128xbf16>
    %cst_56 = arith.constant dense<0.000000e+00> : vector<8x128xf32>
    %70 = tpu.matmul %68, %69, %cst_56 {dimension_numbers = #tpu.dot_dimension_numbers<[1], [0], [0], [1], [0, 0, 1, 1], [], []>} : vector<8x256xbf16>, vector<256x128xbf16>, vector<8x128xf32> -> vector<8x128xf32>
    %c0_57 = arith.constant 0 : index
    %c0_58 = arith.constant 0 : index
    %71 = vector.load %arg20[%c0_57, %c0_58] : memref<1x128xf32, #tpu.memory_space<vmem>>, vector<1x128xf32>
    %72 = vector.broadcast %71 : vector<1x128xf32> to vector<8x128xf32>
    %73 = arith.addf %70, %72 : vector<8x128xf32>
    %cst_59 = arith.constant 0.000000e+00 : f32
    %74 = vector.broadcast %cst_59 : f32 to vector<8x128xf32>
    %75 = arith.maximumf %73, %74 : vector<8x128xf32>
    %c0_60 = arith.constant 0 : index
    %c0_61 = arith.constant 0 : index
    %76 = vector.load %arg21[%c0_60, %c0_61] : memref<1x128xf32, #tpu.memory_space<vmem>>, vector<1x128xf32>
    %cst_62 = arith.constant dense<0.000000e+00> : vector<1x8xf32>
    %77 = tpu.matmul %76, %75, %cst_62 {dimension_numbers = #tpu.dot_dimension_numbers<[1], [1], [0], [0], [0, 0, 1, 0], [], []>} : vector<1x128xf32>, vector<8x128xf32>, vector<1x8xf32> -> vector<1x8xf32>
    %c0_63 = arith.constant 0 : index
    %c0_64 = arith.constant 0 : index
    %78 = vector.load %arg22[%c0_63, %c0_64] : memref<1x1xf32, #tpu.memory_space<vmem>>, vector<1x1xf32>
    %79 = vector.broadcast %78 : vector<1x1xf32> to vector<1x8xf32>
    %80 = arith.addf %77, %79 : vector<1x8xf32>
    %81 = arith.addf %22, %80 : vector<1x8xf32>
    %cst_65 = arith.constant 5.000000e-01 : f32
    %82 = vector.broadcast %cst_65 : f32 to vector<1x8xf32>
    %83 = arith.mulf %82, %81 : vector<1x8xf32>
    %84 = math.tanh %83 : vector<1x8xf32>
    %cst_66 = arith.constant 1.000000e+00 : f32
    %85 = vector.broadcast %cst_66 : f32 to vector<1x8xf32>
    %86 = arith.addf %84, %85 : vector<1x8xf32>
    %cst_67 = arith.constant 5.000000e-01 : f32
    %87 = vector.broadcast %cst_67 : f32 to vector<1x8xf32>
    %88 = arith.mulf %87, %86 : vector<1x8xf32>
    %c0_68 = arith.constant 0 : index
    %c0_69 = arith.constant 0 : index
    %89 = vector.load %arg23[%c0_68, %c0_69] : memref<1x8xf32, #tpu.memory_space<vmem>>, vector<1x8xf32>
    tpu.vector_store %arg23[%c0_68, %c0_69], %88 {strides = array<i32>} : memref<1x8xf32, #tpu.memory_space<vmem>>, vector<1x8xf32>,
    return
  }
  func.func @transform_0(%arg0: i32) -> (i32, i32) {
    %c0_i32 = arith.constant 0 : i32
    %c0_i32_0 = arith.constant 0 : i32
    return %arg0, %c0_i32 : i32, i32
  }
  func.func @transform_1(%arg0: i32) -> (i32, i32) {
    %c0_i32 = arith.constant 0 : i32
    %c0_i32_0 = arith.constant 0 : i32
    return %arg0, %c0_i32 : i32, i32
  }
  func.func @transform_2(%arg0: i32) -> (i32, i32) {
    %c0_i32 = arith.constant 0 : i32
    %c0_i32_0 = arith.constant 0 : i32
    return %arg0, %c0_i32 : i32, i32
  }
  func.func @transform_3(%arg0: i32) -> (i32, i32) {
    %c0_i32 = arith.constant 0 : i32
    %c0_i32_0 = arith.constant 0 : i32
    return %arg0, %c0_i32 : i32, i32
  }
  func.func @transform_4(%arg0: i32) -> (i32, i32) {
    %c0_i32 = arith.constant 0 : i32
    %c0_i32_0 = arith.constant 0 : i32
    %c0_i32_1 = arith.constant 0 : i32
    return %c0_i32, %c0_i32_0 : i32, i32
  }
  func.func @transform_5(%arg0: i32) -> (i32, i32) {
    %c0_i32 = arith.constant 0 : i32
    %c0_i32_0 = arith.constant 0 : i32
    %c0_i32_1 = arith.constant 0 : i32
    return %c0_i32, %c0_i32_0 : i32, i32
  }
  func.func @transform_6(%arg0: i32) -> (i32, i32) {
    %c0_i32 = arith.constant 0 : i32
    %c0_i32_0 = arith.constant 0 : i32
    %c0_i32_1 = arith.constant 0 : i32
    return %c0_i32, %c0_i32_0 : i32, i32
  }
  func.func @transform_7(%arg0: i32) -> (i32, i32) {
    %c0_i32 = arith.constant 0 : i32
    %c0_i32_0 = arith.constant 0 : i32
    %c0_i32_1 = arith.constant 0 : i32
    return %c0_i32, %c0_i32_0 : i32, i32
  }
  func.func @transform_8(%arg0: i32) -> (i32, i32) {
    %c0_i32 = arith.constant 0 : i32
    %c0_i32_0 = arith.constant 0 : i32
    %c0_i32_1 = arith.constant 0 : i32
    return %c0_i32, %c0_i32_0 : i32, i32
  }
  func.func @transform_9(%arg0: i32) -> (i32, i32) {
    %c0_i32 = arith.constant 0 : i32
    %c0_i32_0 = arith.constant 0 : i32
    %c0_i32_1 = arith.constant 0 : i32
    return %c0_i32, %c0_i32_0 : i32, i32
  }
  func.func @transform_10(%arg0: i32) -> (i32, i32) {
    %c0_i32 = arith.constant 0 : i32
    %c0_i32_0 = arith.constant 0 : i32
    %c0_i32_1 = arith.constant 0 : i32
    return %c0_i32, %c0_i32_0 : i32, i32
  }
  func.func @transform_11(%arg0: i32) -> (i32, i32) {
    %c0_i32 = arith.constant 0 : i32
    %c0_i32_0 = arith.constant 0 : i32
    %c0_i32_1 = arith.constant 0 : i32
    return %c0_i32, %c0_i32_0 : i32, i32
  }
  func.func @transform_12(%arg0: i32) -> (i32, i32) {
    %c0_i32 = arith.constant 0 : i32
    %c0_i32_0 = arith.constant 0 : i32
    %c0_i32_1 = arith.constant 0 : i32
    return %c0_i32, %c0_i32_0 : i32, i32
  }
  func.func @transform_13(%arg0: i32) -> (i32, i32) {
    %c0_i32 = arith.constant 0 : i32
    %c0_i32_0 = arith.constant 0 : i32
    %c0_i32_1 = arith.constant 0 : i32
    return %c0_i32, %c0_i32_0 : i32, i32
  }
  func.func @transform_14(%arg0: i32) -> (i32, i32) {
    %c0_i32 = arith.constant 0 : i32
    %c0_i32_0 = arith.constant 0 : i32
    %c0_i32_1 = arith.constant 0 : i32
    return %c0_i32, %c0_i32_0 : i32, i32
  }
  func.func @transform_15(%arg0: i32) -> (i32, i32) {
    %c0_i32 = arith.constant 0 : i32
    %c0_i32_0 = arith.constant 0 : i32
    %c0_i32_1 = arith.constant 0 : i32
    return %c0_i32, %c0_i32_0 : i32, i32
  }
  func.func @transform_16(%arg0: i32) -> (i32, i32) {
    %c0_i32 = arith.constant 0 : i32
    %c0_i32_0 = arith.constant 0 : i32
    %c0_i32_1 = arith.constant 0 : i32
    return %c0_i32, %c0_i32_0 : i32, i32
  }
  func.func @transform_17(%arg0: i32) -> (i32, i32) {
    %c0_i32 = arith.constant 0 : i32
    %c0_i32_0 = arith.constant 0 : i32
    %c0_i32_1 = arith.constant 0 : i32
    return %c0_i32, %c0_i32_0 : i32, i32
  }
  func.func @transform_18(%arg0: i32) -> (i32, i32) {
    %c0_i32 = arith.constant 0 : i32
    %c0_i32_0 = arith.constant 0 : i32
    %c0_i32_1 = arith.constant 0 : i32
    return %c0_i32, %c0_i32_0 : i32, i32
  }
  func.func @transform_19(%arg0: i32) -> (i32, i32) {
    %c0_i32 = arith.constant 0 : i32
    %c0_i32_0 = arith.constant 0 : i32
    %c0_i32_1 = arith.constant 0 : i32
    return %c0_i32, %c0_i32_0 : i32, i32
  }
  func.func @transform_20(%arg0: i32) -> (i32, i32) {
    %c0_i32 = arith.constant 0 : i32
    %c0_i32_0 = arith.constant 0 : i32
    %c0_i32_1 = arith.constant 0 : i32
    return %c0_i32, %c0_i32_0 : i32, i32
  }
  func.func @transform_21(%arg0: i32) -> (i32, i32) {
    %c0_i32 = arith.constant 0 : i32
    %c0_i32_0 = arith.constant 0 : i32
    %c0_i32_1 = arith.constant 0 : i32
    return %c0_i32, %c0_i32_0 : i32, i32
  }
  func.func @transform_22(%arg0: i32) -> (i32, i32) {
    %c0_i32 = arith.constant 0 : i32
    %c0_i32_0 = arith.constant 0 : i32
    return %c0_i32, %arg0 : i32, i32
  }
}

</mosaic_0001>

<llo_original>
// kernel: wide_and_deep_forward.1
$region0: #{wide_and_deep_forward.1}
  #allocation0 [shape = 'u32[]', space=smem, size = 0x4, offset = 0x4, fixed_abs, tag = 'smem constant byte address 0x4 - core index']
  #allocation1 [shape = 'u32[72,128]{1,0:T(1,128)}', space=vmem, size = 0x9000, scoped, tag = 'internal scratch']
  #allocation2 [shape = 'f32[1,1]{1,0:T(1,128)S(1)}', space=vmem, size = 0x200, scoped, tag = 'scoped memory for wide_and_deep_forward.1']
  #allocation3 [shape = 'f32[1,1]{1,0:T(1,128)S(1)}', space=vmem, size = 0x200, scoped, tag = 'scoped memory for wide_and_deep_forward.1']
  %s0 = inlined_call_operand.vmem [shape: f32[8,16], index: 0, kind: input, shape index: {}]
  %s1 = inlined_call_operand.vmem [shape: f32[8,16], index: 1, kind: input, shape index: {}]
  %s2 = inlined_call_operand.vmem [shape: bf16[8,512], index: 2, kind: input, shape index: {}]
  %s3 = inlined_call_operand.vmem [shape: bf16[8,512], index: 3, kind: input, shape index: {}]
  %s4 = inlined_call_operand.vmem [shape: f32[8,8], index: 4, kind: input, shape index: {}]
  %s5 = inlined_call_operand.vmem [shape: f32[8,8], index: 5, kind: input, shape index: {}]
  %s6 = inlined_call_operand.vmem [shape: f32[1,16], index: 6, kind: input, shape index: {}]
  %s7 = inlined_call_operand.vmem [shape: f32[1,16], index: 7, kind: input, shape index: {}]
  %s8 = inlined_call_operand.vmem [shape: f32[16,16], index: 8, kind: input, shape index: {}]
  %s9 = inlined_call_operand.<no memory space> [shape: f32[1,1], index: 9, kind: input, shape index: {}]
  %s10 = inlined_call_operand.vmem [shape: f32[16,8], index: 10, kind: input, shape index: {}]
  %s11 = inlined_call_operand.vmem [shape: f32[1,8], index: 11, kind: input, shape index: {}]
  %s12 = inlined_call_operand.hbm [shape: bf16[512,512], index: 12, kind: input, shape index: {}]
  %s13 = inlined_call_operand.vmem [shape: bf16[8,512], index: 13, kind: input, shape index: {}]
  %s14 = inlined_call_operand.hbm [shape: bf16[512,512], index: 14, kind: input, shape index: {}]
  %s15 = inlined_call_operand.vmem [shape: f32[1,512], index: 15, kind: input, shape index: {}]
  %s16 = inlined_call_operand.hbm [shape: bf16[512,256], index: 16, kind: input, shape index: {}]
  %s17 = inlined_call_operand.vmem [shape: f32[1,256], index: 17, kind: input, shape index: {}]
  %s18 = inlined_call_operand.hbm [shape: bf16[256,128], index: 18, kind: input, shape index: {}]
  %s19 = inlined_call_operand.vmem [shape: f32[1,128], index: 19, kind: input, shape index: {}]
  %s20 = inlined_call_operand.vmem [shape: f32[1,128], index: 20, kind: input, shape index: {}]
  %s21 = inlined_call_operand.<no memory space> [shape: f32[1,1], index: 21, kind: input, shape index: {}]
  %s22 = inlined_call_operand.hbm [shape: f32[1,8], index: 22, kind: output, shape index: {}]
  %s23 = sld [smem:[#allocation0]]
  $region114: #{wide_and_deep_forward.1} parent=0
    _
  %s25 = ssub.s32 1, %s23
  %s26 = scalar_select 0, %s25, %s23
  %v27 = vstv %s9
  %28 = vst [vmem:[#allocation2] sm:$0x1] %v27
  %v29 = vstv %s21
  %30 = vst [vmem:[#allocation3] sm:$0x1] %v29
  $region1: #{wide_and_deep_forward.1} parent=0
    #allocation4 [shape = 'u8[524288]{0}', space=vmem, size = 0x80000, scoped, tag = 'input window, operand 12, single buffered']
    #allocation5 [shape = 's32[1]{0}', space=sflag, size = 0x4, scoped, tag = 'scoped memory for wide_and_deep_forward.1']
    #allocation6 [shape = 's32[1]{0}', space=sflag, size = 0x4, scoped, tag = 'scoped memory for wide_and_deep_forward.1']
    #allocation7 [shape = 'u8[524288]{0}', space=vmem, size = 0x80000, scoped, tag = 'input window, operand 14, single buffered']
    #allocation8 [shape = 's32[1]{0}', space=sflag, size = 0x4, scoped, tag = 'scoped memory for wide_and_deep_forward.1']
    #allocation9 [shape = 'u8[262144]{0}', space=vmem, size = 0x40000, scoped, tag = 'input window, operand 16, single buffered']
    #allocation10 [shape = 'u8[65536]{0}', space=vmem, size = 0x10000, scoped, tag = 'input window, operand 18, single buffered']
    #allocation11 [shape = 's32[1]{0}', space=sflag, size = 0x4, scoped, tag = 'scoped memory for wide_and_deep_forward.1']
    #allocation12 [shape = 'u8[512]{0}', space=vmem, size = 0x400, scoped, tag = 'output window, operand 0, single buffered']
    %31 = vsyncpa [#allocation5], 0
    %32 = vsyncpa [#allocation8], 0
    %33 = vsyncpa [#allocation11], 0
    %34 = vsyncpa [#allocation6], 0
    // Predicated region
    $region2: #{wide_and_deep_forward.1} parent=1 // pred_check
      _
    $region3: #{wide_and_deep_forward.1} parent=1 // pred_check_branch
      %36 = sbr.rel (0) target = $region5
    $region4: #{wide_and_deep_forward.1} parent=1 // pred_region
      _
    $region5: #{wide_and_deep_forward.1} parent=1 // pred_fallthru
      _
    // Predicated region
    $region6: #{wide_and_deep_forward.1} parent=1 // pred_check
      _
    $region7: #{wide_and_deep_forward.1} parent=1 // pred_check_branch
      %38 = sbr.rel (0) target = $region9
    $region8: #{wide_and_deep_forward.1} parent=1 // pred_region
      _
    $region9: #{wide_and_deep_forward.1} parent=1 // pred_fallthru
      _
    // Predicated region
    $region10: #{wide_and_deep_forward.1} parent=1 // pred_check
      _
    $region11: #{wide_and_deep_forward.1} parent=1 // pred_check_branch
      %40 = sbr.rel (0) target = $region13
    $region12: #{wide_and_deep_forward.1} parent=1 // pred_region
      _
    $region13: #{wide_and_deep_forward.1} parent=1 // pred_fallthru
      _
    // Predicated region
    $region14: #{wide_and_deep_forward.1} parent=1 // pred_check
      _
    $region15: #{wide_and_deep_forward.1} parent=1 // pred_check_branch
      %42 = sbr.rel (0) target = $region17
    $region16: #{wide_and_deep_forward.1} parent=1 // pred_region
      _
    $region17: #{wide_and_deep_forward.1} parent=1 // pred_fallthru
      _
    // Predicated region
    $region18: #{wide_and_deep_forward.1} parent=1 // pred_check
      _
    $region19: #{wide_and_deep_forward.1} parent=1 // pred_check_branch
      %44 = sbr.rel (0) target = $region21
    $region20: #{wide_and_deep_forward.1} parent=1 // pred_region
      _
    $region21: #{wide_and_deep_forward.1} parent=1 // pred_fallthru
      _
    // Predicated region
    $region22: #{wide_and_deep_forward.1} parent=1 // pred_check
      _
    $region23: #{wide_and_deep_forward.1} parent=1 // pred_check_branch
      %46 = sbr.rel (0) target = $region25
    $region24: #{wide_and_deep_forward.1} parent=1 // pred_region
      _
    $region25: #{wide_and_deep_forward.1} parent=1 // pred_fallthru
      _
    // Predicated region
    $region26: #{wide_and_deep_forward.1} parent=1 // pred_check
      _
    $region27: #{wide_and_deep_forward.1} parent=1 // pred_check_branch
      %48 = sbr.rel (0) target = $region29
    $region28: #{wide_and_deep_forward.1} parent=1 // pred_region
      _
    $region29: #{wide_and_deep_forward.1} parent=1 // pred_fallthru
      _
    // Predicated region
    $region30: #{wide_and_deep_forward.1} parent=1 // pred_check
      _
    $region31: #{wide_and_deep_forward.1} parent=1 // pred_check_branch
      %50 = sbr.rel (0) target = $region33
    $region32: #{wide_and_deep_forward.1} parent=1 // pred_region
      _
    $region33: #{wide_and_deep_forward.1} parent=1 // pred_fallthru
      _
    // Predicated region
    $region34: #{wide_and_deep_forward.1} parent=1 // pred_check
      _
    $region35: #{wide_and_deep_forward.1} parent=1 // pred_check_branch
      %52 = sbr.rel (0) target = $region37
    $region36: #{wide_and_deep_forward.1} parent=1 // pred_region
      _
    $region37: #{wide_and_deep_forward.1} parent=1 // pred_fallthru
      _
    // Predicated region
    $region38: #{wide_and_deep_forward.1} parent=1 // pred_check
      _
    $region39: #{wide_and_deep_forward.1} parent=1 // pred_check_branch
      %54 = sbr.rel (0) target = $region41
    $region40: #{wide_and_deep_forward.1} parent=1 // pred_region
      _
    $region41: #{wide_and_deep_forward.1} parent=1 // pred_fallthru
      _
    // Predicated region
    $region42: #{wide_and_deep_forward.1} parent=1 // pred_check
      _
    $region43: #{wide_and_deep_forward.1} parent=1 // pred_check_branch
      %56 = sbr.rel (0) target = $region45
    $region44: #{wide_and_deep_forward.1} parent=1 // pred_region
      _
    $region45: #{wide_and_deep_forward.1} parent=1 // pred_fallthru
      _
    // Predicated region
    $region46: #{wide_and_deep_forward.1} parent=1 // pred_check
      _
    $region47: #{wide_and_deep_forward.1} parent=1 // pred_check_branch
      %58 = sbr.rel (0) target = $region49
    $region48: #{wide_and_deep_forward.1} parent=1 // pred_region
      _
    $region49: #{wide_and_deep_forward.1} parent=1 // pred_fallthru
      _
    // Predicated region
    $region50: #{wide_and_deep_forward.1} parent=1 // pred_check
      _
    $region51: #{wide_and_deep_forward.1} parent=1 // pred_check_branch
      %60 = sbr.rel (0) target = $region53
    $region52: #{wide_and_deep_forward.1} parent=1 // pred_region
      %62 = vsyncadd [#allocation5], 0
      %s63 = sshll.u32 %s12, 4
      %s64 = int_to_ptr.hbm [resolvable:$true] %s63
      %s65 = sshll.u32 [#allocation4], 4
      %s66 = int_to_ptr.vmem [resolvable:$true] %s65
      %71 = dma.hbm_to_vmem [thread:$0]  %s64, 16384, %s66, [#allocation5], 256, 256, 16
    $region53: #{wide_and_deep_forward.1} parent=1 // pred_fallthru
      _
    // Predicated region
    $region54: #{wide_and_deep_forward.1} parent=1 // pred_check
      _
    $region55: #{wide_and_deep_forward.1} parent=1 // pred_check_branch
      %73 = sbr.rel (0) target = $region57
    $region56: #{wide_and_deep_forward.1} parent=1 // pred_region
      _
    $region57: #{wide_and_deep_forward.1} parent=1 // pred_fallthru
      _
    // Predicated region
    $region58: #{wide_and_deep_forward.1} parent=1 // pred_check
      _
    $region59: #{wide_and_deep_forward.1} parent=1 // pred_check_branch
      %75 = sbr.rel (0) target = $region61
    $region60: #{wide_and_deep_forward.1} parent=1 // pred_region
      %77 = vsyncadd [#allocation8], 0
      %s78 = sshll.u32 %s14, 4
      %s79 = int_to_ptr.hbm [resolvable:$true] %s78
      %s80 = sshll.u32 [#allocation7], 4
      %s81 = int_to_ptr.vmem [resolvable:$true] %s80
      %86 = dma.hbm_to_vmem [thread:$0]  %s79, 16384, %s81, [#allocation8], 256, 256, 16
    $region61: #{wide_and_deep_forward.1} parent=1 // pred_fallthru
      _
    // Predicated region
    $region62: #{wide_and_deep_forward.1} parent=1 // pred_check
      _
    $region63: #{wide_and_deep_forward.1} parent=1 // pred_check_branch
      %88 = sbr.rel (0) target = $region65
    $region64: #{wide_and_deep_forward.1} parent=1 // pred_region
      _
    $region65: #{wide_and_deep_forward.1} parent=1 // pred_fallthru
      _
    // Predicated region
    $region66: #{wide_and_deep_forward.1} parent=1 // pred_check
      _
    $region67: #{wide_and_deep_forward.1} parent=1 // pred_check_branch
      %90 = sbr.rel (0) target = $region69
    $region68: #{wide_and_deep_forward.1} parent=1 // pred_region
      %92 = vsyncadd [#allocation8], 0
      %s93 = sshll.u32 %s16, 4
      %s94 = int_to_ptr.hbm [resolvable:$true] %s93
      %s95 = sshll.u32 [#allocation9], 4
      %s96 = int_to_ptr.vmem [resolvable:$true] %s95
      %101 = dma.hbm_to_vmem [thread:$0]  %s94, 8192, %s96, [#allocation8], 128, 128, 8
    $region69: #{wide_and_deep_forward.1} parent=1 // pred_fallthru
      _
    // Predicated region
    $region70: #{wide_and_deep_forward.1} parent=1 // pred_check
      _
    $region71: #{wide_and_deep_forward.1} parent=1 // pred_check_branch
      %103 = sbr.rel (0) target = $region73
    $region72: #{wide_and_deep_forward.1} parent=1 // pred_region
      _
    $region73: #{wide_and_deep_forward.1} parent=1 // pred_fallthru
      _
    // Predicated region
    $region74: #{wide_and_deep_forward.1} parent=1 // pred_check
      _
    $region75: #{wide_and_deep_forward.1} parent=1 // pred_check_branch
      %105 = sbr.rel (0) target = $region77
    $region76: #{wide_and_deep_forward.1} parent=1 // pred_region
      %107 = vsyncadd [#allocation11], 0
      %s108 = sshll.u32 %s18, 4
      %s109 = int_to_ptr.hbm [resolvable:$true] %s108
      %s110 = sshll.u32 [#allocation10], 4
      %s111 = int_to_ptr.vmem [resolvable:$true] %s110
      %116 = dma.hbm_to_vmem [thread:$0]  %s109, 2048, %s111, [#allocation11], 64, 64, 4
    $region77: #{wide_and_deep_forward.1} parent=1 // pred_fallthru
      _
    // Predicated region
    $region78: #{wide_and_deep_forward.1} parent=1 // pred_check
      _
    $region79: #{wide_and_deep_forward.1} parent=1 // pred_check_branch
      %118 = sbr.rel (0) target = $region81
    $region80: #{wide_and_deep_forward.1} parent=1 // pred_region
      _
    $region81: #{wide_and_deep_forward.1} parent=1 // pred_fallthru
      _
    // Predicated region
    $region82: #{wide_and_deep_forward.1} parent=1 // pred_check
      _
    $region83: #{wide_and_deep_forward.1} parent=1 // pred_check_branch
      %120 = sbr.rel (0) target = $region85
    $region84: #{wide_and_deep_forward.1} parent=1 // pred_region
      _
    $region85: #{wide_and_deep_forward.1} parent=1 // pred_fallthru
      _
    // Predicated region
    $region86: #{wide_and_deep_forward.1} parent=1 // pred_check
      _
    $region87: #{wide_and_deep_forward.1} parent=1 // pred_check_branch
      %122 = sbr.rel (0) target = $region89
    $region88: #{wide_and_deep_forward.1} parent=1 // pred_region
      _
    $region89: #{wide_and_deep_forward.1} parent=1 // pred_fallthru
      _
    // Predicated region
    $region90: #{wide_and_deep_forward.1} parent=1 // pred_check
      _
    $region91: #{wide_and_deep_forward.1} parent=1 // pred_check_branch
      %124 = sbr.rel (0) target = $region93
    $region92: #{wide_and_deep_forward.1} parent=1 // pred_region
      %126 = dma.done [#allocation5], 16384
    $region93: #{wide_and_deep_forward.1} parent=1 // pred_fallthru
      _
    // Predicated region
    $region94: #{wide_and_deep_forward.1} parent=1 // pred_check
      _
    $region95: #{wide_and_deep_forward.1} parent=1 // pred_check_branch
      %128 = sbr.rel (0) target = $region97
    $region96: #{wide_and_deep_forward.1} parent=1 // pred_region
      %130 = dma.done [#allocation8], 16384
    $region97: #{wide_and_deep_forward.1} parent=1 // pred_fallthru
      _
    // Predicated region
    $region98: #{wide_and_deep_forward.1} parent=1 // pred_check
      _
    $region99: #{wide_and_deep_forward.1} parent=1 // pred_check_branch
      %132 = sbr.rel (0) target = $region101
    $region100: #{wide_and_deep_forward.1} parent=1 // pred_region
      %134 = dma.done [#allocation8], 8192
    $region101: #{wide_and_deep_forward.1} parent=1 // pred_fallthru
      _
    // Predicated region
    $region102: #{wide_and_deep_forward.1} parent=1 // pred_check
      _
    $region103: #{wide_and_deep_forward.1} parent=1 // pred_check_branch
      %136 = sbr.rel (0) target = $region105
    $region104: #{wide_and_deep_forward.1} parent=1 // pred_region
      %138 = dma.done [#allocation11], 2048
    $region105: #{wide_and_deep_forward.1} parent=1 // pred_fallthru
      _
    %v140 = vld [vmem:[%s0] sm:$0xff]
    %v141 = vld [vmem:[%s1] sm:$0xff]
    %v142 = vld [vmem:[%s6] sm:$0x1]
    %v143 = vld [vmem:[%s7] sm:$0x1]
    %vm144 = vcmask 130048
    %v146 = vsel %vm144, %v143, 0
    %v149 = vsel %vm144, %v141, 0
    %151 = vmatpush.xpose.msra.mxu0 0.0
    %152 = vmatpush.xpose.msra.mxu0 0.0
    %153 = vmatpush.xpose.msra.mxu0 0.0
    %154 = vmatpush.xpose.msra.mxu0 0.0
    %155 = vmatpush.xpose.msra.mxu0 0.0
    %156 = vmatpush.xpose.msra.mxu0 0.0
    %157 = vmatpush.xpose.msra.mxu0 0.0
    %158 = vmatpush.xpose.msra.mxu0 0.0
    %159 = vmatpush.xpose.msra.mxu0 0.0
    %160 = vmatpush.xpose.msra.mxu0 0.0
    %161 = vmatpush.xpose.msra.mxu0 0.0
    %162 = vmatpush.xpose.msra.mxu0 0.0
    %163 = vmatpush.xpose.msra.mxu0 0.0
    %164 = vmatpush.xpose.msra.mxu0 0.0
    %165 = vmatpush.xpose.msra.mxu0 0.0
    %166 = vmatpush.xpose.msra.mxu0 %v149
    %167 = vmatmul.f32.gmra.mxu0 %v146
    %v168 = vpop.f32.mrf.mxu0
    %v169 = vadd.f32 0.0, %v168
    %170 = vdwg.mxu0
    %v171 = vld [vmem:[%s8] sm:$0xff]
    %v172 = vld [vmem:[%s8 + $0x8] sm:$0xff]
    %v174 = vsel %vm144, %v140, 0
    %176 = vmatpush.msra.mxu0 0.0
    %177 = vmatpush.msra.mxu0 0.0
    %178 = vmatpush.msra.mxu0 0.0
    %179 = vmatpush.msra.mxu0 0.0
    %180 = vmatpush.msra.mxu0 0.0
    %181 = vmatpush.msra.mxu0 0.0
    %182 = vmatpush.msra.mxu0 0.0
    %183 = vmatpush.msra.mxu0 0.0
    %184 = vmatpush.msra.mxu0 0.0
    %185 = vmatpush.msra.mxu0 0.0
    %186 = vmatpush.msra.mxu0 0.0
    %187 = vmatpush.msra.mxu0 0.0
    %188 = vmatpush.msra.mxu0 0.0
    %189 = vmatpush.msra.mxu0 0.0
    %190 = vmatpush.msra.mxu0 %v172
    %191 = vmatpush.msra.mxu0 %v171
    %192 = vmatmul.f32.gmra.mxu0 %v174
    %v193 = vpop.f32.mrf.mxu0
    %v194 = vadd.f32 0.0, %v193
    %195 = vdwg.mxu0
    %v196 = vmul.f32 %v194, %v141
    %v198 = vsel %vm144, 1.0, 0
    %v201 = vsel %vm144, %v196, 0
    %203 = vmatpush.xpose.msra.mxu0 0.0
    %204 = vmatpush.xpose.msra.mxu0 0.0
    %205 = vmatpush.xpose.msra.mxu0 0.0
    %206 = vmatpush.xpose.msra.mxu0 0.0
    %207 = vmatpush.xpose.msra.mxu0 0.0
    %208 = vmatpush.xpose.msra.mxu0 0.0
    %209 = vmatpush.xpose.msra.mxu0 0.0
    %210 = vmatpush.xpose.msra.mxu0 0.0
    %211 = vmatpush.xpose.msra.mxu0 0.0
    %212 = vmatpush.xpose.msra.mxu0 0.0
    %213 = vmatpush.xpose.msra.mxu0 0.0
    %214 = vmatpush.xpose.msra.mxu0 0.0
    %215 = vmatpush.xpose.msra.mxu0 0.0
    %216 = vmatpush.xpose.msra.mxu0 0.0
    %217 = vmatpush.xpose.msra.mxu0 0.0
    %218 = vmatpush.xpose.msra.mxu0 %v201
    %219 = vmatmul.f32.gmra.mxu0 %v198
    %v220 = vpop.f32.mrf.mxu0
    %v221 = vadd.f32 0.0, %v220
    %222 = vdwg.mxu0
    %v224 = vsel %vm144, %v142, 0
    %226 = vmatpush.xpose.msra.mxu0 0.0
    %227 = vmatpush.xpose.msra.mxu0 0.0
    %228 = vmatpush.xpose.msra.mxu0 0.0
    %229 = vmatpush.xpose.msra.mxu0 0.0
    %230 = vmatpush.xpose.msra.mxu0 0.0
    %231 = vmatpush.xpose.msra.mxu0 0.0
    %232 = vmatpush.xpose.msra.mxu0 0.0
    %233 = vmatpush.xpose.msra.mxu0 0.0
    %234 = vmatpush.xpose.msra.mxu0 0.0
    %235 = vmatpush.xpose.msra.mxu0 0.0
    %236 = vmatpush.xpose.msra.mxu0 0.0
    %237 = vmatpush.xpose.msra.mxu0 0.0
    %238 = vmatpush.xpose.msra.mxu0 0.0
    %239 = vmatpush.xpose.msra.mxu0 0.0
    %240 = vmatpush.xpose.msra.mxu0 0.0
    %241 = vmatpush.xpose.msra.mxu0 %v174
    %242 = vmatmul.f32.gmra.mxu0 %v224
    %v243 = vpop.f32.mrf.mxu0
    %v244 = vadd.f32 %v169, %v243
    %245 = vdwg.mxu0
    %v246 = vadd.f32 %v244, %v221
    %v247 = vld [vmem:[#allocation2] sm:$0x1]
    %249 = vset.pattern.permute.xlu0 0
    %250 = vperm.xlu0 %249, %v247
    %v251 = vpop.permute.xlu0 %250
    %v253 = vperm.slane %v251, 0
    %v254 = vadd.f32 %v246, %v253
    %v255 = vmul.f32 %v254, 0.5
    %v256 = vtanh.pop %v255
    %v257 = vadd.f32 %v256, 1.0
    %v258 = vmul.f32 %v257, 0.5
    %v259 = vld [vmem:[%s10] sm:$0xff]
    %v260 = vld [vmem:[%s10 + $0x8] sm:$0xff]
    %v261 = vld [vmem:[%s11] sm:$0x1]
    %v263 = vperm.slane %v261, 0
    %265 = vmatpush.msra.mxu0 0.0
    %266 = vmatpush.msra.mxu0 0.0
    %267 = vmatpush.msra.mxu0 0.0
    %268 = vmatpush.msra.mxu0 0.0
    %269 = vmatpush.msra.mxu0 0.0
    %270 = vmatpush.msra.mxu0 0.0
    %271 = vmatpush.msra.mxu0 0.0
    %272 = vmatpush.msra.mxu0 0.0
    %273 = vmatpush.msra.mxu0 0.0
    %274 = vmatpush.msra.mxu0 0.0
    %275 = vmatpush.msra.mxu0 0.0
    %276 = vmatpush.msra.mxu0 0.0
    %277 = vmatpush.msra.mxu0 0.0
    %278 = vmatpush.msra.mxu0 0.0
    %279 = vmatpush.msra.mxu0 %v260
    %280 = vmatpush.msra.mxu0 %v259
    %281 = vmatmul.f32.gmra.mxu0 %v149
    %v282 = vpop.f32.mrf.mxu0
    %v283 = vadd.f32 %v263, %v282
    %284 = vdwg.mxu0
    %v285 = vld [vmem:[%s4] sm:$0xff]
    %vm286 = vcmask 64512
    %v288 = vsel %vm286, %v283, 0
    %v291 = vsel %vm286, %v285, 0
    %293 = vmatpush.xpose.msra.mxu0 0.0
    %294 = vmatpush.xpose.msra.mxu0 0.0
    %295 = vmatpush.xpose.msra.mxu0 0.0
    %296 = vmatpush.xpose.msra.mxu0 0.0
    %297 = vmatpush.xpose.msra.mxu0 0.0
    %298 = vmatpush.xpose.msra.mxu0 0.0
    %299 = vmatpush.xpose.msra.mxu0 0.0
    %300 = vmatpush.xpose.msra.mxu0 0.0
    %301 = vmatpush.xpose.msra.mxu0 0.0
    %302 = vmatpush.xpose.msra.mxu0 0.0
    %303 = vmatpush.xpose.msra.mxu0 0.0
    %304 = vmatpush.xpose.msra.mxu0 0.0
    %305 = vmatpush.xpose.msra.mxu0 0.0
    %306 = vmatpush.xpose.msra.mxu0 0.0
    %307 = vmatpush.xpose.msra.mxu0 0.0
    %308 = vmatpush.xpose.msra.mxu0 %v291
    %309 = vmatmul.f32.gmra.mxu0 %v288
    %v310 = vpop.f32.mrf.mxu0
    %v311 = vadd.f32 0.0, %v310
    %312 = vdwg.mxu0
    %v313 = vmul.f32 %v311, 0.35355338
    %v314 = vsel %vm286, %v313, -inf
    %315 = vmax.xlane.f32.xlu0 %v314
    %v316 = vpop.xlane.xlu0 %315
    %v317 = vsub.f32 %v313, %v316
    %v318 = vmul.f32 %v317, 1.442695
    %v319 = vpow.pop %v318
    %v320 = vsel %vm286, %v319, 0.0
    %321 = vadd.xlane.f32.xlu0 %v320
    %v322 = vpop.xlane.xlu0 %321
    %v323 = vrcp.pop %v322
    %v324 = vmul.f32 %v319, %v323
    %v325 = vld [vmem:[%s5] sm:$0xff]
    %v327 = vsel %vm286, %v324, 0
    %329 = vmatpush.msra.mxu0 0.0
    %330 = vmatpush.msra.mxu0 0.0
    %331 = vmatpush.msra.mxu0 0.0
    %332 = vmatpush.msra.mxu0 0.0
    %333 = vmatpush.msra.mxu0 0.0
    %334 = vmatpush.msra.mxu0 0.0
    %335 = vmatpush.msra.mxu0 0.0
    %336 = vmatpush.msra.mxu0 0.0
    %337 = vmatpush.msra.mxu0 0.0
    %338 = vmatpush.msra.mxu0 0.0
    %339 = vmatpush.msra.mxu0 0.0
    %340 = vmatpush.msra.mxu0 0.0
    %341 = vmatpush.msra.mxu0 0.0
    %342 = vmatpush.msra.mxu0 0.0
    %343 = vmatpush.msra.mxu0 0.0
    %344 = vmatpush.msra.mxu0 %v325
    %345 = vmatmul.f32.gmra.mxu0 %v327
    %v346 = vpop.f32.mrf.mxu0
    %v347 = vadd.f32 0.0, %v346
    %348 = vdwg.mxu0
    %v349 = vld [vmem:[%s2] sm:$0xff]
    %v350 = vld [vmem:[%s2 + $0x8] sm:$0xff]
    %v351 = vld [vmem:[#allocation4] sm:$0xff]
    %v352 = vld [vmem:[#allocation4 + $0x8] sm:$0xff]
    %v353 = vld [vmem:[#allocation4 + $0x10] sm:$0xff]
    %v354 = vld [vmem:[#allocation4 + $0x18] sm:$0xff]
    %v355 = vld [vmem:[#allocation4 + $0x20] sm:$0xff]
    %v356 = vld [vmem:[#allocation4 + $0x28] sm:$0xff]
    %v357 = vld [vmem:[#allocation4 + $0x30] sm:$0xff]
    %v358 = vld [vmem:[#allocation4 + $0x38] sm:$0xff]
    %v359 = vld [vmem:[#allocation4 + $0x40] sm:$0xff]
    %v360 = vld [vmem:[#allocation4 + $0x48] sm:$0xff]
    %v361 = vld [vmem:[#allocation4 + $0x50] sm:$0xff]
    %v362 = vld [vmem:[#allocation4 + $0x58] sm:$0xff]
    %v363 = vld [vmem:[#allocation4 + $0x60] sm:$0xff]
    %v364 = vld [vmem:[#allocation4 + $0x68] sm:$0xff]
    %v365 = vld [vmem:[#allocation4 + $0x70] sm:$0xff]
    %v366 = vld [vmem:[#allocation4 + $0x78] sm:$0xff]
    %v367 = vld [vmem:[#allocation4 + $0x80] sm:$0xff]
    %v368 = vld [vmem:[#allocation4 + $0x88] sm:$0xff]
    %v369 = vld [vmem:[#allocation4 + $0x90] sm:$0xff]
    %v370 = vld [vmem:[#allocation4 + $0x98] sm:$0xff]
    %v371 = vld [vmem:[#allocation4 + $0xa0] sm:$0xff]
    %v372 = vld [vmem:[#allocation4 + $0xa8] sm:$0xff]
    %v373 = vld [vmem:[#allocation4 + $0xb0] sm:$0xff]
    %v374 = vld [vmem:[#allocation4 + $0xb8] sm:$0xff]
    %v375 = vld [vmem:[#allocation4 + $0xc0] sm:$0xff]
    %v376 = vld [vmem:[#allocation4 + $0xc8] sm:$0xff]
    %v377 = vld [vmem:[#allocation4 + $0xd0] sm:$0xff]
    %v378 = vld [vmem:[#allocation4 + $0xd8] sm:$0xff]
    %v379 = vld [vmem:[#allocation4 + $0xe0] sm:$0xff]
    %v380 = vld [vmem:[#allocation4 + $0xe8] sm:$0xff]
    %v381 = vld [vmem:[#allocation4 + $0xf0] sm:$0xff]
    %v382 = vld [vmem:[#allocation4 + $0xf8] sm:$0xff]
    %v383 = vld [vmem:[#allocation4 + $0x100] sm:$0xff]
    %v384 = vld [vmem:[#allocation4 + $0x108] sm:$0xff]
    %v385 = vld [vmem:[#allocation4 + $0x110] sm:$0xff]
    %v386 = vld [vmem:[#allocation4 + $0x118] sm:$0xff]
    %v387 = vld [vmem:[#allocation4 + $0x120] sm:$0xff]
    %v388 = vld [vmem:[#allocation4 + $0x128] sm:$0xff]
    %v389 = vld [vmem:[#allocation4 + $0x130] sm:$0xff]
    %v390 = vld [vmem:[#allocation4 + $0x138] sm:$0xff]
    %v391 = vld [vmem:[#allocation4 + $0x140] sm:$0xff]
    %v392 = vld [vmem:[#allocation4 + $0x148] sm:$0xff]
    %v393 = vld [vmem:[#allocation4 + $0x150] sm:$0xff]
    %v394 = vld [vmem:[#allocation4 + $0x158] sm:$0xff]
    %v395 = vld [vmem:[#allocation4 + $0x160] sm:$0xff]
    %v396 = vld [vmem:[#allocation4 + $0x168] sm:$0xff]
    %v397 = vld [vmem:[#allocation4 + $0x170] sm:$0xff]
    %v398 = vld [vmem:[#allocation4 + $0x178] sm:$0xff]
    %v399 = vld [vmem:[#allocation4 + $0x180] sm:$0xff]
    %v400 = vld [vmem:[#allocation4 + $0x188] sm:$0xff]
    %v401 = vld [vmem:[#allocation4 + $0x190] sm:$0xff]
    %v402 = vld [vmem:[#allocation4 + $0x198] sm:$0xff]
    %v403 = vld [vmem:[#allocation4 + $0x1a0] sm:$0xff]
    %v404 = vld [vmem:[#allocation4 + $0x1a8] sm:$0xff]
    %v405 = vld [vmem:[#allocation4 + $0x1b0] sm:$0xff]
    %v406 = vld [vmem:[#allocation4 + $0x1b8] sm:$0xff]
    %v407 = vld [vmem:[#allocation4 + $0x1c0] sm:$0xff]
    %v408 = vld [vmem:[#allocation4 + $0x1c8] sm:$0xff]
    %v409 = vld [vmem:[#allocation4 + $0x1d0] sm:$0xff]
    %v410 = vld [vmem:[#allocation4 + $0x1d8] sm:$0xff]
    %v411 = vld [vmem:[#allocation4 + $0x1e0] sm:$0xff]
    %v412 = vld [vmem:[#allocation4 + $0x1e8] sm:$0xff]
    %v413 = vld [vmem:[#allocation4 + $0x1f0] sm:$0xff]
    %v414 = vld [vmem:[#allocation4 + $0x1f8] sm:$0xff]
    %v415 = vld [vmem:[#allocation4 + $0x200] sm:$0xff]
    %v416 = vld [vmem:[#allocation4 + $0x208] sm:$0xff]
    %v417 = vld [vmem:[#allocation4 + $0x210] sm:$0xff]
    %v418 = vld [vmem:[#allocation4 + $0x218] sm:$0xff]
    %v419 = vld [vmem:[#allocation4 + $0x220] sm:$0xff]
    %v420 = vld [vmem:[#allocation4 + $0x228] sm:$0xff]
    %v421 = vld [vmem:[#allocation4 + $0x230] sm:$0xff]
    %v422 = vld [vmem:[#allocation4 + $0x238] sm:$0xff]
    %v423 = vld [vmem:[#allocation4 + $0x240] sm:$0xff]
    %v424 = vld [vmem:[#allocation4 + $0x248] sm:$0xff]
    %v425 = vld [vmem:[#allocation4 + $0x250] sm:$0xff]
    %v426 = vld [vmem:[#allocation4 + $0x258] sm:$0xff]
    %v427 = vld [vmem:[#allocation4 + $0x260] sm:$0xff]
    %v428 = vld [vmem:[#allocation4 + $0x268] sm:$0xff]
    %v429 = vld [vmem:[#allocation4 + $0x270] sm:$0xff]
    %v430 = vld [vmem:[#allocation4 + $0x278] sm:$0xff]
    %v431 = vld [vmem:[#allocation4 + $0x280] sm:$0xff]
    %v432 = vld [vmem:[#allocation4 + $0x288] sm:$0xff]
    %v433 = vld [vmem:[#allocation4 + $0x290] sm:$0xff]
    %v434 = vld [vmem:[#allocation4 + $0x298] sm:$0xff]
    %v435 = vld [vmem:[#allocation4 + $0x2a0] sm:$0xff]
    %v436 = vld [vmem:[#allocation4 + $0x2a8] sm:$0xff]
    %v437 = vld [vmem:[#allocation4 + $0x2b0] sm:$0xff]
    %v438 = vld [vmem:[#allocation4 + $0x2b8] sm:$0xff]
    %v439 = vld [vmem:[#allocation4 + $0x2c0] sm:$0xff]
    %v440 = vld [vmem:[#allocation4 + $0x2c8] sm:$0xff]
    %v441 = vld [vmem:[#allocation4 + $0x2d0] sm:$0xff]
    %v442 = vld [vmem:[#allocation4 + $0x2d8] sm:$0xff]
    %v443 = vld [vmem:[#allocation4 + $0x2e0] sm:$0xff]
    %v444 = vld [vmem:[#allocation4 + $0x2e8] sm:$0xff]
    %v445 = vld [vmem:[#allocation4 + $0x2f0] sm:$0xff]
    %v446 = vld [vmem:[#allocation4 + $0x2f8] sm:$0xff]
    %v447 = vld [vmem:[#allocation4 + $0x300] sm:$0xff]
    %v448 = vld [vmem:[#allocation4 + $0x308] sm:$0xff]
    %v449 = vld [vmem:[#allocation4 + $0x310] sm:$0xff]
    %v450 = vld [vmem:[#allocation4 + $0x318] sm:$0xff]
    %v451 = vld [vmem:[#allocation4 + $0x320] sm:$0xff]
    %v452 = vld [vmem:[#allocation4 + $0x328] sm:$0xff]
    %v453 = vld [vmem:[#allocation4 + $0x330] sm:$0xff]
    %v454 = vld [vmem:[#allocation4 + $0x338] sm:$0xff]
    %v455 = vld [vmem:[#allocation4 + $0x340] sm:$0xff]
    %v456 = vld [vmem:[#allocation4 + $0x348] sm:$0xff]
    %v457 = vld [vmem:[#allocation4 + $0x350] sm:$0xff]
    %v458 = vld [vmem:[#allocation4 + $0x358] sm:$0xff]
    %v459 = vld [vmem:[#allocation4 + $0x360] sm:$0xff]
    %v460 = vld [vmem:[#allocation4 + $0x368] sm:$0xff]
    %v461 = vld [vmem:[#allocation4 + $0x370] sm:$0xff]
    %v462 = vld [vmem:[#allocation4 + $0x378] sm:$0xff]
    %v463 = vld [vmem:[#allocation4 + $0x380] sm:$0xff]
    %v464 = vld [vmem:[#allocation4 + $0x388] sm:$0xff]
    %v465 = vld [vmem:[#allocation4 + $0x390] sm:$0xff]
    %v466 = vld [vmem:[#allocation4 + $0x398] sm:$0xff]
    %v467 = vld [vmem:[#allocation4 + $0x3a0] sm:$0xff]
    %v468 = vld [vmem:[#allocation4 + $0x3a8] sm:$0xff]
    %v469 = vld [vmem:[#allocation4 + $0x3b0] sm:$0xff]
    %v470 = vld [vmem:[#allocation4 + $0x3b8] sm:$0xff]
    %v471 = vld [vmem:[#allocation4 + $0x3c0] sm:$0xff]
    %v472 = vld [vmem:[#allocation4 + $0x3c8] sm:$0xff]
    %v473 = vld [vmem:[#allocation4 + $0x3d0] sm:$0xff]
    %v474 = vld [vmem:[#allocation4 + $0x3d8] sm:$0xff]
    %v475 = vld [vmem:[#allocation4 + $0x3e0] sm:$0xff]
    %v476 = vld [vmem:[#allocation4 + $0x3e8] sm:$0xff]
    %v477 = vld [vmem:[#allocation4 + $0x3f0] sm:$0xff]
    %v478 = vld [vmem:[#allocation4 + $0x3f8] sm:$0xff]
    %v479 = vpack.c.bf16 %v347, %v347
    %v480 = vld [vmem:[%s13] sm:$0xff]
    %v481 = vld [vmem:[%s13 + $0x8] sm:$0xff]
    %v484 = vunpack.c.l.b16 %v480
    %v485 = vunpack.c.h.b16 %v480
    %v486 = vunpack.c.l.b16 %v481
    %v487 = vunpack.c.h.b16 %v481
    %v488 = vpack.c.b16 %v484, %v484
    %v489 = vpack.c.b16 %v485, %v485
    %v490 = vpack.c.b16 %v486, %v486
    %v491 = vpack.c.b16 %v487, %v487
    %v493 = vsel %vm286, %v479, 0
    %vm495 = vcmask 1043456
    %v497 = vsel %vm495, %v488, 0
    %v500 = vsel %vm495, %v489, 0
    %v503 = vsel %vm495, %v490, 0
    %v506 = vsel %vm495, %v491, 0
    %508 = vmatpush.bf16.msra.mxu0 0
    %509 = vmatpush.bf16.msra.mxu0 0
    %510 = vmatpush.bf16.msra.mxu0 0
    %511 = vmatpush.bf16.msra.mxu0 0
    %512 = vmatpush.bf16.msra.mxu0 0
    %513 = vmatpush.bf16.msra.mxu0 0
    %514 = vmatpush.bf16.msra.mxu0 0
    %515 = vmatpush.bf16.msra.mxu0 %v497
    %516 = vmatmul.bf16.gmra.mxu0 %v493
    %v517 = vpop.f32.mrf.mxu0
    %v518 = vadd.f32 0.0, %v517
    %v519 = vpop.f32.mrf.mxu0
    %520 = vdwg.mxu0
    %521 = vmatpush.bf16.msra.mxu0 0
    %522 = vmatpush.bf16.msra.mxu0 0
    %523 = vmatpush.bf16.msra.mxu0 0
    %524 = vmatpush.bf16.msra.mxu0 0
    %525 = vmatpush.bf16.msra.mxu0 0
    %526 = vmatpush.bf16.msra.mxu0 0
    %527 = vmatpush.bf16.msra.mxu0 0
    %528 = vmatpush.bf16.msra.mxu0 %v500
    %529 = vmatmul.bf16.gmra.mxu0 %v493
    %v530 = vpop.f32.mrf.mxu0
    %v531 = vadd.f32 0.0, %v530
    %v532 = vpop.f32.mrf.mxu0
    %533 = vdwg.mxu0
    %534 = vmatpush.bf16.msra.mxu0 0
    %535 = vmatpush.bf16.msra.mxu0 0
    %536 = vmatpush.bf16.msra.mxu0 0
    %537 = vmatpush.bf16.msra.mxu0 0
    %538 = vmatpush.bf16.msra.mxu0 0
    %539 = vmatpush.bf16.msra.mxu0 0
    %540 = vmatpush.bf16.msra.mxu0 0
    %541 = vmatpush.bf16.msra.mxu0 %v503
    %542 = vmatmul.bf16.gmra.mxu0 %v493
    %v543 = vpop.f32.mrf.mxu0
    %v544 = vadd.f32 0.0, %v543
    %v545 = vpop.f32.mrf.mxu0
    %546 = vdwg.mxu0
    %547 = vmatpush.bf16.msra.mxu0 0
    %548 = vmatpush.bf16.msra.mxu0 0
    %549 = vmatpush.bf16.msra.mxu0 0
    %550 = vmatpush.bf16.msra.mxu0 0
    %551 = vmatpush.bf16.msra.mxu0 0
    %552 = vmatpush.bf16.msra.mxu0 0
    %553 = vmatpush.bf16.msra.mxu0 0
    %554 = vmatpush.bf16.msra.mxu0 %v506
    %555 = vmatmul.bf16.gmra.mxu0 %v493
    %v556 = vpop.f32.mrf.mxu0
    %v557 = vadd.f32 0.0, %v556
    %v558 = vpop.f32.mrf.mxu0
    %559 = vdwg.mxu0
    %v562 = vunpack.c.l.b16 %v349
    %v563 = vunpack.c.h.b16 %v349
    %v564 = vunpack.c.l.b16 %v350
    %v565 = vunpack.c.h.b16 %v350
    %v566 = vpack.c.b16 %v562, %v562
    %v567 = vpack.c.b16 %v563, %v563
    %v568 = vpack.c.b16 %v564, %v564
    %v569 = vpack.c.b16 %v565, %v565
    %v702 = vunpack.c.l.b16 %v351
    %v703 = vunpack.c.h.b16 %v351
    %v704 = vunpack.c.l.b16 %v352
    %v705 = vunpack.c.h.b16 %v352
    %v706 = vunpack.c.l.b16 %v353
    %v707 = vunpack.c.h.b16 %v353
    %v708 = vunpack.c.l.b16 %v354
    %v709 = vunpack.c.h.b16 %v354
    %v710 = vunpack.c.l.b16 %v355
    %v711 = vunpack.c.h.b16 %v355
    %v712 = vunpack.c.l.b16 %v356
    %v713 = vunpack.c.h.b16 %v356
    %v714 = vunpack.c.l.b16 %v357
    %v715 = vunpack.c.h.b16 %v357
    %v716 = vunpack.c.l.b16 %v358
    %v717 = vunpack.c.h.b16 %v358
    %v718 = vunpack.c.l.b16 %v359
    %v719 = vunpack.c.h.b16 %v359
    %v720 = vunpack.c.l.b16 %v360
    %v721 = vunpack.c.h.b16 %v360
    %v722 = vunpack.c.l.b16 %v361
    %v723 = vunpack.c.h.b16 %v361
    %v724 = vunpack.c.l.b16 %v362
    %v725 = vunpack.c.h.b16 %v362
    %v726 = vunpack.c.l.b16 %v363
    %v727 = vunpack.c.h.b16 %v363
    %v728 = vunpack.c.l.b16 %v364
    %v729 = vunpack.c.h.b16 %v364
    %v730 = vunpack.c.l.b16 %v365
    %v731 = vunpack.c.h.b16 %v365
    %v732 = vunpack.c.l.b16 %v366
    %v733 = vunpack.c.h.b16 %v366
    %v734 = vunpack.c.l.b16 %v367
    %v735 = vunpack.c.h.b16 %v367
    %v736 = vunpack.c.l.b16 %v368
    %v737 = vunpack.c.h.b16 %v368
    %v738 = vunpack.c.l.b16 %v369
    %v739 = vunpack.c.h.b16 %v369
    %v740 = vunpack.c.l.b16 %v370
    %v741 = vunpack.c.h.b16 %v370
    %v742 = vunpack.c.l.b16 %v371
    %v743 = vunpack.c.h.b16 %v371
    %v744 = vunpack.c.l.b16 %v372
    %v745 = vunpack.c.h.b16 %v372
    %v746 = vunpack.c.l.b16 %v373
    %v747 = vunpack.c.h.b16 %v373
    %v748 = vunpack.c.l.b16 %v374
    %v749 = vunpack.c.h.b16 %v374
    %v750 = vunpack.c.l.b16 %v375
    %v751 = vunpack.c.h.b16 %v375
    %v752 = vunpack.c.l.b16 %v376
    %v753 = vunpack.c.h.b16 %v376
    %v754 = vunpack.c.l.b16 %v377
    %v755 = vunpack.c.h.b16 %v377
    %v756 = vunpack.c.l.b16 %v378
    %v757 = vunpack.c.h.b16 %v378
    %v758 = vunpack.c.l.b16 %v379
    %v759 = vunpack.c.h.b16 %v379
    %v760 = vunpack.c.l.b16 %v380
    %v761 = vunpack.c.h.b16 %v380
    %v762 = vunpack.c.l.b16 %v381
    %v763 = vunpack.c.h.b16 %v381
    %v764 = vunpack.c.l.b16 %v382
    %v765 = vunpack.c.h.b16 %v382
    %v766 = vunpack.c.l.b16 %v383
    %v767 = vunpack.c.h.b16 %v383
    %v768 = vunpack.c.l.b16 %v384
    %v769 = vunpack.c.h.b16 %v384
    %v770 = vunpack.c.l.b16 %v385
    %v771 = vunpack.c.h.b16 %v385
    %v772 = vunpack.c.l.b16 %v386
    %v773 = vunpack.c.h.b16 %v386
    %v774 = vunpack.c.l.b16 %v387
    %v775 = vunpack.c.h.b16 %v387
    %v776 = vunpack.c.l.b16 %v388
    %v777 = vunpack.c.h.b16 %v388
    %v778 = vunpack.c.l.b16 %v389
    %v779 = vunpack.c.h.b16 %v389
    %v780 = vunpack.c.l.b16 %v390
    %v781 = vunpack.c.h.b16 %v390
    %v782 = vunpack.c.l.b16 %v391
    %v783 = vunpack.c.h.b16 %v391
    %v784 = vunpack.c.l.b16 %v392
    %v785 = vunpack.c.h.b16 %v392
    %v786 = vunpack.c.l.b16 %v393
    %v787 = vunpack.c.h.b16 %v393
    %v788 = vunpack.c.l.b16 %v394
    %v789 = vunpack.c.h.b16 %v394
    %v790 = vunpack.c.l.b16 %v395
    %v791 = vunpack.c.h.b16 %v395
    %v792 = vunpack.c.l.b16 %v396
    %v793 = vunpack.c.h.b16 %v396
    %v794 = vunpack.c.l.b16 %v397
    %v795 = vunpack.c.h.b16 %v397
    %v796 = vunpack.c.l.b16 %v398
    %v797 = vunpack.c.h.b16 %v398
    %v798 = vunpack.c.l.b16 %v399
    %v799 = vunpack.c.h.b16 %v399
    %v800 = vunpack.c.l.b16 %v400
    %v801 = vunpack.c.h.b16 %v400
    %v802 = vunpack.c.l.b16 %v401
    %v803 = vunpack.c.h.b16 %v401
    %v804 = vunpack.c.l.b16 %v402
    %v805 = vunpack.c.h.b16 %v402
    %v806 = vunpack.c.l.b16 %v403
    %v807 = vunpack.c.h.b16 %v403
    %v808 = vunpack.c.l.b16 %v404
    %v809 = vunpack.c.h.b16 %v404
    %v810 = vunpack.c.l.b16 %v405
    %v811 = vunpack.c.h.b16 %v405
    %v812 = vunpack.c.l.b16 %v406
    %v813 = vunpack.c.h.b16 %v406
    %v814 = vunpack.c.l.b16 %v407
    %v815 = vunpack.c.h.b16 %v407
    %v816 = vunpack.c.l.b16 %v408
    %v817 = vunpack.c.h.b16 %v408
    %v818 = vunpack.c.l.b16 %v409
    %v819 = vunpack.c.h.b16 %v409
    %v820 = vunpack.c.l.b16 %v410
    %v821 = vunpack.c.h.b16 %v410
    %v822 = vunpack.c.l.b16 %v411
    %v823 = vunpack.c.h.b16 %v411
    %v824 = vunpack.c.l.b16 %v412
    %v825 = vunpack.c.h.b16 %v412
    %v826 = vunpack.c.l.b16 %v413
    %v827 = vunpack.c.h.b16 %v413
    %v828 = vunpack.c.l.b16 %v414
    %v829 = vunpack.c.h.b16 %v414
    %v830 = vunpack.c.l.b16 %v415
    %v831 = vunpack.c.h.b16 %v415
    %v832 = vunpack.c.l.b16 %v416
    %v833 = vunpack.c.h.b16 %v416
    %v834 = vunpack.c.l.b16 %v417
    %v835 = vunpack.c.h.b16 %v417
    %v836 = vunpack.c.l.b16 %v418
    %v837 = vunpack.c.h.b16 %v418
    %v838 = vunpack.c.l.b16 %v419
    %v839 = vunpack.c.h.b16 %v419
    %v840 = vunpack.c.l.b16 %v420
    %v841 = vunpack.c.h.b16 %v420
    %v842 = vunpack.c.l.b16 %v421
    %v843 = vunpack.c.h.b16 %v421
    %v844 = vunpack.c.l.b16 %v422
    %v845 = vunpack.c.h.b16 %v422
    %v846 = vunpack.c.l.b16 %v423
    %v847 = vunpack.c.h.b16 %v423
    %v848 = vunpack.c.l.b16 %v424
    %v849 = vunpack.c.h.b16 %v424
    %v850 = vunpack.c.l.b16 %v425
    %v851 = vunpack.c.h.b16 %v425
    %v852 = vunpack.c.l.b16 %v426
    %v853 = vunpack.c.h.b16 %v426
    %v854 = vunpack.c.l.b16 %v427
    %v855 = vunpack.c.h.b16 %v427
    %v856 = vunpack.c.l.b16 %v428
    %v857 = vunpack.c.h.b16 %v428
    %v858 = vunpack.c.l.b16 %v429
    %v859 = vunpack.c.h.b16 %v429
    %v860 = vunpack.c.l.b16 %v430
    %v861 = vunpack.c.h.b16 %v430
    %v862 = vunpack.c.l.b16 %v431
    %v863 = vunpack.c.h.b16 %v431
    %v864 = vunpack.c.l.b16 %v432
    %v865 = vunpack.c.h.b16 %v432
    %v866 = vunpack.c.l.b16 %v433
    %v867 = vunpack.c.h.b16 %v433
    %v868 = vunpack.c.l.b16 %v434
    %v869 = vunpack.c.h.b16 %v434
    %v870 = vunpack.c.l.b16 %v435
    %v871 = vunpack.c.h.b16 %v435
    %v872 = vunpack.c.l.b16 %v436
    %v873 = vunpack.c.h.b16 %v436
    %v874 = vunpack.c.l.b16 %v437
    %v875 = vunpack.c.h.b16 %v437
    %v876 = vunpack.c.l.b16 %v438
    %v877 = vunpack.c.h.b16 %v438
    %v878 = vunpack.c.l.b16 %v439
    %v879 = vunpack.c.h.b16 %v439
    %v880 = vunpack.c.l.b16 %v440
    %v881 = vunpack.c.h.b16 %v440
    %v882 = vunpack.c.l.b16 %v441
    %v883 = vunpack.c.h.b16 %v441
    %v884 = vunpack.c.l.b16 %v442
    %v885 = vunpack.c.h.b16 %v442
    %v886 = vunpack.c.l.b16 %v443
    %v887 = vunpack.c.h.b16 %v443
    %v888 = vunpack.c.l.b16 %v444
    %v889 = vunpack.c.h.b16 %v444
    %v890 = vunpack.c.l.b16 %v445
    %v891 = vunpack.c.h.b16 %v445
    %v892 = vunpack.c.l.b16 %v446
    %v893 = vunpack.c.h.b16 %v446
    %v894 = vunpack.c.l.b16 %v447
    %v895 = vunpack.c.h.b16 %v447
    %v896 = vunpack.c.l.b16 %v448
    %v897 = vunpack.c.h.b16 %v448
    %v898 = vunpack.c.l.b16 %v449
    %v899 = vunpack.c.h.b16 %v449
    %v900 = vunpack.c.l.b16 %v450
    %v901 = vunpack.c.h.b16 %v450
    %v902 = vunpack.c.l.b16 %v451
    %v903 = vunpack.c.h.b16 %v451
    %v904 = vunpack.c.l.b16 %v452
    %v905 = vunpack.c.h.b16 %v452
    %v906 = vunpack.c.l.b16 %v453
    %v907 = vunpack.c.h.b16 %v453
    %v908 = vunpack.c.l.b16 %v454
    %v909 = vunpack.c.h.b16 %v454
    %v910 = vunpack.c.l.b16 %v455
    %v911 = vunpack.c.h.b16 %v455
    %v912 = vunpack.c.l.b16 %v456
    %v913 = vunpack.c.h.b16 %v456
    %v914 = vunpack.c.l.b16 %v457
    %v915 = vunpack.c.h.b16 %v457
    %v916 = vunpack.c.l.b16 %v458
    %v917 = vunpack.c.h.b16 %v458
    %v918 = vunpack.c.l.b16 %v459
    %v919 = vunpack.c.h.b16 %v459
    %v920 = vunpack.c.l.b16 %v460
    %v921 = vunpack.c.h.b16 %v460
    %v922 = vunpack.c.l.b16 %v461
    %v923 = vunpack.c.h.b16 %v461
    %v924 = vunpack.c.l.b16 %v462
    %v925 = vunpack.c.h.b16 %v462
    %v926 = vunpack.c.l.b16 %v463
    %v927 = vunpack.c.h.b16 %v463
    %v928 = vunpack.c.l.b16 %v464
    %v929 = vunpack.c.h.b16 %v464
    %v930 = vunpack.c.l.b16 %v465
    %v931 = vunpack.c.h.b16 %v465
    %v932 = vunpack.c.l.b16 %v466
    %v933 = vunpack.c.h.b16 %v466
    %v934 = vunpack.c.l.b16 %v467
    %v935 = vunpack.c.h.b16 %v467
    %v936 = vunpack.c.l.b16 %v468
    %v937 = vunpack.c.h.b16 %v468
    %v938 = vunpack.c.l.b16 %v469
    %v939 = vunpack.c.h.b16 %v469
    %v940 = vunpack.c.l.b16 %v470
    %v941 = vunpack.c.h.b16 %v470
    %v942 = vunpack.c.l.b16 %v471
    %v943 = vunpack.c.h.b16 %v471
    %v944 = vunpack.c.l.b16 %v472
    %v945 = vunpack.c.h.b16 %v472
    %v946 = vunpack.c.l.b16 %v473
    %v947 = vunpack.c.h.b16 %v473
    %v948 = vunpack.c.l.b16 %v474
    %v949 = vunpack.c.h.b16 %v474
    %v950 = vunpack.c.l.b16 %v475
    %v951 = vunpack.c.h.b16 %v475
    %v952 = vunpack.c.l.b16 %v476
    %v953 = vunpack.c.h.b16 %v476
    %v954 = vunpack.c.l.b16 %v477
    %v955 = vunpack.c.h.b16 %v477
    %v956 = vunpack.c.l.b16 %v478
    %v957 = vunpack.c.h.b16 %v478
    %v958 = vpack.c.b16 %v706, %v702
    %v959 = vpack.c.b16 %v707, %v703
    %v960 = vpack.c.b16 %v708, %v704
    %v961 = vpack.c.b16 %v709, %v705
    %v962 = vpack.c.b16 %v714, %v710
    %v963 = vpack.c.b16 %v715, %v711
    %v964 = vpack.c.b16 %v716, %v712
    %v965 = vpack.c.b16 %v717, %v713
    %v966 = vpack.c.b16 %v722, %v718
    %v967 = vpack.c.b16 %v723, %v719
    %v968 = vpack.c.b16 %v724, %v720
    %v969 = vpack.c.b16 %v725, %v721
    %v970 = vpack.c.b16 %v730, %v726
    %v971 = vpack.c.b16 %v731, %v727
    %v972 = vpack.c.b16 %v732, %v728
    %v973 = vpack.c.b16 %v733, %v729
    %v974 = vpack.c.b16 %v738, %v734
    %v975 = vpack.c.b16 %v739, %v735
    %v976 = vpack.c.b16 %v740, %v736
    %v977 = vpack.c.b16 %v741, %v737
    %v978 = vpack.c.b16 %v746, %v742
    %v979 = vpack.c.b16 %v747, %v743
    %v980 = vpack.c.b16 %v748, %v744
    %v981 = vpack.c.b16 %v749, %v745
    %v982 = vpack.c.b16 %v754, %v750
    %v983 = vpack.c.b16 %v755, %v751
    %v984 = vpack.c.b16 %v756, %v752
    %v985 = vpack.c.b16 %v757, %v753
    %v986 = vpack.c.b16 %v762, %v758
    %v987 = vpack.c.b16 %v763, %v759
    %v988 = vpack.c.b16 %v764, %v760
    %v989 = vpack.c.b16 %v765, %v761
    %v990 = vpack.c.b16 %v770, %v766
    %v991 = vpack.c.b16 %v771, %v767
    %v992 = vpack.c.b16 %v772, %v768
    %v993 = vpack.c.b16 %v773, %v769
    %v994 = vpack.c.b16 %v778, %v774
    %v995 = vpack.c.b16 %v779, %v775
    %v996 = vpack.c.b16 %v780, %v776
    %v997 = vpack.c.b16 %v781, %v777
    %v998 = vpack.c.b16 %v786, %v782
    %v999 = vpack.c.b16 %v787, %v783
    %v1000 = vpack.c.b16 %v788, %v784
    %v1001 = vpack.c.b16 %v789, %v785
    %v1002 = vpack.c.b16 %v794, %v790
    %v1003 = vpack.c.b16 %v795, %v791
    %v1004 = vpack.c.b16 %v796, %v792
    %v1005 = vpack.c.b16 %v797, %v793
    %v1006 = vpack.c.b16 %v802, %v798
    %v1007 = vpack.c.b16 %v803, %v799
    %v1008 = vpack.c.b16 %v804, %v800
    %v1009 = vpack.c.b16 %v805, %v801
    %v1010 = vpack.c.b16 %v810, %v806
    %v1011 = vpack.c.b16 %v811, %v807
    %v1012 = vpack.c.b16 %v812, %v808
    %v1013 = vpack.c.b16 %v813, %v809
    %v1014 = vpack.c.b16 %v818, %v814
    %v1015 = vpack.c.b16 %v819, %v815
    %v1016 = vpack.c.b16 %v820, %v816
    %v1017 = vpack.c.b16 %v821, %v817
    %v1018 = vpack.c.b16 %v826, %v822
    %v1019 = vpack.c.b16 %v827, %v823
    %v1020 = vpack.c.b16 %v828, %v824
    %v1021 = vpack.c.b16 %v829, %v825
    %v1022 = vpack.c.b16 %v834, %v830
    %v1023 = vpack.c.b16 %v835, %v831
    %v1024 = vpack.c.b16 %v836, %v832
    %v1025 = vpack.c.b16 %v837, %v833
    %v1026 = vpack.c.b16 %v842, %v838
    %v1027 = vpack.c.b16 %v843, %v839
    %v1028 = vpack.c.b16 %v844, %v840
    %v1029 = vpack.c.b16 %v845, %v841
    %v1030 = vpack.c.b16 %v850, %v846
    %v1031 = vpack.c.b16 %v851, %v847
    %v1032 = vpack.c.b16 %v852, %v848
    %v1033 = vpack.c.b16 %v853, %v849
    %v1034 = vpack.c.b16 %v858, %v854
    %v1035 = vpack.c.b16 %v859, %v855
    %v1036 = vpack.c.b16 %v860, %v856
    %v1037 = vpack.c.b16 %v861, %v857
    %v1038 = vpack.c.b16 %v866, %v862
    %v1039 = vpack.c.b16 %v867, %v863
    %v1040 = vpack.c.b16 %v868, %v864
    %v1041 = vpack.c.b16 %v869, %v865
    %v1042 = vpack.c.b16 %v874, %v870
    %v1043 = vpack.c.b16 %v875, %v871
    %v1044 = vpack.c.b16 %v876, %v872
    %v1045 = vpack.c.b16 %v877, %v873
    %v1046 = vpack.c.b16 %v882, %v878
    %v1047 = vpack.c.b16 %v883, %v879
    %v1048 = vpack.c.b16 %v884, %v880
    %v1049 = vpack.c.b16 %v885, %v881
    %v1050 = vpack.c.b16 %v890, %v886
    %v1051 = vpack.c.b16 %v891, %v887
    %v1052 = vpack.c.b16 %v892, %v888
    %v1053 = vpack.c.b16 %v893, %v889
    %v1054 = vpack.c.b16 %v898, %v894
    %v1055 = vpack.c.b16 %v899, %v895
    %v1056 = vpack.c.b16 %v900, %v896
    %v1057 = vpack.c.b16 %v901, %v897
    %v1058 = vpack.c.b16 %v906, %v902
    %v1059 = vpack.c.b16 %v907, %v903
    %v1060 = vpack.c.b16 %v908, %v904
    %v1061 = vpack.c.b16 %v909, %v905
    %v1062 = vpack.c.b16 %v914, %v910
    %v1063 = vpack.c.b16 %v915, %v911
    %v1064 = vpack.c.b16 %v916, %v912
    %v1065 = vpack.c.b16 %v917, %v913
    %v1066 = vpack.c.b16 %v922, %v918
    %v1067 = vpack.c.b16 %v923, %v919
    %v1068 = vpack.c.b16 %v924, %v920
    %v1069 = vpack.c.b16 %v925, %v921
    %v1070 = vpack.c.b16 %v930, %v926
    %v1071 = vpack.c.b16 %v931, %v927
    %v1072 = vpack.c.b16 %v932, %v928
    %v1073 = vpack.c.b16 %v933, %v929
    %v1074 = vpack.c.b16 %v938, %v934
    %v1075 = vpack.c.b16 %v939, %v935
    %v1076 = vpack.c.b16 %v940, %v936
    %v1077 = vpack.c.b16 %v941, %v937
    %v1078 = vpack.c.b16 %v946, %v942
    %v1079 = vpack.c.b16 %v947, %v943
    %v1080 = vpack.c.b16 %v948, %v944
    %v1081 = vpack.c.b16 %v949, %v945
    %v1082 = vpack.c.b16 %v954, %v950
    %v1083 = vpack.c.b16 %v955, %v951
    %v1084 = vpack.c.b16 %v956, %v952
    %v1085 = vpack.c.b16 %v957, %v953
    %1214 = vmatpush.bf16.msra.mxu0 %v986
    %1215 = vmatpush.bf16.msra.mxu0 %v982
    %1216 = vmatpush.bf16.msra.mxu0 %v978
    %1217 = vmatpush.bf16.msra.mxu0 %v974
    %1218 = vmatpush.bf16.msra.mxu0 %v970
    %1219 = vmatpush.bf16.msra.mxu0 %v966
    %1220 = vmatpush.bf16.msra.mxu0 %v962
    %1221 = vmatpush.bf16.msra.mxu0 %v958
    %1222 = vmatmul.bf16.gmra.mxu0 %v566
    %v1223 = vpop.f32.mrf.mxu0
    %v1224 = vadd.f32 %v518, %v1223
    %v1225 = vpop.f32.mrf.mxu0
    %1226 = vdwg.mxu0
    %1227 = vmatpush.bf16.msra.mxu0 %v1018
    %1228 = vmatpush.bf16.msra.mxu0 %v1014
    %1229 = vmatpush.bf16.msra.mxu0 %v1010
    %1230 = vmatpush.bf16.msra.mxu0 %v1006
    %1231 = vmatpush.bf16.msra.mxu0 %v1002
    %1232 = vmatpush.bf16.msra.mxu0 %v998
    %1233 = vmatpush.bf16.msra.mxu0 %v994
    %1234 = vmatpush.bf16.msra.mxu0 %v990
    %1235 = vmatmul.bf16.gmra.mxu0 %v567
    %v1236 = vpop.f32.mrf.mxu0
    %v1237 = vadd.f32 %v1224, %v1236
    %v1238 = vpop.f32.mrf.mxu0
    %1239 = vdwg.mxu0
    %1240 = vmatpush.bf16.msra.mxu0 %v1050
    %1241 = vmatpush.bf16.msra.mxu0 %v1046
    %1242 = vmatpush.bf16.msra.mxu0 %v1042
    %1243 = vmatpush.bf16.msra.mxu0 %v1038
    %1244 = vmatpush.bf16.msra.mxu0 %v1034
    %1245 = vmatpush.bf16.msra.mxu0 %v1030
    %1246 = vmatpush.bf16.msra.mxu0 %v1026
    %1247 = vmatpush.bf16.msra.mxu0 %v1022
    %1248 = vmatmul.bf16.gmra.mxu0 %v568
    %v1249 = vpop.f32.mrf.mxu0
    %v1250 = vadd.f32 %v1237, %v1249
    %v1251 = vpop.f32.mrf.mxu0
    %1252 = vdwg.mxu0
    %1253 = vmatpush.bf16.msra.mxu0 %v1082
    %1254 = vmatpush.bf16.msra.mxu0 %v1078
    %1255 = vmatpush.bf16.msra.mxu0 %v1074
    %1256 = vmatpush.bf16.msra.mxu0 %v1070
    %1257 = vmatpush.bf16.msra.mxu0 %v1066
    %1258 = vmatpush.bf16.msra.mxu0 %v1062
    %1259 = vmatpush.bf16.msra.mxu0 %v1058
    %1260 = vmatpush.bf16.msra.mxu0 %v1054
    %1261 = vmatmul.bf16.gmra.mxu0 %v569
    %v1262 = vpop.f32.mrf.mxu0
    %v1263 = vadd.f32 %v1250, %v1262
    %v1264 = vpop.f32.mrf.mxu0
    %1265 = vdwg.mxu0
    %1266 = vmatpush.bf16.msra.mxu0 %v987
    %1267 = vmatpush.bf16.msra.mxu0 %v983
    %1268 = vmatpush.bf16.msra.mxu0 %v979
    %1269 = vmatpush.bf16.msra.mxu0 %v975
    %1270 = vmatpush.bf16.msra.mxu0 %v971
    %1271 = vmatpush.bf16.msra.mxu0 %v967
    %1272 = vmatpush.bf16.msra.mxu0 %v963
    %1273 = vmatpush.bf16.msra.mxu0 %v959
    %1274 = vmatmul.bf16.gmra.mxu0 %v566
    %v1275 = vpop.f32.mrf.mxu0
    %v1276 = vadd.f32 %v531, %v1275
    %v1277 = vpop.f32.mrf.mxu0
    %1278 = vdwg.mxu0
    %1279 = vmatpush.bf16.msra.mxu0 %v1019
    %1280 = vmatpush.bf16.msra.mxu0 %v1015
    %1281 = vmatpush.bf16.msra.mxu0 %v1011
    %1282 = vmatpush.bf16.msra.mxu0 %v1007
    %1283 = vmatpush.bf16.msra.mxu0 %v1003
    %1284 = vmatpush.bf16.msra.mxu0 %v999
    %1285 = vmatpush.bf16.msra.mxu0 %v995
    %1286 = vmatpush.bf16.msra.mxu0 %v991
    %1287 = vmatmul.bf16.gmra.mxu0 %v567
    %v1288 = vpop.f32.mrf.mxu0
    %v1289 = vadd.f32 %v1276, %v1288
    %v1290 = vpop.f32.mrf.mxu0
    %1291 = vdwg.mxu0
    %1292 = vmatpush.bf16.msra.mxu0 %v1051
    %1293 = vmatpush.bf16.msra.mxu0 %v1047
    %1294 = vmatpush.bf16.msra.mxu0 %v1043
    %1295 = vmatpush.bf16.msra.mxu0 %v1039
    %1296 = vmatpush.bf16.msra.mxu0 %v1035
    %1297 = vmatpush.bf16.msra.mxu0 %v1031
    %1298 = vmatpush.bf16.msra.mxu0 %v1027
    %1299 = vmatpush.bf16.msra.mxu0 %v1023
    %1300 = vmatmul.bf16.gmra.mxu0 %v568
    %v1301 = vpop.f32.mrf.mxu0
    %v1302 = vadd.f32 %v1289, %v1301
    %v1303 = vpop.f32.mrf.mxu0
    %1304 = vdwg.mxu0
    %1305 = vmatpush.bf16.msra.mxu0 %v1083
    %1306 = vmatpush.bf16.msra.mxu0 %v1079
    %1307 = vmatpush.bf16.msra.mxu0 %v1075
    %1308 = vmatpush.bf16.msra.mxu0 %v1071
    %1309 = vmatpush.bf16.msra.mxu0 %v1067
    %1310 = vmatpush.bf16.msra.mxu0 %v1063
    %1311 = vmatpush.bf16.msra.mxu0 %v1059
    %1312 = vmatpush.bf16.msra.mxu0 %v1055
    %1313 = vmatmul.bf16.gmra.mxu0 %v569
    %v1314 = vpop.f32.mrf.mxu0
    %v1315 = vadd.f32 %v1302, %v1314
    %v1316 = vpop.f32.mrf.mxu0
    %1317 = vdwg.mxu0
    %1318 = vmatpush.bf16.msra.mxu0 %v988
    %1319 = vmatpush.bf16.msra.mxu0 %v984
    %1320 = vmatpush.bf16.msra.mxu0 %v980
    %1321 = vmatpush.bf16.msra.mxu0 %v976
    %1322 = vmatpush.bf16.msra.mxu0 %v972
    %1323 = vmatpush.bf16.msra.mxu0 %v968
    %1324 = vmatpush.bf16.msra.mxu0 %v964
    %1325 = vmatpush.bf16.msra.mxu0 %v960
    %1326 = vmatmul.bf16.gmra.mxu0 %v566
    %v1327 = vpop.f32.mrf.mxu0
    %v1328 = vadd.f32 %v544, %v1327
    %v1329 = vpop.f32.mrf.mxu0
    %1330 = vdwg.mxu0
    %1331 = vmatpush.bf16.msra.mxu0 %v1020
    %1332 = vmatpush.bf16.msra.mxu0 %v1016
    %1333 = vmatpush.bf16.msra.mxu0 %v1012
    %1334 = vmatpush.bf16.msra.mxu0 %v1008
    %1335 = vmatpush.bf16.msra.mxu0 %v1004
    %1336 = vmatpush.bf16.msra.mxu0 %v1000
    %1337 = vmatpush.bf16.msra.mxu0 %v996
    %1338 = vmatpush.bf16.msra.mxu0 %v992
    %1339 = vmatmul.bf16.gmra.mxu0 %v567
    %v1340 = vpop.f32.mrf.mxu0
    %v1341 = vadd.f32 %v1328, %v1340
    %v1342 = vpop.f32.mrf.mxu0
    %1343 = vdwg.mxu0
    %1344 = vmatpush.bf16.msra.mxu0 %v1052
    %1345 = vmatpush.bf16.msra.mxu0 %v1048
    %1346 = vmatpush.bf16.msra.mxu0 %v1044
    %1347 = vmatpush.bf16.msra.mxu0 %v1040
    %1348 = vmatpush.bf16.msra.mxu0 %v1036
    %1349 = vmatpush.bf16.msra.mxu0 %v1032
    %1350 = vmatpush.bf16.msra.mxu0 %v1028
    %1351 = vmatpush.bf16.msra.mxu0 %v1024
    %1352 = vmatmul.bf16.gmra.mxu0 %v568
    %v1353 = vpop.f32.mrf.mxu0
    %v1354 = vadd.f32 %v1341, %v1353
    %v1355 = vpop.f32.mrf.mxu0
    %1356 = vdwg.mxu0
    %1357 = vmatpush.bf16.msra.mxu0 %v1084
    %1358 = vmatpush.bf16.msra.mxu0 %v1080
    %1359 = vmatpush.bf16.msra.mxu0 %v1076
    %1360 = vmatpush.bf16.msra.mxu0 %v1072
    %1361 = vmatpush.bf16.msra.mxu0 %v1068
    %1362 = vmatpush.bf16.msra.mxu0 %v1064
    %1363 = vmatpush.bf16.msra.mxu0 %v1060
    %1364 = vmatpush.bf16.msra.mxu0 %v1056
    %1365 = vmatmul.bf16.gmra.mxu0 %v569
    %v1366 = vpop.f32.mrf.mxu0
    %v1367 = vadd.f32 %v1354, %v1366
    %v1368 = vpop.f32.mrf.mxu0
    %1369 = vdwg.mxu0
    %1370 = vmatpush.bf16.msra.mxu0 %v989
    %1371 = vmatpush.bf16.msra.mxu0 %v985
    %1372 = vmatpush.bf16.msra.mxu0 %v981
    %1373 = vmatpush.bf16.msra.mxu0 %v977
    %1374 = vmatpush.bf16.msra.mxu0 %v973
    %1375 = vmatpush.bf16.msra.mxu0 %v969
    %1376 = vmatpush.bf16.msra.mxu0 %v965
    %1377 = vmatpush.bf16.msra.mxu0 %v961
    %1378 = vmatmul.bf16.gmra.mxu0 %v566
    %v1379 = vpop.f32.mrf.mxu0
    %v1380 = vadd.f32 %v557, %v1379
    %v1381 = vpop.f32.mrf.mxu0
    %1382 = vdwg.mxu0
    %1383 = vmatpush.bf16.msra.mxu0 %v1021
    %1384 = vmatpush.bf16.msra.mxu0 %v1017
    %1385 = vmatpush.bf16.msra.mxu0 %v1013
    %1386 = vmatpush.bf16.msra.mxu0 %v1009
    %1387 = vmatpush.bf16.msra.mxu0 %v1005
    %1388 = vmatpush.bf16.msra.mxu0 %v1001
    %1389 = vmatpush.bf16.msra.mxu0 %v997
    %1390 = vmatpush.bf16.msra.mxu0 %v993
    %1391 = vmatmul.bf16.gmra.mxu0 %v567
    %v1392 = vpop.f32.mrf.mxu0
    %v1393 = vadd.f32 %v1380, %v1392
    %v1394 = vpop.f32.mrf.mxu0
    %1395 = vdwg.mxu0
    %1396 = vmatpush.bf16.msra.mxu0 %v1053
    %1397 = vmatpush.bf16.msra.mxu0 %v1049
    %1398 = vmatpush.bf16.msra.mxu0 %v1045
    %1399 = vmatpush.bf16.msra.mxu0 %v1041
    %1400 = vmatpush.bf16.msra.mxu0 %v1037
    %1401 = vmatpush.bf16.msra.mxu0 %v1033
    %1402 = vmatpush.bf16.msra.mxu0 %v1029
    %1403 = vmatpush.bf16.msra.mxu0 %v1025
    %1404 = vmatmul.bf16.gmra.mxu0 %v568
    %v1405 = vpop.f32.mrf.mxu0
    %v1406 = vadd.f32 %v1393, %v1405
    %v1407 = vpop.f32.mrf.mxu0
    %1408 = vdwg.mxu0
    %1409 = vmatpush.bf16.msra.mxu0 %v1085
    %1410 = vmatpush.bf16.msra.mxu0 %v1081
    %1411 = vmatpush.bf16.msra.mxu0 %v1077
    %1412 = vmatpush.bf16.msra.mxu0 %v1073
    %1413 = vmatpush.bf16.msra.mxu0 %v1069
    %1414 = vmatpush.bf16.msra.mxu0 %v1065
    %1415 = vmatpush.bf16.msra.mxu0 %v1061
    %1416 = vmatpush.bf16.msra.mxu0 %v1057
    %1417 = vmatmul.bf16.gmra.mxu0 %v569
    %v1418 = vpop.f32.mrf.mxu0
    %v1419 = vadd.f32 %v1406, %v1418
    %v1420 = vpop.f32.mrf.mxu0
    %1421 = vdwg.mxu0
    %v1422 = vld [vmem:[%s3] sm:$0xff]
    %v1423 = vld [vmem:[%s3 + $0x8] sm:$0xff]
    %v1424 = vld [vmem:[#allocation7] sm:$0xff]
    %v1425 = vld [vmem:[#allocation7 + $0x8] sm:$0xff]
    %v1426 = vld [vmem:[#allocation7 + $0x10] sm:$0xff]
    %v1427 = vld [vmem:[#allocation7 + $0x18] sm:$0xff]
    %v1428 = vld [vmem:[#allocation7 + $0x20] sm:$0xff]
    %v1429 = vld [vmem:[#allocation7 + $0x28] sm:$0xff]
    %v1430 = vld [vmem:[#allocation7 + $0x30] sm:$0xff]
    %v1431 = vld [vmem:[#allocation7 + $0x38] sm:$0xff]
    %v1432 = vld [vmem:[#allocation7 + $0x40] sm:$0xff]
    %v1433 = vld [vmem:[#allocation7 + $0x48] sm:$0xff]
    %v1434 = vld [vmem:[#allocation7 + $0x50] sm:$0xff]
    %v1435 = vld [vmem:[#allocation7 + $0x58] sm:$0xff]
    %v1436 = vld [vmem:[#allocation7 + $0x60] sm:$0xff]
    %v1437 = vld [vmem:[#allocation7 + $0x68] sm:$0xff]
    %v1438 = vld [vmem:[#allocation7 + $0x70] sm:$0xff]
    %v1439 = vld [vmem:[#allocation7 + $0x78] sm:$0xff]
    %v1440 = vld [vmem:[#allocation7 + $0x80] sm:$0xff]
    %v1441 = vld [vmem:[#allocation7 + $0x88] sm:$0xff]
    %v1442 = vld [vmem:[#allocation7 + $0x90] sm:$0xff]
    %v1443 = vld [vmem:[#allocation7 + $0x98] sm:$0xff]
    %v1444 = vld [vmem:[#allocation7 + $0xa0] sm:$0xff]
    %v1445 = vld [vmem:[#allocation7 + $0xa8] sm:$0xff]
    %v1446 = vld [vmem:[#allocation7 + $0xb0] sm:$0xff]
    %v1447 = vld [vmem:[#allocation7 + $0xb8] sm:$0xff]
    %v1448 = vld [vmem:[#allocation7 + $0xc0] sm:$0xff]
    %v1449 = vld [vmem:[#allocation7 + $0xc8] sm:$0xff]
    %v1450 = vld [vmem:[#allocation7 + $0xd0] sm:$0xff]
    %v1451 = vld [vmem:[#allocation7 + $0xd8] sm:$0xff]
    %v1452 = vld [vmem:[#allocation7 + $0xe0] sm:$0xff]
    %v1453 = vld [vmem:[#allocation7 + $0xe8] sm:$0xff]
    %v1454 = vld [vmem:[#allocation7 + $0xf0] sm:$0xff]
    %v1455 = vld [vmem:[#allocation7 + $0xf8] sm:$0xff]
    %v1456 = vld [vmem:[#allocation7 + $0x100] sm:$0xff]
    %v1457 = vld [vmem:[#allocation7 + $0x108] sm:$0xff]
    %v1458 = vld [vmem:[#allocation7 + $0x110] sm:$0xff]
    %v1459 = vld [vmem:[#allocation7 + $0x118] sm:$0xff]
    %v1460 = vld [vmem:[#allocation7 + $0x120] sm:$0xff]
    %v1461 = vld [vmem:[#allocation7 + $0x128] sm:$0xff]
    %v1462 = vld [vmem:[#allocation7 + $0x130] sm:$0xff]
    %v1463 = vld [vmem:[#allocation7 + $0x138] sm:$0xff]
    %v1464 = vld [vmem:[#allocation7 + $0x140] sm:$0xff]
    %v1465 = vld [vmem:[#allocation7 + $0x148] sm:$0xff]
    %v1466 = vld [vmem:[#allocation7 + $0x150] sm:$0xff]
    %v1467 = vld [vmem:[#allocation7 + $0x158] sm:$0xff]
    %v1468 = vld [vmem:[#allocation7 + $0x160] sm:$0xff]
    %v1469 = vld [vmem:[#allocation7 + $0x168] sm:$0xff]
    %v1470 = vld [vmem:[#allocation7 + $0x170] sm:$0xff]
    %v1471 = vld [vmem:[#allocation7 + $0x178] sm:$0xff]
    %v1472 = vld [vmem:[#allocation7 + $0x180] sm:$0xff]
    %v1473 = vld [vmem:[#allocation7 + $0x188] sm:$0xff]
    %v1474 = vld [vmem:[#allocation7 + $0x190] sm:$0xff]
    %v1475 = vld [vmem:[#allocation7 + $0x198] sm:$0xff]
    %v1476 = vld [vmem:[#allocation7 + $0x1a0] sm:$0xff]
    %v1477 = vld [vmem:[#allocation7 + $0x1a8] sm:$0xff]
    %v1478 = vld [vmem:[#allocation7 + $0x1b0] sm:$0xff]
    %v1479 = vld [vmem:[#allocation7 + $0x1b8] sm:$0xff]
    %v1480 = vld [vmem:[#allocation7 + $0x1c0] sm:$0xff]
    %v1481 = vld [vmem:[#allocation7 + $0x1c8] sm:$0xff]
    %v1482 = vld [vmem:[#allocation7 + $0x1d0] sm:$0xff]
    %v1483 = vld [vmem:[#allocation7 + $0x1d8] sm:$0xff]
    %v1484 = vld [vmem:[#allocation7 + $0x1e0] sm:$0xff]
    %v1485 = vld [vmem:[#allocation7 + $0x1e8] sm:$0xff]
    %v1486 = vld [vmem:[#allocation7 + $0x1f0] sm:$0xff]
    %v1487 = vld [vmem:[#allocation7 + $0x1f8] sm:$0xff]
    %v1488 = vld [vmem:[#allocation7 + $0x200] sm:$0xff]
    %v1489 = vld [vmem:[#allocation7 + $0x208] sm:$0xff]
    %v1490 = vld [vmem:[#allocation7 + $0x210] sm:$0xff]
    %v1491 = vld [vmem:[#allocation7 + $0x218] sm:$0xff]
    %v1492 = vld [vmem:[#allocation7 + $0x220] sm:$0xff]
    %v1493 = vld [vmem:[#allocation7 + $0x228] sm:$0xff]
    %v1494 = vld [vmem:[#allocation7 + $0x230] sm:$0xff]
    %v1495 = vld [vmem:[#allocation7 + $0x238] sm:$0xff]
    %v1496 = vld [vmem:[#allocation7 + $0x240] sm:$0xff]
    %v1497 = vld [vmem:[#allocation7 + $0x248] sm:$0xff]
    %v1498 = vld [vmem:[#allocation7 + $0x250] sm:$0xff]
    %v1499 = vld [vmem:[#allocation7 + $0x258] sm:$0xff]
    %v1500 = vld [vmem:[#allocation7 + $0x260] sm:$0xff]
    %v1501 = vld [vmem:[#allocation7 + $0x268] sm:$0xff]
    %v1502 = vld [vmem:[#allocation7 + $0x270] sm:$0xff]
    %v1503 = vld [vmem:[#allocation7 + $0x278] sm:$0xff]
    %v1504 = vld [vmem:[#allocation7 + $0x280] sm:$0xff]
    %v1505 = vld [vmem:[#allocation7 + $0x288] sm:$0xff]
    %v1506 = vld [vmem:[#allocation7 + $0x290] sm:$0xff]
    %v1507 = vld [vmem:[#allocation7 + $0x298] sm:$0xff]
    %v1508 = vld [vmem:[#allocation7 + $0x2a0] sm:$0xff]
    %v1509 = vld [vmem:[#allocation7 + $0x2a8] sm:$0xff]
    %v1510 = vld [vmem:[#allocation7 + $0x2b0] sm:$0xff]
    %v1511 = vld [vmem:[#allocation7 + $0x2b8] sm:$0xff]
    %v1512 = vld [vmem:[#allocation7 + $0x2c0] sm:$0xff]
    %v1513 = vld [vmem:[#allocation7 + $0x2c8] sm:$0xff]
    %v1514 = vld [vmem:[#allocation7 + $0x2d0] sm:$0xff]
    %v1515 = vld [vmem:[#allocation7 + $0x2d8] sm:$0xff]
    %v1516 = vld [vmem:[#allocation7 + $0x2e0] sm:$0xff]
    %v1517 = vld [vmem:[#allocation7 + $0x2e8] sm:$0xff]
    %v1518 = vld [vmem:[#allocation7 + $0x2f0] sm:$0xff]
    %v1519 = vld [vmem:[#allocation7 + $0x2f8] sm:$0xff]
    %v1520 = vld [vmem:[#allocation7 + $0x300] sm:$0xff]
    %v1521 = vld [vmem:[#allocation7 + $0x308] sm:$0xff]
    %v1522 = vld [vmem:[#allocation7 + $0x310] sm:$0xff]
    %v1523 = vld [vmem:[#allocation7 + $0x318] sm:$0xff]
    %v1524 = vld [vmem:[#allocation7 + $0x320] sm:$0xff]
    %v1525 = vld [vmem:[#allocation7 + $0x328] sm:$0xff]
    %v1526 = vld [vmem:[#allocation7 + $0x330] sm:$0xff]
    %v1527 = vld [vmem:[#allocation7 + $0x338] sm:$0xff]
    %v1528 = vld [vmem:[#allocation7 + $0x340] sm:$0xff]
    %v1529 = vld [vmem:[#allocation7 + $0x348] sm:$0xff]
    %v1530 = vld [vmem:[#allocation7 + $0x350] sm:$0xff]
    %v1531 = vld [vmem:[#allocation7 + $0x358] sm:$0xff]
    %v1532 = vld [vmem:[#allocation7 + $0x360] sm:$0xff]
    %v1533 = vld [vmem:[#allocation7 + $0x368] sm:$0xff]
    %v1534 = vld [vmem:[#allocation7 + $0x370] sm:$0xff]
    %v1535 = vld [vmem:[#allocation7 + $0x378] sm:$0xff]
    %v1536 = vld [vmem:[#allocation7 + $0x380] sm:$0xff]
    %v1537 = vld [vmem:[#allocation7 + $0x388] sm:$0xff]
    %v1538 = vld [vmem:[#allocation7 + $0x390] sm:$0xff]
    %v1539 = vld [vmem:[#allocation7 + $0x398] sm:$0xff]
    %v1540 = vld [vmem:[#allocation7 + $0x3a0] sm:$0xff]
    %v1541 = vld [vmem:[#allocation7 + $0x3a8] sm:$0xff]
    %v1542 = vld [vmem:[#allocation7 + $0x3b0] sm:$0xff]
    %v1543 = vld [vmem:[#allocation7 + $0x3b8] sm:$0xff]
    %v1544 = vld [vmem:[#allocation7 + $0x3c0] sm:$0xff]
    %v1545 = vld [vmem:[#allocation7 + $0x3c8] sm:$0xff]
    %v1546 = vld [vmem:[#allocation7 + $0x3d0] sm:$0xff]
    %v1547 = vld [vmem:[#allocation7 + $0x3d8] sm:$0xff]
    %v1548 = vld [vmem:[#allocation7 + $0x3e0] sm:$0xff]
    %v1549 = vld [vmem:[#allocation7 + $0x3e8] sm:$0xff]
    %v1550 = vld [vmem:[#allocation7 + $0x3f0] sm:$0xff]
    %v1551 = vld [vmem:[#allocation7 + $0x3f8] sm:$0xff]
    %v1554 = vunpack.c.l.b16 %v1422
    %v1555 = vunpack.c.h.b16 %v1422
    %v1556 = vunpack.c.l.b16 %v1423
    %v1557 = vunpack.c.h.b16 %v1423
    %v1558 = vpack.c.b16 %v1554, %v1554
    %v1559 = vpack.c.b16 %v1555, %v1555
    %v1560 = vpack.c.b16 %v1556, %v1556
    %v1561 = vpack.c.b16 %v1557, %v1557
    %v1694 = vunpack.c.l.b16 %v1424
    %v1695 = vunpack.c.h.b16 %v1424
    %v1696 = vunpack.c.l.b16 %v1425
    %v1697 = vunpack.c.h.b16 %v1425
    %v1698 = vunpack.c.l.b16 %v1426
    %v1699 = vunpack.c.h.b16 %v1426
    %v1700 = vunpack.c.l.b16 %v1427
    %v1701 = vunpack.c.h.b16 %v1427
    %v1702 = vunpack.c.l.b16 %v1428
    %v1703 = vunpack.c.h.b16 %v1428
    %v1704 = vunpack.c.l.b16 %v1429
    %v1705 = vunpack.c.h.b16 %v1429
    %v1706 = vunpack.c.l.b16 %v1430
    %v1707 = vunpack.c.h.b16 %v1430
    %v1708 = vunpack.c.l.b16 %v1431
    %v1709 = vunpack.c.h.b16 %v1431
    %v1710 = vunpack.c.l.b16 %v1432
    %v1711 = vunpack.c.h.b16 %v1432
    %v1712 = vunpack.c.l.b16 %v1433
    %v1713 = vunpack.c.h.b16 %v1433
    %v1714 = vunpack.c.l.b16 %v1434
    %v1715 = vunpack.c.h.b16 %v1434
    %v1716 = vunpack.c.l.b16 %v1435
    %v1717 = vunpack.c.h.b16 %v1435
    %v1718 = vunpack.c.l.b16 %v1436
    %v1719 = vunpack.c.h.b16 %v1436
    %v1720 = vunpack.c.l.b16 %v1437
    %v1721 = vunpack.c.h.b16 %v1437
    %v1722 = vunpack.c.l.b16 %v1438
    %v1723 = vunpack.c.h.b16 %v1438
    %v1724 = vunpack.c.l.b16 %v1439
    %v1725 = vunpack.c.h.b16 %v1439
    %v1726 = vunpack.c.l.b16 %v1440
    %v1727 = vunpack.c.h.b16 %v1440
    %v1728 = vunpack.c.l.b16 %v1441
    %v1729 = vunpack.c.h.b16 %v1441
    %v1730 = vunpack.c.l.b16 %v1442
    %v1731 = vunpack.c.h.b16 %v1442
    %v1732 = vunpack.c.l.b16 %v1443
    %v1733 = vunpack.c.h.b16 %v1443
    %v1734 = vunpack.c.l.b16 %v1444
    %v1735 = vunpack.c.h.b16 %v1444
    %v1736 = vunpack.c.l.b16 %v1445
    %v1737 = vunpack.c.h.b16 %v1445
    %v1738 = vunpack.c.l.b16 %v1446
    %v1739 = vunpack.c.h.b16 %v1446
    %v1740 = vunpack.c.l.b16 %v1447
    %v1741 = vunpack.c.h.b16 %v1447
    %v1742 = vunpack.c.l.b16 %v1448
    %v1743 = vunpack.c.h.b16 %v1448
    %v1744 = vunpack.c.l.b16 %v1449
    %v1745 = vunpack.c.h.b16 %v1449
    %v1746 = vunpack.c.l.b16 %v1450
    %v1747 = vunpack.c.h.b16 %v1450
    %v1748 = vunpack.c.l.b16 %v1451
    %v1749 = vunpack.c.h.b16 %v1451
    %v1750 = vunpack.c.l.b16 %v1452
    %v1751 = vunpack.c.h.b16 %v1452
    %v1752 = vunpack.c.l.b16 %v1453
    %v1753 = vunpack.c.h.b16 %v1453
    %v1754 = vunpack.c.l.b16 %v1454
    %v1755 = vunpack.c.h.b16 %v1454
    %v1756 = vunpack.c.l.b16 %v1455
    %v1757 = vunpack.c.h.b16 %v1455
    %v1758 = vunpack.c.l.b16 %v1456
    %v1759 = vunpack.c.h.b16 %v1456
    %v1760 = vunpack.c.l.b16 %v1457
    %v1761 = vunpack.c.h.b16 %v1457
    %v1762 = vunpack.c.l.b16 %v1458
    %v1763 = vunpack.c.h.b16 %v1458
    %v1764 = vunpack.c.l.b16 %v1459
    %v1765 = vunpack.c.h.b16 %v1459
    %v1766 = vunpack.c.l.b16 %v1460
    %v1767 = vunpack.c.h.b16 %v1460
    %v1768 = vunpack.c.l.b16 %v1461
    %v1769 = vunpack.c.h.b16 %v1461
    %v1770 = vunpack.c.l.b16 %v1462
    %v1771 = vunpack.c.h.b16 %v1462
    %v1772 = vunpack.c.l.b16 %v1463
    %v1773 = vunpack.c.h.b16 %v1463
    %v1774 = vunpack.c.l.b16 %v1464
    %v1775 = vunpack.c.h.b16 %v1464
    %v1776 = vunpack.c.l.b16 %v1465
    %v1777 = vunpack.c.h.b16 %v1465
    %v1778 = vunpack.c.l.b16 %v1466
    %v1779 = vunpack.c.h.b16 %v1466
    %v1780 = vunpack.c.l.b16 %v1467
    %v1781 = vunpack.c.h.b16 %v1467
    %v1782 = vunpack.c.l.b16 %v1468
    %v1783 = vunpack.c.h.b16 %v1468
    %v1784 = vunpack.c.l.b16 %v1469
    %v1785 = vunpack.c.h.b16 %v1469
    %v1786 = vunpack.c.l.b16 %v1470
    %v1787 = vunpack.c.h.b16 %v1470
    %v1788 = vunpack.c.l.b16 %v1471
    %v1789 = vunpack.c.h.b16 %v1471
    %v1790 = vunpack.c.l.b16 %v1472
    %v1791 = vunpack.c.h.b16 %v1472
    %v1792 = vunpack.c.l.b16 %v1473
    %v1793 = vunpack.c.h.b16 %v1473
    %v1794 = vunpack.c.l.b16 %v1474
    %v1795 = vunpack.c.h.b16 %v1474
    %v1796 = vunpack.c.l.b16 %v1475
    %v1797 = vunpack.c.h.b16 %v1475
    %v1798 = vunpack.c.l.b16 %v1476
    %v1799 = vunpack.c.h.b16 %v1476
    %v1800 = vunpack.c.l.b16 %v1477
    %v1801 = vunpack.c.h.b16 %v1477
    %v1802 = vunpack.c.l.b16 %v1478
    %v1803 = vunpack.c.h.b16 %v1478
    %v1804 = vunpack.c.l.b16 %v1479
    %v1805 = vunpack.c.h.b16 %v1479
    %v1806 = vunpack.c.l.b16 %v1480
    %v1807 = vunpack.c.h.b16 %v1480
    %v1808 = vunpack.c.l.b16 %v1481
    %v1809 = vunpack.c.h.b16 %v1481
    %v1810 = vunpack.c.l.b16 %v1482
    %v1811 = vunpack.c.h.b16 %v1482
    %v1812 = vunpack.c.l.b16 %v1483
    %v1813 = vunpack.c.h.b16 %v1483
    %v1814 = vunpack.c.l.b16 %v1484
    %v1815 = vunpack.c.h.b16 %v1484
    %v1816 = vunpack.c.l.b16 %v1485
    %v1817 = vunpack.c.h.b16 %v1485
    %v1818 = vunpack.c.l.b16 %v1486
    %v1819 = vunpack.c.h.b16 %v1486
    %v1820 = vunpack.c.l.b16 %v1487
    %v1821 = vunpack.c.h.b16 %v1487
    %v1822 = vunpack.c.l.b16 %v1488
    %v1823 = vunpack.c.h.b16 %v1488
    %v1824 = vunpack.c.l.b16 %v1489
    %v1825 = vunpack.c.h.b16 %v1489
    %v1826 = vunpack.c.l.b16 %v1490
    %v1827 = vunpack.c.h.b16 %v1490
    %v1828 = vunpack.c.l.b16 %v1491
    %v1829 = vunpack.c.h.b16 %v1491
    %v1830 = vunpack.c.l.b16 %v1492
    %v1831 = vunpack.c.h.b16 %v1492
    %v1832 = vunpack.c.l.b16 %v1493
    %v1833 = vunpack.c.h.b16 %v1493
    %v1834 = vunpack.c.l.b16 %v1494
    %v1835 = vunpack.c.h.b16 %v1494
    %v1836 = vunpack.c.l.b16 %v1495
    %v1837 = vunpack.c.h.b16 %v1495
    %v1838 = vunpack.c.l.b16 %v1496
    %v1839 = vunpack.c.h.b16 %v1496
    %v1840 = vunpack.c.l.b16 %v1497
    %v1841 = vunpack.c.h.b16 %v1497
    %v1842 = vunpack.c.l.b16 %v1498
    %v1843 = vunpack.c.h.b16 %v1498
    %v1844 = vunpack.c.l.b16 %v1499
    %v1845 = vunpack.c.h.b16 %v1499
    %v1846 = vunpack.c.l.b16 %v1500
    %v1847 = vunpack.c.h.b16 %v1500
    %v1848 = vunpack.c.l.b16 %v1501
    %v1849 = vunpack.c.h.b16 %v1501
    %v1850 = vunpack.c.l.b16 %v1502
    %v1851 = vunpack.c.h.b16 %v1502
    %v1852 = vunpack.c.l.b16 %v1503
    %v1853 = vunpack.c.h.b16 %v1503
    %v1854 = vunpack.c.l.b16 %v1504
    %v1855 = vunpack.c.h.b16 %v1504
    %v1856 = vunpack.c.l.b16 %v1505
    %v1857 = vunpack.c.h.b16 %v1505
    %v1858 = vunpack.c.l.b16 %v1506
    %v1859 = vunpack.c.h.b16 %v1506
    %v1860 = vunpack.c.l.b16 %v1507
    %v1861 = vunpack.c.h.b16 %v1507
    %v1862 = vunpack.c.l.b16 %v1508
    %v1863 = vunpack.c.h.b16 %v1508
    %v1864 = vunpack.c.l.b16 %v1509
    %v1865 = vunpack.c.h.b16 %v1509
    %v1866 = vunpack.c.l.b16 %v1510
    %v1867 = vunpack.c.h.b16 %v1510
    %v1868 = vunpack.c.l.b16 %v1511
    %v1869 = vunpack.c.h.b16 %v1511
    %v1870 = vunpack.c.l.b16 %v1512
    %v1871 = vunpack.c.h.b16 %v1512
    %v1872 = vunpack.c.l.b16 %v1513
    %v1873 = vunpack.c.h.b16 %v1513
    %v1874 = vunpack.c.l.b16 %v1514
    %v1875 = vunpack.c.h.b16 %v1514
    %v1876 = vunpack.c.l.b16 %v1515
    %v1877 = vunpack.c.h.b16 %v1515
    %v1878 = vunpack.c.l.b16 %v1516
    %v1879 = vunpack.c.h.b16 %v1516
    %v1880 = vunpack.c.l.b16 %v1517
    %v1881 = vunpack.c.h.b16 %v1517
    %v1882 = vunpack.c.l.b16 %v1518
    %v1883 = vunpack.c.h.b16 %v1518
    %v1884 = vunpack.c.l.b16 %v1519
    %v1885 = vunpack.c.h.b16 %v1519
    %v1886 = vunpack.c.l.b16 %v1520
    %v1887 = vunpack.c.h.b16 %v1520
    %v1888 = vunpack.c.l.b16 %v1521
    %v1889 = vunpack.c.h.b16 %v1521
    %v1890 = vunpack.c.l.b16 %v1522
    %v1891 = vunpack.c.h.b16 %v1522
    %v1892 = vunpack.c.l.b16 %v1523
    %v1893 = vunpack.c.h.b16 %v1523
    %v1894 = vunpack.c.l.b16 %v1524
    %v1895 = vunpack.c.h.b16 %v1524
    %v1896 = vunpack.c.l.b16 %v1525
    %v1897 = vunpack.c.h.b16 %v1525
    %v1898 = vunpack.c.l.b16 %v1526
    %v1899 = vunpack.c.h.b16 %v1526
    %v1900 = vunpack.c.l.b16 %v1527
    %v1901 = vunpack.c.h.b16 %v1527
    %v1902 = vunpack.c.l.b16 %v1528
    %v1903 = vunpack.c.h.b16 %v1528
    %v1904 = vunpack.c.l.b16 %v1529
    %v1905 = vunpack.c.h.b16 %v1529
    %v1906 = vunpack.c.l.b16 %v1530
    %v1907 = vunpack.c.h.b16 %v1530
    %v1908 = vunpack.c.l.b16 %v1531
    %v1909 = vunpack.c.h.b16 %v1531
    %v1910 = vunpack.c.l.b16 %v1532
    %v1911 = vunpack.c.h.b16 %v1532
    %v1912 = vunpack.c.l.b16 %v1533
    %v1913 = vunpack.c.h.b16 %v1533
    %v1914 = vunpack.c.l.b16 %v1534
    %v1915 = vunpack.c.h.b16 %v1534
    %v1916 = vunpack.c.l.b16 %v1535
    %v1917 = vunpack.c.h.b16 %v1535
    %v1918 = vunpack.c.l.b16 %v1536
    %v1919 = vunpack.c.h.b16 %v1536
    %v1920 = vunpack.c.l.b16 %v1537
    %v1921 = vunpack.c.h.b16 %v1537
    %v1922 = vunpack.c.l.b16 %v1538
    %v1923 = vunpack.c.h.b16 %v1538
    %v1924 = vunpack.c.l.b16 %v1539
    %v1925 = vunpack.c.h.b16 %v1539
    %v1926 = vunpack.c.l.b16 %v1540
    %v1927 = vunpack.c.h.b16 %v1540
    %v1928 = vunpack.c.l.b16 %v1541
    %v1929 = vunpack.c.h.b16 %v1541
    %v1930 = vunpack.c.l.b16 %v1542
    %v1931 = vunpack.c.h.b16 %v1542
    %v1932 = vunpack.c.l.b16 %v1543
    %v1933 = vunpack.c.h.b16 %v1543
    %v1934 = vunpack.c.l.b16 %v1544
    %v1935 = vunpack.c.h.b16 %v1544
    %v1936 = vunpack.c.l.b16 %v1545
    %v1937 = vunpack.c.h.b16 %v1545
    %v1938 = vunpack.c.l.b16 %v1546
    %v1939 = vunpack.c.h.b16 %v1546
    %v1940 = vunpack.c.l.b16 %v1547
    %v1941 = vunpack.c.h.b16 %v1547
    %v1942 = vunpack.c.l.b16 %v1548
    %v1943 = vunpack.c.h.b16 %v1548
    %v1944 = vunpack.c.l.b16 %v1549
    %v1945 = vunpack.c.h.b16 %v1549
    %v1946 = vunpack.c.l.b16 %v1550
    %v1947 = vunpack.c.h.b16 %v1550
    %v1948 = vunpack.c.l.b16 %v1551
    %v1949 = vunpack.c.h.b16 %v1551
    %v1950 = vpack.c.b16 %v1698, %v1694
    %v1951 = vpack.c.b16 %v1699, %v1695
    %v1952 = vpack.c.b16 %v1700, %v1696
    %v1953 = vpack.c.b16 %v1701, %v1697
    %v1954 = vpack.c.b16 %v1706, %v1702
    %v1955 = vpack.c.b16 %v1707, %v1703
    %v1956 = vpack.c.b16 %v1708, %v1704
    %v1957 = vpack.c.b16 %v1709, %v1705
    %v1958 = vpack.c.b16 %v1714, %v1710
    %v1959 = vpack.c.b16 %v1715, %v1711
    %v1960 = vpack.c.b16 %v1716, %v1712
    %v1961 = vpack.c.b16 %v1717, %v1713
    %v1962 = vpack.c.b16 %v1722, %v1718
    %v1963 = vpack.c.b16 %v1723, %v1719
    %v1964 = vpack.c.b16 %v1724, %v1720
    %v1965 = vpack.c.b16 %v1725, %v1721
    %v1966 = vpack.c.b16 %v1730, %v1726
    %v1967 = vpack.c.b16 %v1731, %v1727
    %v1968 = vpack.c.b16 %v1732, %v1728
    %v1969 = vpack.c.b16 %v1733, %v1729
    %v1970 = vpack.c.b16 %v1738, %v1734
    %v1971 = vpack.c.b16 %v1739, %v1735
    %v1972 = vpack.c.b16 %v1740, %v1736
    %v1973 = vpack.c.b16 %v1741, %v1737
    %v1974 = vpack.c.b16 %v1746, %v1742
    %v1975 = vpack.c.b16 %v1747, %v1743
    %v1976 = vpack.c.b16 %v1748, %v1744
    %v1977 = vpack.c.b16 %v1749, %v1745
    %v1978 = vpack.c.b16 %v1754, %v1750
    %v1979 = vpack.c.b16 %v1755, %v1751
    %v1980 = vpack.c.b16 %v1756, %v1752
    %v1981 = vpack.c.b16 %v1757, %v1753
    %v1982 = vpack.c.b16 %v1762, %v1758
    %v1983 = vpack.c.b16 %v1763, %v1759
    %v1984 = vpack.c.b16 %v1764, %v1760
    %v1985 = vpack.c.b16 %v1765, %v1761
    %v1986 = vpack.c.b16 %v1770, %v1766
    %v1987 = vpack.c.b16 %v1771, %v1767
    %v1988 = vpack.c.b16 %v1772, %v1768
    %v1989 = vpack.c.b16 %v1773, %v1769
    %v1990 = vpack.c.b16 %v1778, %v1774
    %v1991 = vpack.c.b16 %v1779, %v1775
    %v1992 = vpack.c.b16 %v1780, %v1776
    %v1993 = vpack.c.b16 %v1781, %v1777
    %v1994 = vpack.c.b16 %v1786, %v1782
    %v1995 = vpack.c.b16 %v1787, %v1783
    %v1996 = vpack.c.b16 %v1788, %v1784
    %v1997 = vpack.c.b16 %v1789, %v1785
    %v1998 = vpack.c.b16 %v1794, %v1790
    %v1999 = vpack.c.b16 %v1795, %v1791
    %v2000 = vpack.c.b16 %v1796, %v1792
    %v2001 = vpack.c.b16 %v1797, %v1793
    %v2002 = vpack.c.b16 %v1802, %v1798
    %v2003 = vpack.c.b16 %v1803, %v1799
    %v2004 = vpack.c.b16 %v1804, %v1800
    %v2005 = vpack.c.b16 %v1805, %v1801
    %v2006 = vpack.c.b16 %v1810, %v1806
    %v2007 = vpack.c.b16 %v1811, %v1807
    %v2008 = vpack.c.b16 %v1812, %v1808
    %v2009 = vpack.c.b16 %v1813, %v1809
    %v2010 = vpack.c.b16 %v1818, %v1814
    %v2011 = vpack.c.b16 %v1819, %v1815
    %v2012 = vpack.c.b16 %v1820, %v1816
    %v2013 = vpack.c.b16 %v1821, %v1817
    %v2014 = vpack.c.b16 %v1826, %v1822
    %v2015 = vpack.c.b16 %v1827, %v1823
    %v2016 = vpack.c.b16 %v1828, %v1824
    %v2017 = vpack.c.b16 %v1829, %v1825
    %v2018 = vpack.c.b16 %v1834, %v1830
    %v2019 = vpack.c.b16 %v1835, %v1831
    %v2020 = vpack.c.b16 %v1836, %v1832
    %v2021 = vpack.c.b16 %v1837, %v1833
    %v2022 = vpack.c.b16 %v1842, %v1838
    %v2023 = vpack.c.b16 %v1843, %v1839
    %v2024 = vpack.c.b16 %v1844, %v1840
    %v2025 = vpack.c.b16 %v1845, %v1841
    %v2026 = vpack.c.b16 %v1850, %v1846
    %v2027 = vpack.c.b16 %v1851, %v1847
    %v2028 = vpack.c.b16 %v1852, %v1848
    %v2029 = vpack.c.b16 %v1853, %v1849
    %v2030 = vpack.c.b16 %v1858, %v1854
    %v2031 = vpack.c.b16 %v1859, %v1855
    %v2032 = vpack.c.b16 %v1860, %v1856
    %v2033 = vpack.c.b16 %v1861, %v1857
    %v2034 = vpack.c.b16 %v1866, %v1862
    %v2035 = vpack.c.b16 %v1867, %v1863
    %v2036 = vpack.c.b16 %v1868, %v1864
    %v2037 = vpack.c.b16 %v1869, %v1865
    %v2038 = vpack.c.b16 %v1874, %v1870
    %v2039 = vpack.c.b16 %v1875, %v1871
    %v2040 = vpack.c.b16 %v1876, %v1872
    %v2041 = vpack.c.b16 %v1877, %v1873
    %v2042 = vpack.c.b16 %v1882, %v1878
    %v2043 = vpack.c.b16 %v1883, %v1879
    %v2044 = vpack.c.b16 %v1884, %v1880
    %v2045 = vpack.c.b16 %v1885, %v1881
    %v2046 = vpack.c.b16 %v1890, %v1886
    %v2047 = vpack.c.b16 %v1891, %v1887
    %v2048 = vpack.c.b16 %v1892, %v1888
    %v2049 = vpack.c.b16 %v1893, %v1889
    %v2050 = vpack.c.b16 %v1898, %v1894
    %v2051 = vpack.c.b16 %v1899, %v1895
    %v2052 = vpack.c.b16 %v1900, %v1896
    %v2053 = vpack.c.b16 %v1901, %v1897
    %v2054 = vpack.c.b16 %v1906, %v1902
    %v2055 = vpack.c.b16 %v1907, %v1903
    %v2056 = vpack.c.b16 %v1908, %v1904
    %v2057 = vpack.c.b16 %v1909, %v1905
    %v2058 = vpack.c.b16 %v1914, %v1910
    %v2059 = vpack.c.b16 %v1915, %v1911
    %v2060 = vpack.c.b16 %v1916, %v1912
    %v2061 = vpack.c.b16 %v1917, %v1913
    %v2062 = vpack.c.b16 %v1922, %v1918
    %v2063 = vpack.c.b16 %v1923, %v1919
    %v2064 = vpack.c.b16 %v1924, %v1920
    %v2065 = vpack.c.b16 %v1925, %v1921
    %v2066 = vpack.c.b16 %v1930, %v1926
    %v2067 = vpack.c.b16 %v1931, %v1927
    %v2068 = vpack.c.b16 %v1932, %v1928
    %v2069 = vpack.c.b16 %v1933, %v1929
    %v2070 = vpack.c.b16 %v1938, %v1934
    %v2071 = vpack.c.b16 %v1939, %v1935
    %v2072 = vpack.c.b16 %v1940, %v1936
    %v2073 = vpack.c.b16 %v1941, %v1937
    %v2074 = vpack.c.b16 %v1946, %v1942
    %v2075 = vpack.c.b16 %v1947, %v1943
    %v2076 = vpack.c.b16 %v1948, %v1944
    %v2077 = vpack.c.b16 %v1949, %v1945
    %2206 = vmatpush.bf16.msra.mxu0 %v1978
    %2207 = vmatpush.bf16.msra.mxu0 %v1974
    %2208 = vmatpush.bf16.msra.mxu0 %v1970
    %2209 = vmatpush.bf16.msra.mxu0 %v1966
    %2210 = vmatpush.bf16.msra.mxu0 %v1962
    %2211 = vmatpush.bf16.msra.mxu0 %v1958
    %2212 = vmatpush.bf16.msra.mxu0 %v1954
    %2213 = vmatpush.bf16.msra.mxu0 %v1950
    %2214 = vmatmul.bf16.gmra.mxu0 %v1558
    %v2215 = vpop.f32.mrf.mxu0
    %v2216 = vadd.f32 0.0, %v2215
    %v2217 = vpop.f32.mrf.mxu0
    %2218 = vdwg.mxu0
    %2219 = vmatpush.bf16.msra.mxu0 %v2010
    %2220 = vmatpush.bf16.msra.mxu0 %v2006
    %2221 = vmatpush.bf16.msra.mxu0 %v2002
    %2222 = vmatpush.bf16.msra.mxu0 %v1998
    %2223 = vmatpush.bf16.msra.mxu0 %v1994
    %2224 = vmatpush.bf16.msra.mxu0 %v1990
    %2225 = vmatpush.bf16.msra.mxu0 %v1986
    %2226 = vmatpush.bf16.msra.mxu0 %v1982
    %2227 = vmatmul.bf16.gmra.mxu0 %v1559
    %v2228 = vpop.f32.mrf.mxu0
    %v2229 = vadd.f32 %v2216, %v2228
    %v2230 = vpop.f32.mrf.mxu0
    %2231 = vdwg.mxu0
    %2232 = vmatpush.bf16.msra.mxu0 %v2042
    %2233 = vmatpush.bf16.msra.mxu0 %v2038
    %2234 = vmatpush.bf16.msra.mxu0 %v2034
    %2235 = vmatpush.bf16.msra.mxu0 %v2030
    %2236 = vmatpush.bf16.msra.mxu0 %v2026
    %2237 = vmatpush.bf16.msra.mxu0 %v2022
    %2238 = vmatpush.bf16.msra.mxu0 %v2018
    %2239 = vmatpush.bf16.msra.mxu0 %v2014
    %2240 = vmatmul.bf16.gmra.mxu0 %v1560
    %v2241 = vpop.f32.mrf.mxu0
    %v2242 = vadd.f32 %v2229, %v2241
    %v2243 = vpop.f32.mrf.mxu0
    %2244 = vdwg.mxu0
    %2245 = vmatpush.bf16.msra.mxu0 %v2074
    %2246 = vmatpush.bf16.msra.mxu0 %v2070
    %2247 = vmatpush.bf16.msra.mxu0 %v2066
    %2248 = vmatpush.bf16.msra.mxu0 %v2062
    %2249 = vmatpush.bf16.msra.mxu0 %v2058
    %2250 = vmatpush.bf16.msra.mxu0 %v2054
    %2251 = vmatpush.bf16.msra.mxu0 %v2050
    %2252 = vmatpush.bf16.msra.mxu0 %v2046
    %2253 = vmatmul.bf16.gmra.mxu0 %v1561
    %v2254 = vpop.f32.mrf.mxu0
    %v2255 = vadd.f32 %v2242, %v2254
    %v2256 = vpop.f32.mrf.mxu0
    %2257 = vdwg.mxu0
    %2258 = vmatpush.bf16.msra.mxu0 %v1979
    %2259 = vmatpush.bf16.msra.mxu0 %v1975
    %2260 = vmatpush.bf16.msra.mxu0 %v1971
    %2261 = vmatpush.bf16.msra.mxu0 %v1967
    %2262 = vmatpush.bf16.msra.mxu0 %v1963
    %2263 = vmatpush.bf16.msra.mxu0 %v1959
    %2264 = vmatpush.bf16.msra.mxu0 %v1955
    %2265 = vmatpush.bf16.msra.mxu0 %v1951
    %2266 = vmatmul.bf16.gmra.mxu0 %v1558
    %v2267 = vpop.f32.mrf.mxu0
    %v2268 = vadd.f32 0.0, %v2267
    %v2269 = vpop.f32.mrf.mxu0
    %2270 = vdwg.mxu0
    %2271 = vmatpush.bf16.msra.mxu0 %v2011
    %2272 = vmatpush.bf16.msra.mxu0 %v2007
    %2273 = vmatpush.bf16.msra.mxu0 %v2003
    %2274 = vmatpush.bf16.msra.mxu0 %v1999
    %2275 = vmatpush.bf16.msra.mxu0 %v1995
    %2276 = vmatpush.bf16.msra.mxu0 %v1991
    %2277 = vmatpush.bf16.msra.mxu0 %v1987
    %2278 = vmatpush.bf16.msra.mxu0 %v1983
    %2279 = vmatmul.bf16.gmra.mxu0 %v1559
    %v2280 = vpop.f32.mrf.mxu0
    %v2281 = vadd.f32 %v2268, %v2280
    %v2282 = vpop.f32.mrf.mxu0
    %2283 = vdwg.mxu0
    %2284 = vmatpush.bf16.msra.mxu0 %v2043
    %2285 = vmatpush.bf16.msra.mxu0 %v2039
    %2286 = vmatpush.bf16.msra.mxu0 %v2035
    %2287 = vmatpush.bf16.msra.mxu0 %v2031
    %2288 = vmatpush.bf16.msra.mxu0 %v2027
    %2289 = vmatpush.bf16.msra.mxu0 %v2023
    %2290 = vmatpush.bf16.msra.mxu0 %v2019
    %2291 = vmatpush.bf16.msra.mxu0 %v2015
    %2292 = vmatmul.bf16.gmra.mxu0 %v1560
    %v2293 = vpop.f32.mrf.mxu0
    %v2294 = vadd.f32 %v2281, %v2293
    %v2295 = vpop.f32.mrf.mxu0
    %2296 = vdwg.mxu0
    %2297 = vmatpush.bf16.msra.mxu0 %v2075
    %2298 = vmatpush.bf16.msra.mxu0 %v2071
    %2299 = vmatpush.bf16.msra.mxu0 %v2067
    %2300 = vmatpush.bf16.msra.mxu0 %v2063
    %2301 = vmatpush.bf16.msra.mxu0 %v2059
    %2302 = vmatpush.bf16.msra.mxu0 %v2055
    %2303 = vmatpush.bf16.msra.mxu0 %v2051
    %2304 = vmatpush.bf16.msra.mxu0 %v2047
    %2305 = vmatmul.bf16.gmra.mxu0 %v1561
    %v2306 = vpop.f32.mrf.mxu0
    %v2307 = vadd.f32 %v2294, %v2306
    %v2308 = vpop.f32.mrf.mxu0
    %2309 = vdwg.mxu0
    %2310 = vmatpush.bf16.msra.mxu0 %v1980
    %2311 = vmatpush.bf16.msra.mxu0 %v1976
    %2312 = vmatpush.bf16.msra.mxu0 %v1972
    %2313 = vmatpush.bf16.msra.mxu0 %v1968
    %2314 = vmatpush.bf16.msra.mxu0 %v1964
    %2315 = vmatpush.bf16.msra.mxu0 %v1960
    %2316 = vmatpush.bf16.msra.mxu0 %v1956
    %2317 = vmatpush.bf16.msra.mxu0 %v1952
    %2318 = vmatmul.bf16.gmra.mxu0 %v1558
    %v2319 = vpop.f32.mrf.mxu0
    %v2320 = vadd.f32 0.0, %v2319
    %v2321 = vpop.f32.mrf.mxu0
    %2322 = vdwg.mxu0
    %2323 = vmatpush.bf16.msra.mxu0 %v2012
    %2324 = vmatpush.bf16.msra.mxu0 %v2008
    %2325 = vmatpush.bf16.msra.mxu0 %v2004
    %2326 = vmatpush.bf16.msra.mxu0 %v2000
    %2327 = vmatpush.bf16.msra.mxu0 %v1996
    %2328 = vmatpush.bf16.msra.mxu0 %v1992
    %2329 = vmatpush.bf16.msra.mxu0 %v1988
    %2330 = vmatpush.bf16.msra.mxu0 %v1984
    %2331 = vmatmul.bf16.gmra.mxu0 %v1559
    %v2332 = vpop.f32.mrf.mxu0
    %v2333 = vadd.f32 %v2320, %v2332
    %v2334 = vpop.f32.mrf.mxu0
    %2335 = vdwg.mxu0
    %2336 = vmatpush.bf16.msra.mxu0 %v2044
    %2337 = vmatpush.bf16.msra.mxu0 %v2040
    %2338 = vmatpush.bf16.msra.mxu0 %v2036
    %2339 = vmatpush.bf16.msra.mxu0 %v2032
    %2340 = vmatpush.bf16.msra.mxu0 %v2028
    %2341 = vmatpush.bf16.msra.mxu0 %v2024
    %2342 = vmatpush.bf16.msra.mxu0 %v2020
    %2343 = vmatpush.bf16.msra.mxu0 %v2016
    %2344 = vmatmul.bf16.gmra.mxu0 %v1560
    %v2345 = vpop.f32.mrf.mxu0
    %v2346 = vadd.f32 %v2333, %v2345
    %v2347 = vpop.f32.mrf.mxu0
    %2348 = vdwg.mxu0
    %2349 = vmatpush.bf16.msra.mxu0 %v2076
    %2350 = vmatpush.bf16.msra.mxu0 %v2072
    %2351 = vmatpush.bf16.msra.mxu0 %v2068
    %2352 = vmatpush.bf16.msra.mxu0 %v2064
    %2353 = vmatpush.bf16.msra.mxu0 %v2060
    %2354 = vmatpush.bf16.msra.mxu0 %v2056
    %2355 = vmatpush.bf16.msra.mxu0 %v2052
    %2356 = vmatpush.bf16.msra.mxu0 %v2048
    %2357 = vmatmul.bf16.gmra.mxu0 %v1561
    %v2358 = vpop.f32.mrf.mxu0
    %v2359 = vadd.f32 %v2346, %v2358
    %v2360 = vpop.f32.mrf.mxu0
    %2361 = vdwg.mxu0
    %2362 = vmatpush.bf16.msra.mxu0 %v1981
    %2363 = vmatpush.bf16.msra.mxu0 %v1977
    %2364 = vmatpush.bf16.msra.mxu0 %v1973
    %2365 = vmatpush.bf16.msra.mxu0 %v1969
    %2366 = vmatpush.bf16.msra.mxu0 %v1965
    %2367 = vmatpush.bf16.msra.mxu0 %v1961
    %2368 = vmatpush.bf16.msra.mxu0 %v1957
    %2369 = vmatpush.bf16.msra.mxu0 %v1953
    %2370 = vmatmul.bf16.gmra.mxu0 %v1558
    %v2371 = vpop.f32.mrf.mxu0
    %v2372 = vadd.f32 0.0, %v2371
    %v2373 = vpop.f32.mrf.mxu0
    %2374 = vdwg.mxu0
    %2375 = vmatpush.bf16.msra.mxu0 %v2013
    %2376 = vmatpush.bf16.msra.mxu0 %v2009
    %2377 = vmatpush.bf16.msra.mxu0 %v2005
    %2378 = vmatpush.bf16.msra.mxu0 %v2001
    %2379 = vmatpush.bf16.msra.mxu0 %v1997
    %2380 = vmatpush.bf16.msra.mxu0 %v1993
    %2381 = vmatpush.bf16.msra.mxu0 %v1989
    %2382 = vmatpush.bf16.msra.mxu0 %v1985
    %2383 = vmatmul.bf16.gmra.mxu0 %v1559
    %v2384 = vpop.f32.mrf.mxu0
    %v2385 = vadd.f32 %v2372, %v2384
    %v2386 = vpop.f32.mrf.mxu0
    %2387 = vdwg.mxu0
    %2388 = vmatpush.bf16.msra.mxu0 %v2045
    %2389 = vmatpush.bf16.msra.mxu0 %v2041
    %2390 = vmatpush.bf16.msra.mxu0 %v2037
    %2391 = vmatpush.bf16.msra.mxu0 %v2033
    %2392 = vmatpush.bf16.msra.mxu0 %v2029
    %2393 = vmatpush.bf16.msra.mxu0 %v2025
    %2394 = vmatpush.bf16.msra.mxu0 %v2021
    %2395 = vmatpush.bf16.msra.mxu0 %v2017
    %2396 = vmatmul.bf16.gmra.mxu0 %v1560
    %v2397 = vpop.f32.mrf.mxu0
    %v2398 = vadd.f32 %v2385, %v2397
    %v2399 = vpop.f32.mrf.mxu0
    %2400 = vdwg.mxu0
    %2401 = vmatpush.bf16.msra.mxu0 %v2077
    %2402 = vmatpush.bf16.msra.mxu0 %v2073
    %2403 = vmatpush.bf16.msra.mxu0 %v2069
    %2404 = vmatpush.bf16.msra.mxu0 %v2065
    %2405 = vmatpush.bf16.msra.mxu0 %v2061
    %2406 = vmatpush.bf16.msra.mxu0 %v2057
    %2407 = vmatpush.bf16.msra.mxu0 %v2053
    %2408 = vmatpush.bf16.msra.mxu0 %v2049
    %2409 = vmatmul.bf16.gmra.mxu0 %v1561
    %v2410 = vpop.f32.mrf.mxu0
    %v2411 = vadd.f32 %v2398, %v2410
    %v2412 = vpop.f32.mrf.mxu0
    %2413 = vdwg.mxu0
    %v2414 = vadd.f32 %v1263, %v2255
    %v2415 = vadd.f32 %v1315, %v2307
    %v2416 = vadd.f32 %v1367, %v2359
    %v2417 = vadd.f32 %v1419, %v2411
    %v2418 = vld [vmem:[%s15] sm:$0xf]
    %v2420 = vperm.slane %v2418, 0
    %v2421 = vperm.slane %v2418, 1
    %v2422 = vperm.slane %v2418, 2
    %v2423 = vperm.slane %v2418, 3
    %v2428 = vadd.f32 %v2414, %v2420
    %v2429 = vadd.f32 %v2415, %v2421
    %v2430 = vadd.f32 %v2416, %v2422
    %v2431 = vadd.f32 %v2417, %v2423
    %v2432 = vmax.f32 %v2428, 0.0
    %v2433 = vmax.f32 %v2429, 0.0
    %v2434 = vmax.f32 %v2430, 0.0
    %v2435 = vmax.f32 %v2431, 0.0
    %v2436 = vpack.c.bf16 %v2432, %v2432
    %v2437 = vpack.c.bf16 %v2433, %v2433
    %v2438 = vpack.c.bf16 %v2434, %v2434
    %v2439 = vpack.c.bf16 %v2435, %v2435
    %v2440 = vld [vmem:[#allocation9] sm:$0xff]
    %v2441 = vld [vmem:[#allocation9 + $0x8] sm:$0xff]
    %v2442 = vld [vmem:[#allocation9 + $0x10] sm:$0xff]
    %v2443 = vld [vmem:[#allocation9 + $0x18] sm:$0xff]
    %v2444 = vld [vmem:[#allocation9 + $0x20] sm:$0xff]
    %v2445 = vld [vmem:[#allocation9 + $0x28] sm:$0xff]
    %v2446 = vld [vmem:[#allocation9 + $0x30] sm:$0xff]
    %v2447 = vld [vmem:[#allocation9 + $0x38] sm:$0xff]
    %v2448 = vld [vmem:[#allocation9 + $0x40] sm:$0xff]
    %v2449 = vld [vmem:[#allocation9 + $0x48] sm:$0xff]
    %v2450 = vld [vmem:[#allocation9 + $0x50] sm:$0xff]
    %v2451 = vld [vmem:[#allocation9 + $0x58] sm:$0xff]
    %v2452 = vld [vmem:[#allocation9 + $0x60] sm:$0xff]
    %v2453 = vld [vmem:[#allocation9 + $0x68] sm:$0xff]
    %v2454 = vld [vmem:[#allocation9 + $0x70] sm:$0xff]
    %v2455 = vld [vmem:[#allocation9 + $0x78] sm:$0xff]
    %v2456 = vld [vmem:[#allocation9 + $0x80] sm:$0xff]
    %v2457 = vld [vmem:[#allocation9 + $0x88] sm:$0xff]
    %v2458 = vld [vmem:[#allocation9 + $0x90] sm:$0xff]
    %v2459 = vld [vmem:[#allocation9 + $0x98] sm:$0xff]
    %v2460 = vld [vmem:[#allocation9 + $0xa0] sm:$0xff]
    %v2461 = vld [vmem:[#allocation9 + $0xa8] sm:$0xff]
    %v2462 = vld [vmem:[#allocation9 + $0xb0] sm:$0xff]
    %v2463 = vld [vmem:[#allocation9 + $0xb8] sm:$0xff]
    %v2464 = vld [vmem:[#allocation9 + $0xc0] sm:$0xff]
    %v2465 = vld [vmem:[#allocation9 + $0xc8] sm:$0xff]
    %v2466 = vld [vmem:[#allocation9 + $0xd0] sm:$0xff]
    %v2467 = vld [vmem:[#allocation9 + $0xd8] sm:$0xff]
    %v2468 = vld [vmem:[#allocation9 + $0xe0] sm:$0xff]
    %v2469 = vld [vmem:[#allocation9 + $0xe8] sm:$0xff]
    %v2470 = vld [vmem:[#allocation9 + $0xf0] sm:$0xff]
    %v2471 = vld [vmem:[#allocation9 + $0xf8] sm:$0xff]
    %v2472 = vld [vmem:[#allocation9 + $0x100] sm:$0xff]
    %v2473 = vld [vmem:[#allocation9 + $0x108] sm:$0xff]
    %v2474 = vld [vmem:[#allocation9 + $0x110] sm:$0xff]
    %v2475 = vld [vmem:[#allocation9 + $0x118] sm:$0xff]
    %v2476 = vld [vmem:[#allocation9 + $0x120] sm:$0xff]
    %v2477 = vld [vmem:[#allocation9 + $0x128] sm:$0xff]
    %v2478 = vld [vmem:[#allocation9 + $0x130] sm:$0xff]
    %v2479 = vld [vmem:[#allocation9 + $0x138] sm:$0xff]
    %v2480 = vld [vmem:[#allocation9 + $0x140] sm:$0xff]
    %v2481 = vld [vmem:[#allocation9 + $0x148] sm:$0xff]
    %v2482 = vld [vmem:[#allocation9 + $0x150] sm:$0xff]
    %v2483 = vld [vmem:[#allocation9 + $0x158] sm:$0xff]
    %v2484 = vld [vmem:[#allocation9 + $0x160] sm:$0xff]
    %v2485 = vld [vmem:[#allocation9 + $0x168] sm:$0xff]
    %v2486 = vld [vmem:[#allocation9 + $0x170] sm:$0xff]
    %v2487 = vld [vmem:[#allocation9 + $0x178] sm:$0xff]
    %v2488 = vld [vmem:[#allocation9 + $0x180] sm:$0xff]
    %v2489 = vld [vmem:[#allocation9 + $0x188] sm:$0xff]
    %v2490 = vld [vmem:[#allocation9 + $0x190] sm:$0xff]
    %v2491 = vld [vmem:[#allocation9 + $0x198] sm:$0xff]
    %v2492 = vld [vmem:[#allocation9 + $0x1a0] sm:$0xff]
    %v2493 = vld [vmem:[#allocation9 + $0x1a8] sm:$0xff]
    %v2494 = vld [vmem:[#allocation9 + $0x1b0] sm:$0xff]
    %v2495 = vld [vmem:[#allocation9 + $0x1b8] sm:$0xff]
    %v2496 = vld [vmem:[#allocation9 + $0x1c0] sm:$0xff]
    %v2497 = vld [vmem:[#allocation9 + $0x1c8] sm:$0xff]
    %v2498 = vld [vmem:[#allocation9 + $0x1d0] sm:$0xff]
    %v2499 = vld [vmem:[#allocation9 + $0x1d8] sm:$0xff]
    %v2500 = vld [vmem:[#allocation9 + $0x1e0] sm:$0xff]
    %v2501 = vld [vmem:[#allocation9 + $0x1e8] sm:$0xff]
    %v2502 = vld [vmem:[#allocation9 + $0x1f0] sm:$0xff]
    %v2503 = vld [vmem:[#allocation9 + $0x1f8] sm:$0xff]
    %v2504 = vld [vmem:[%s17] sm:$0x3]
    %v2506 = vperm.slane %v2504, 0
    %v2507 = vperm.slane %v2504, 1
    %v2574 = vunpack.c.l.b16 %v2440
    %v2575 = vunpack.c.h.b16 %v2440
    %v2576 = vunpack.c.l.b16 %v2441
    %v2577 = vunpack.c.h.b16 %v2441
    %v2578 = vunpack.c.l.b16 %v2442
    %v2579 = vunpack.c.h.b16 %v2442
    %v2580 = vunpack.c.l.b16 %v2443
    %v2581 = vunpack.c.h.b16 %v2443
    %v2582 = vunpack.c.l.b16 %v2444
    %v2583 = vunpack.c.h.b16 %v2444
    %v2584 = vunpack.c.l.b16 %v2445
    %v2585 = vunpack.c.h.b16 %v2445
    %v2586 = vunpack.c.l.b16 %v2446
    %v2587 = vunpack.c.h.b16 %v2446
    %v2588 = vunpack.c.l.b16 %v2447
    %v2589 = vunpack.c.h.b16 %v2447
    %v2590 = vunpack.c.l.b16 %v2448
    %v2591 = vunpack.c.h.b16 %v2448
    %v2592 = vunpack.c.l.b16 %v2449
    %v2593 = vunpack.c.h.b16 %v2449
    %v2594 = vunpack.c.l.b16 %v2450
    %v2595 = vunpack.c.h.b16 %v2450
    %v2596 = vunpack.c.l.b16 %v2451
    %v2597 = vunpack.c.h.b16 %v2451
    %v2598 = vunpack.c.l.b16 %v2452
    %v2599 = vunpack.c.h.b16 %v2452
    %v2600 = vunpack.c.l.b16 %v2453
    %v2601 = vunpack.c.h.b16 %v2453
    %v2602 = vunpack.c.l.b16 %v2454
    %v2603 = vunpack.c.h.b16 %v2454
    %v2604 = vunpack.c.l.b16 %v2455
    %v2605 = vunpack.c.h.b16 %v2455
    %v2606 = vunpack.c.l.b16 %v2456
    %v2607 = vunpack.c.h.b16 %v2456
    %v2608 = vunpack.c.l.b16 %v2457
    %v2609 = vunpack.c.h.b16 %v2457
    %v2610 = vunpack.c.l.b16 %v2458
    %v2611 = vunpack.c.h.b16 %v2458
    %v2612 = vunpack.c.l.b16 %v2459
    %v2613 = vunpack.c.h.b16 %v2459
    %v2614 = vunpack.c.l.b16 %v2460
    %v2615 = vunpack.c.h.b16 %v2460
    %v2616 = vunpack.c.l.b16 %v2461
    %v2617 = vunpack.c.h.b16 %v2461
    %v2618 = vunpack.c.l.b16 %v2462
    %v2619 = vunpack.c.h.b16 %v2462
    %v2620 = vunpack.c.l.b16 %v2463
    %v2621 = vunpack.c.h.b16 %v2463
    %v2622 = vunpack.c.l.b16 %v2464
    %v2623 = vunpack.c.h.b16 %v2464
    %v2624 = vunpack.c.l.b16 %v2465
    %v2625 = vunpack.c.h.b16 %v2465
    %v2626 = vunpack.c.l.b16 %v2466
    %v2627 = vunpack.c.h.b16 %v2466
    %v2628 = vunpack.c.l.b16 %v2467
    %v2629 = vunpack.c.h.b16 %v2467
    %v2630 = vunpack.c.l.b16 %v2468
    %v2631 = vunpack.c.h.b16 %v2468
    %v2632 = vunpack.c.l.b16 %v2469
    %v2633 = vunpack.c.h.b16 %v2469
    %v2634 = vunpack.c.l.b16 %v2470
    %v2635 = vunpack.c.h.b16 %v2470
    %v2636 = vunpack.c.l.b16 %v2471
    %v2637 = vunpack.c.h.b16 %v2471
    %v2638 = vunpack.c.l.b16 %v2472
    %v2639 = vunpack.c.h.b16 %v2472
    %v2640 = vunpack.c.l.b16 %v2473
    %v2641 = vunpack.c.h.b16 %v2473
    %v2642 = vunpack.c.l.b16 %v2474
    %v2643 = vunpack.c.h.b16 %v2474
    %v2644 = vunpack.c.l.b16 %v2475
    %v2645 = vunpack.c.h.b16 %v2475
    %v2646 = vunpack.c.l.b16 %v2476
    %v2647 = vunpack.c.h.b16 %v2476
    %v2648 = vunpack.c.l.b16 %v2477
    %v2649 = vunpack.c.h.b16 %v2477
    %v2650 = vunpack.c.l.b16 %v2478
    %v2651 = vunpack.c.h.b16 %v2478
    %v2652 = vunpack.c.l.b16 %v2479
    %v2653 = vunpack.c.h.b16 %v2479
    %v2654 = vunpack.c.l.b16 %v2480
    %v2655 = vunpack.c.h.b16 %v2480
    %v2656 = vunpack.c.l.b16 %v2481
    %v2657 = vunpack.c.h.b16 %v2481
    %v2658 = vunpack.c.l.b16 %v2482
    %v2659 = vunpack.c.h.b16 %v2482
    %v2660 = vunpack.c.l.b16 %v2483
    %v2661 = vunpack.c.h.b16 %v2483
    %v2662 = vunpack.c.l.b16 %v2484
    %v2663 = vunpack.c.h.b16 %v2484
    %v2664 = vunpack.c.l.b16 %v2485
    %v2665 = vunpack.c.h.b16 %v2485
    %v2666 = vunpack.c.l.b16 %v2486
    %v2667 = vunpack.c.h.b16 %v2486
    %v2668 = vunpack.c.l.b16 %v2487
    %v2669 = vunpack.c.h.b16 %v2487
    %v2670 = vunpack.c.l.b16 %v2488
    %v2671 = vunpack.c.h.b16 %v2488
    %v2672 = vunpack.c.l.b16 %v2489
    %v2673 = vunpack.c.h.b16 %v2489
    %v2674 = vunpack.c.l.b16 %v2490
    %v2675 = vunpack.c.h.b16 %v2490
    %v2676 = vunpack.c.l.b16 %v2491
    %v2677 = vunpack.c.h.b16 %v2491
    %v2678 = vunpack.c.l.b16 %v2492
    %v2679 = vunpack.c.h.b16 %v2492
    %v2680 = vunpack.c.l.b16 %v2493
    %v2681 = vunpack.c.h.b16 %v2493
    %v2682 = vunpack.c.l.b16 %v2494
    %v2683 = vunpack.c.h.b16 %v2494
    %v2684 = vunpack.c.l.b16 %v2495
    %v2685 = vunpack.c.h.b16 %v2495
    %v2686 = vunpack.c.l.b16 %v2496
    %v2687 = vunpack.c.h.b16 %v2496
    %v2688 = vunpack.c.l.b16 %v2497
    %v2689 = vunpack.c.h.b16 %v2497
    %v2690 = vunpack.c.l.b16 %v2498
    %v2691 = vunpack.c.h.b16 %v2498
    %v2692 = vunpack.c.l.b16 %v2499
    %v2693 = vunpack.c.h.b16 %v2499
    %v2694 = vunpack.c.l.b16 %v2500
    %v2695 = vunpack.c.h.b16 %v2500
    %v2696 = vunpack.c.l.b16 %v2501
    %v2697 = vunpack.c.h.b16 %v2501
    %v2698 = vunpack.c.l.b16 %v2502
    %v2699 = vunpack.c.h.b16 %v2502
    %v2700 = vunpack.c.l.b16 %v2503
    %v2701 = vunpack.c.h.b16 %v2503
    %v2702 = vpack.c.b16 %v2576, %v2574
    %v2703 = vpack.c.b16 %v2577, %v2575
    %v2704 = vpack.c.b16 %v2580, %v2578
    %v2705 = vpack.c.b16 %v2581, %v2579
    %v2706 = vpack.c.b16 %v2584, %v2582
    %v2707 = vpack.c.b16 %v2585, %v2583
    %v2708 = vpack.c.b16 %v2588, %v2586
    %v2709 = vpack.c.b16 %v2589, %v2587
    %v2710 = vpack.c.b16 %v2592, %v2590
    %v2711 = vpack.c.b16 %v2593, %v2591
    %v2712 = vpack.c.b16 %v2596, %v2594
    %v2713 = vpack.c.b16 %v2597, %v2595
    %v2714 = vpack.c.b16 %v2600, %v2598
    %v2715 = vpack.c.b16 %v2601, %v2599
    %v2716 = vpack.c.b16 %v2604, %v2602
    %v2717 = vpack.c.b16 %v2605, %v2603
    %v2718 = vpack.c.b16 %v2608, %v2606
    %v2719 = vpack.c.b16 %v2609, %v2607
    %v2720 = vpack.c.b16 %v2612, %v2610
    %v2721 = vpack.c.b16 %v2613, %v2611
    %v2722 = vpack.c.b16 %v2616, %v2614
    %v2723 = vpack.c.b16 %v2617, %v2615
    %v2724 = vpack.c.b16 %v2620, %v2618
    %v2725 = vpack.c.b16 %v2621, %v2619
    %v2726 = vpack.c.b16 %v2624, %v2622
    %v2727 = vpack.c.b16 %v2625, %v2623
    %v2728 = vpack.c.b16 %v2628, %v2626
    %v2729 = vpack.c.b16 %v2629, %v2627
    %v2730 = vpack.c.b16 %v2632, %v2630
    %v2731 = vpack.c.b16 %v2633, %v2631
    %v2732 = vpack.c.b16 %v2636, %v2634
    %v2733 = vpack.c.b16 %v2637, %v2635
    %v2734 = vpack.c.b16 %v2640, %v2638
    %v2735 = vpack.c.b16 %v2641, %v2639
    %v2736 = vpack.c.b16 %v2644, %v2642
    %v2737 = vpack.c.b16 %v2645, %v2643
    %v2738 = vpack.c.b16 %v2648, %v2646
    %v2739 = vpack.c.b16 %v2649, %v2647
    %v2740 = vpack.c.b16 %v2652, %v2650
    %v2741 = vpack.c.b16 %v2653, %v2651
    %v2742 = vpack.c.b16 %v2656, %v2654
    %v2743 = vpack.c.b16 %v2657, %v2655
    %v2744 = vpack.c.b16 %v2660, %v2658
    %v2745 = vpack.c.b16 %v2661, %v2659
    %v2746 = vpack.c.b16 %v2664, %v2662
    %v2747 = vpack.c.b16 %v2665, %v2663
    %v2748 = vpack.c.b16 %v2668, %v2666
    %v2749 = vpack.c.b16 %v2669, %v2667
    %v2750 = vpack.c.b16 %v2672, %v2670
    %v2751 = vpack.c.b16 %v2673, %v2671
    %v2752 = vpack.c.b16 %v2676, %v2674
    %v2753 = vpack.c.b16 %v2677, %v2675
    %v2754 = vpack.c.b16 %v2680, %v2678
    %v2755 = vpack.c.b16 %v2681, %v2679
    %v2756 = vpack.c.b16 %v2684, %v2682
    %v2757 = vpack.c.b16 %v2685, %v2683
    %v2758 = vpack.c.b16 %v2688, %v2686
    %v2759 = vpack.c.b16 %v2689, %v2687
    %v2760 = vpack.c.b16 %v2692, %v2690
    %v2761 = vpack.c.b16 %v2693, %v2691
    %v2762 = vpack.c.b16 %v2696, %v2694
    %v2763 = vpack.c.b16 %v2697, %v2695
    %v2764 = vpack.c.b16 %v2700, %v2698
    %v2765 = vpack.c.b16 %v2701, %v2699
    %2830 = vmatpush.bf16.msra.mxu0 %v2716
    %2831 = vmatpush.bf16.msra.mxu0 %v2714
    %2832 = vmatpush.bf16.msra.mxu0 %v2712
    %2833 = vmatpush.bf16.msra.mxu0 %v2710
    %2834 = vmatpush.bf16.msra.mxu0 %v2708
    %2835 = vmatpush.bf16.msra.mxu0 %v2706
    %2836 = vmatpush.bf16.msra.mxu0 %v2704
    %2837 = vmatpush.bf16.msra.mxu0 %v2702
    %2838 = vmatmul.bf16.gmra.mxu0 %v2436
    %v2839 = vpop.f32.mrf.mxu0
    %v2840 = vadd.f32 %v2506, %v2839
    %v2841 = vpop.f32.mrf.mxu0
    %2842 = vdwg.mxu0
    %2843 = vmatpush.bf16.msra.mxu0 %v2732
    %2844 = vmatpush.bf16.msra.mxu0 %v2730
    %2845 = vmatpush.bf16.msra.mxu0 %v2728
    %2846 = vmatpush.bf16.msra.mxu0 %v2726
    %2847 = vmatpush.bf16.msra.mxu0 %v2724
    %2848 = vmatpush.bf16.msra.mxu0 %v2722
    %2849 = vmatpush.bf16.msra.mxu0 %v2720
    %2850 = vmatpush.bf16.msra.mxu0 %v2718
    %2851 = vmatmul.bf16.gmra.mxu0 %v2437
    %v2852 = vpop.f32.mrf.mxu0
    %v2853 = vadd.f32 %v2840, %v2852
    %v2854 = vpop.f32.mrf.mxu0
    %2855 = vdwg.mxu0
    %2856 = vmatpush.bf16.msra.mxu0 %v2748
    %2857 = vmatpush.bf16.msra.mxu0 %v2746
    %2858 = vmatpush.bf16.msra.mxu0 %v2744
    %2859 = vmatpush.bf16.msra.mxu0 %v2742
    %2860 = vmatpush.bf16.msra.mxu0 %v2740
    %2861 = vmatpush.bf16.msra.mxu0 %v2738
    %2862 = vmatpush.bf16.msra.mxu0 %v2736
    %2863 = vmatpush.bf16.msra.mxu0 %v2734
    %2864 = vmatmul.bf16.gmra.mxu0 %v2438
    %v2865 = vpop.f32.mrf.mxu0
    %v2866 = vadd.f32 %v2853, %v2865
    %v2867 = vpop.f32.mrf.mxu0
    %2868 = vdwg.mxu0
    %2869 = vmatpush.bf16.msra.mxu0 %v2764
    %2870 = vmatpush.bf16.msra.mxu0 %v2762
    %2871 = vmatpush.bf16.msra.mxu0 %v2760
    %2872 = vmatpush.bf16.msra.mxu0 %v2758
    %2873 = vmatpush.bf16.msra.mxu0 %v2756
    %2874 = vmatpush.bf16.msra.mxu0 %v2754
    %2875 = vmatpush.bf16.msra.mxu0 %v2752
    %2876 = vmatpush.bf16.msra.mxu0 %v2750
    %2877 = vmatmul.bf16.gmra.mxu0 %v2439
    %v2878 = vpop.f32.mrf.mxu0
    %v2879 = vadd.f32 %v2866, %v2878
    %v2880 = vpop.f32.mrf.mxu0
    %2881 = vdwg.mxu0
    %2882 = vmatpush.bf16.msra.mxu0 %v2717
    %2883 = vmatpush.bf16.msra.mxu0 %v2715
    %2884 = vmatpush.bf16.msra.mxu0 %v2713
    %2885 = vmatpush.bf16.msra.mxu0 %v2711
    %2886 = vmatpush.bf16.msra.mxu0 %v2709
    %2887 = vmatpush.bf16.msra.mxu0 %v2707
    %2888 = vmatpush.bf16.msra.mxu0 %v2705
    %2889 = vmatpush.bf16.msra.mxu0 %v2703
    %2890 = vmatmul.bf16.gmra.mxu0 %v2436
    %v2891 = vpop.f32.mrf.mxu0
    %v2892 = vadd.f32 %v2507, %v2891
    %v2893 = vpop.f32.mrf.mxu0
    %2894 = vdwg.mxu0
    %2895 = vmatpush.bf16.msra.mxu0 %v2733
    %2896 = vmatpush.bf16.msra.mxu0 %v2731
    %2897 = vmatpush.bf16.msra.mxu0 %v2729
    %2898 = vmatpush.bf16.msra.mxu0 %v2727
    %2899 = vmatpush.bf16.msra.mxu0 %v2725
    %2900 = vmatpush.bf16.msra.mxu0 %v2723
    %2901 = vmatpush.bf16.msra.mxu0 %v2721
    %2902 = vmatpush.bf16.msra.mxu0 %v2719
    %2903 = vmatmul.bf16.gmra.mxu0 %v2437
    %v2904 = vpop.f32.mrf.mxu0
    %v2905 = vadd.f32 %v2892, %v2904
    %v2906 = vpop.f32.mrf.mxu0
    %2907 = vdwg.mxu0
    %2908 = vmatpush.bf16.msra.mxu0 %v2749
    %2909 = vmatpush.bf16.msra.mxu0 %v2747
    %2910 = vmatpush.bf16.msra.mxu0 %v2745
    %2911 = vmatpush.bf16.msra.mxu0 %v2743
    %2912 = vmatpush.bf16.msra.mxu0 %v2741
    %2913 = vmatpush.bf16.msra.mxu0 %v2739
    %2914 = vmatpush.bf16.msra.mxu0 %v2737
    %2915 = vmatpush.bf16.msra.mxu0 %v2735
    %2916 = vmatmul.bf16.gmra.mxu0 %v2438
    %v2917 = vpop.f32.mrf.mxu0
    %v2918 = vadd.f32 %v2905, %v2917
    %v2919 = vpop.f32.mrf.mxu0
    %2920 = vdwg.mxu0
    %2921 = vmatpush.bf16.msra.mxu0 %v2765
    %2922 = vmatpush.bf16.msra.mxu0 %v2763
    %2923 = vmatpush.bf16.msra.mxu0 %v2761
    %2924 = vmatpush.bf16.msra.mxu0 %v2759
    %2925 = vmatpush.bf16.msra.mxu0 %v2757
    %2926 = vmatpush.bf16.msra.mxu0 %v2755
    %2927 = vmatpush.bf16.msra.mxu0 %v2753
    %2928 = vmatpush.bf16.msra.mxu0 %v2751
    %2929 = vmatmul.bf16.gmra.mxu0 %v2439
    %v2930 = vpop.f32.mrf.mxu0
    %v2931 = vadd.f32 %v2918, %v2930
    %v2932 = vpop.f32.mrf.mxu0
    %2933 = vdwg.mxu0
    %v2934 = vmax.f32 %v2879, 0.0
    %v2935 = vmax.f32 %v2931, 0.0
    %v2936 = vpack.c.bf16 %v2934, %v2934
    %v2937 = vpack.c.bf16 %v2935, %v2935
    %v2938 = vld [vmem:[#allocation10] sm:$0xf]
    %v2939 = vld [vmem:[#allocation10 + $0x4] sm:$0xf]
    %v2940 = vld [vmem:[#allocation10 + $0x8] sm:$0xf]
    %v2941 = vld [vmem:[#allocation10 + $0xc] sm:$0xf]
    %v2942 = vld [vmem:[#allocation10 + $0x10] sm:$0xf]
    %v2943 = vld [vmem:[#allocation10 + $0x14] sm:$0xf]
    %v2944 = vld [vmem:[#allocation10 + $0x18] sm:$0xf]
    %v2945 = vld [vmem:[#allocation10 + $0x1c] sm:$0xf]
    %v2946 = vld [vmem:[#allocation10 + $0x20] sm:$0xf]
    %v2947 = vld [vmem:[#allocation10 + $0x24] sm:$0xf]
    %v2948 = vld [vmem:[#allocation10 + $0x28] sm:$0xf]
    %v2949 = vld [vmem:[#allocation10 + $0x2c] sm:$0xf]
    %v2950 = vld [vmem:[#allocation10 + $0x30] sm:$0xf]
    %v2951 = vld [vmem:[#allocation10 + $0x34] sm:$0xf]
    %v2952 = vld [vmem:[#allocation10 + $0x38] sm:$0xf]
    %v2953 = vld [vmem:[#allocation10 + $0x3c] sm:$0xf]
    %v2954 = vld [vmem:[#allocation10 + $0x40] sm:$0xf]
    %v2955 = vld [vmem:[#allocation10 + $0x44] sm:$0xf]
    %v2956 = vld [vmem:[#allocation10 + $0x48] sm:$0xf]
    %v2957 = vld [vmem:[#allocation10 + $0x4c] sm:$0xf]
    %v2958 = vld [vmem:[#allocation10 + $0x50] sm:$0xf]
    %v2959 = vld [vmem:[#allocation10 + $0x54] sm:$0xf]
    %v2960 = vld [vmem:[#allocation10 + $0x58] sm:$0xf]
    %v2961 = vld [vmem:[#allocation10 + $0x5c] sm:$0xf]
    %v2962 = vld [vmem:[#allocation10 + $0x60] sm:$0xf]
    %v2963 = vld [vmem:[#allocation10 + $0x64] sm:$0xf]
    %v2964 = vld [vmem:[#allocation10 + $0x68] sm:$0xf]
    %v2965 = vld [vmem:[#allocation10 + $0x6c] sm:$0xf]
    %v2966 = vld [vmem:[#allocation10 + $0x70] sm:$0xf]
    %v2967 = vld [vmem:[#allocation10 + $0x74] sm:$0xf]
    %v2968 = vld [vmem:[#allocation10 + $0x78] sm:$0xf]
    %v2969 = vld [vmem:[#allocation10 + $0x7c] sm:$0xf]
    %v2970 = vld [vmem:[%s19] sm:$0x1]
    %v2972 = vperm.slane %v2970, 0
    %v3006 = vunpack.c.l.b16 %v2938
    %v3007 = vunpack.c.l.b16 %v2939
    %v3008 = vunpack.c.l.b16 %v2940
    %v3009 = vunpack.c.l.b16 %v2941
    %v3010 = vunpack.c.l.b16 %v2942
    %v3011 = vunpack.c.l.b16 %v2943
    %v3012 = vunpack.c.l.b16 %v2944
    %v3013 = vunpack.c.l.b16 %v2945
    %v3014 = vunpack.c.l.b16 %v2946
    %v3015 = vunpack.c.l.b16 %v2947
    %v3016 = vunpack.c.l.b16 %v2948
    %v3017 = vunpack.c.l.b16 %v2949
    %v3018 = vunpack.c.l.b16 %v2950
    %v3019 = vunpack.c.l.b16 %v2951
    %v3020 = vunpack.c.l.b16 %v2952
    %v3021 = vunpack.c.l.b16 %v2953
    %v3022 = vunpack.c.l.b16 %v2954
    %v3023 = vunpack.c.l.b16 %v2955
    %v3024 = vunpack.c.l.b16 %v2956
    %v3025 = vunpack.c.l.b16 %v2957
    %v3026 = vunpack.c.l.b16 %v2958
    %v3027 = vunpack.c.l.b16 %v2959
    %v3028 = vunpack.c.l.b16 %v2960
    %v3029 = vunpack.c.l.b16 %v2961
    %v3030 = vunpack.c.l.b16 %v2962
    %v3031 = vunpack.c.l.b16 %v2963
    %v3032 = vunpack.c.l.b16 %v2964
    %v3033 = vunpack.c.l.b16 %v2965
    %v3034 = vunpack.c.l.b16 %v2966
    %v3035 = vunpack.c.l.b16 %v2967
    %v3036 = vunpack.c.l.b16 %v2968
    %v3037 = vunpack.c.l.b16 %v2969
    %v3038 = vpack.c.b16 %v3007, %v3006
    %v3039 = vpack.c.b16 %v3009, %v3008
    %v3040 = vpack.c.b16 %v3011, %v3010
    %v3041 = vpack.c.b16 %v3013, %v3012
    %v3042 = vpack.c.b16 %v3015, %v3014
    %v3043 = vpack.c.b16 %v3017, %v3016
    %v3044 = vpack.c.b16 %v3019, %v3018
    %v3045 = vpack.c.b16 %v3021, %v3020
    %v3046 = vpack.c.b16 %v3023, %v3022
    %v3047 = vpack.c.b16 %v3025, %v3024
    %v3048 = vpack.c.b16 %v3027, %v3026
    %v3049 = vpack.c.b16 %v3029, %v3028
    %v3050 = vpack.c.b16 %v3031, %v3030
    %v3051 = vpack.c.b16 %v3033, %v3032
    %v3052 = vpack.c.b16 %v3035, %v3034
    %v3053 = vpack.c.b16 %v3037, %v3036
    %3070 = vmatpush.bf16.msra.mxu0 %v3045
    %3071 = vmatpush.bf16.msra.mxu0 %v3044
    %3072 = vmatpush.bf16.msra.mxu0 %v3043
    %3073 = vmatpush.bf16.msra.mxu0 %v3042
    %3074 = vmatpush.bf16.msra.mxu0 %v3041
    %3075 = vmatpush.bf16.msra.mxu0 %v3040
    %3076 = vmatpush.bf16.msra.mxu0 %v3039
    %3077 = vmatpush.bf16.msra.mxu0 %v3038
    %3078 = vmatmul.bf16.gmra.mxu0 %v2936
    %v3079 = vpop.f32.mrf.mxu0
    %v3080 = vadd.f32 %v2972, %v3079
    %v3081 = vpop.f32.mrf.mxu0
    %3082 = vdwg.mxu0
    %3083 = vmatpush.bf16.msra.mxu0 %v3053
    %3084 = vmatpush.bf16.msra.mxu0 %v3052
    %3085 = vmatpush.bf16.msra.mxu0 %v3051
    %3086 = vmatpush.bf16.msra.mxu0 %v3050
    %3087 = vmatpush.bf16.msra.mxu0 %v3049
    %3088 = vmatpush.bf16.msra.mxu0 %v3048
    %3089 = vmatpush.bf16.msra.mxu0 %v3047
    %3090 = vmatpush.bf16.msra.mxu0 %v3046
    %3091 = vmatmul.bf16.gmra.mxu0 %v2937
    %v3092 = vpop.f32.mrf.mxu0
    %v3093 = vadd.f32 %v3080, %v3092
    %v3094 = vpop.f32.mrf.mxu0
    %3095 = vdwg.mxu0
    %v3096 = vmax.f32 %v3093, 0.0
    %v3097 = vld [vmem:[%s20] sm:$0x1]
    %v3098 = vld [vmem:[#allocation3] sm:$0x1]
    %3100 = vset.pattern.permute.xlu0 0
    %3101 = vperm.xlu0 %3100, %v3098
    %v3102 = vpop.permute.xlu0 %3101
    %v3104 = vperm.slane %v3102, 0
    %3105 = vmatpush.xpose.msra.mxu0 0.0
    %3106 = vmatpush.xpose.msra.mxu0 0.0
    %3107 = vmatpush.xpose.msra.mxu0 0.0
    %3108 = vmatpush.xpose.msra.mxu0 0.0
    %3109 = vmatpush.xpose.msra.mxu0 0.0
    %3110 = vmatpush.xpose.msra.mxu0 0.0
    %3111 = vmatpush.xpose.msra.mxu0 0.0
    %3112 = vmatpush.xpose.msra.mxu0 0.0
    %3113 = vmatpush.xpose.msra.mxu0 0.0
    %3114 = vmatpush.xpose.msra.mxu0 0.0
    %3115 = vmatpush.xpose.msra.mxu0 0.0
    %3116 = vmatpush.xpose.msra.mxu0 0.0
    %3117 = vmatpush.xpose.msra.mxu0 0.0
    %3118 = vmatpush.xpose.msra.mxu0 0.0
    %3119 = vmatpush.xpose.msra.mxu0 0.0
    %3120 = vmatpush.xpose.msra.mxu0 %v3096
    %3121 = vmatmul.f32.gmra.mxu0 %v3097
    %v3122 = vpop.f32.mrf.mxu0
    %v3123 = vadd.f32 %v3104, %v3122
    %3124 = vdwg.mxu0
    %v3125 = vadd.f32 %v258, %v3123
    %v3126 = vmul.f32 %v3125, 0.5
    %v3127 = vtanh.pop %v3126
    %v3128 = vadd.f32 %v3127, 1.0
    %v3129 = vmul.f32 %v3128, 0.5
    %vm3130 = vcmask 57344
    %3131 = vst.msk [vmem:[#allocation12] sm:$0x1] %vm3130, %v3129
    // Predicated region
    $region106: #{wide_and_deep_forward.1} parent=1 // pred_check
      _
    $region107: #{wide_and_deep_forward.1} parent=1 // pred_check_branch
      %3133 = sbr.rel (0) target = $region109
    $region108: #{wide_and_deep_forward.1} parent=1 // pred_region
      %3135 = vsyncadd [#allocation6], 0
      %s3137 = sshll.u32 [#allocation12], 4
      %s3138 = int_to_ptr.vmem [resolvable:$true] %s3137
      %s3139 = sshll.u32 %s22, 4
      %s3140 = int_to_ptr.hbm [resolvable:$true] %s3139
      %3142 = dma.vmem_to_hbm [thread:$0]  %s3138, 16, %s3140, [#allocation6]
    $region109: #{wide_and_deep_forward.1} parent=1 // pred_fallthru
      _
    // Predicated region
    $region110: #{wide_and_deep_forward.1} parent=1 // pred_check
      _
    $region111: #{wide_and_deep_forward.1} parent=1 // pred_check_branch
      %3144 = sbr.rel (0) target = $region113
    $region112: #{wide_and_deep_forward.1} parent=1 // pred_region
      %3146 = dma.done [#allocation6], 16
    $region113: #{wide_and_deep_forward.1} parent=1 // pred_fallthru
      _
    %3147 = vsyncpa [#allocation5], 1
    %3148 = vsyncpa [#allocation8], 1
    %3149 = vsyncpa [#allocation11], 1
    %3150 = vsyncpa [#allocation6], 1

</llo_original>
